<compile_context>
chip_gen: v7x
topology: tpu7x:2x2x1
jax: 0.10.0
libtpu: 0.0.40
codegen_flags: <defaults>
</compile_context>

<pallas_src>
import functools

import numpy as np
import jax
import jax.numpy as jnp
from jax.experimental import pallas as pl
from jax.experimental.pallas import tpu as pltpu


def _cross_attn_kernel(a_ref, b_ref,
                       ga_ref, bta_ref, gb_ref, btb_ref,
                       wqa_ref, bqa_ref, wqb_ref, bqb_ref,
                       woa_ref, boa_ref, wob_ref, bob_ref,
                       oa_ref, ob_ref,
                       ctx_a_ref, ctx_b_ref,
                       *, n_head, head_dim, n_block, seq_len, scale, eps):
    C = n_head * head_dim
    L = seq_len
    Nb = n_block

    a = a_ref[...].astype(jnp.float32)            # (C, Nb*L)
    b = b_ref[...].astype(jnp.float32)            # (C, Nb*L)

    def group_norm(x, gamma, beta):
        # GroupNorm(num_groups=1): per batch element, normalize over (C, L).
        # Single pass: accumulate E[x], E[x^2] in f32; var = E[x^2] - E[x]^2.
        parts = []
        for n in range(Nb):                       # Nb is small & static
            xe = x[:, n * L:(n + 1) * L]
            m = jnp.mean(xe)
            var = jnp.mean(xe * xe) - m * m
            inv = jax.lax.rsqrt(var + eps)
            parts.append((xe - m) * inv)
        xn = parts[0] if Nb == 1 else jnp.concatenate(parts, axis=1)
        return xn * gamma + beta                  # gamma/beta: (C, 1)

    a_n = group_norm(a, ga_ref[...], bta_ref[...]).astype(jnp.bfloat16)
    b_n = group_norm(b, gb_ref[...], btb_ref[...]).astype(jnp.bfloat16)

    # Fused QKV 1x1 convs: one (3C, C) @ (C, Nb*L) bf16 matmul per stream.
    qkv_a = jnp.dot(wqa_ref[...], a_n,
                    preferred_element_type=jnp.float32) + bqa_ref[...]
    qkv_b = jnp.dot(wqb_ref[...], b_n,
                    preferred_element_type=jnp.float32) + bqb_ref[...]

    def attend(qkv_q, qkv_kv):
        # qkv_q, qkv_kv: (3C, L) f32 for one batch element.
        # Fold softmax scale into q: scales a (head_dim, L) tensor, not (L, L).
        q = (qkv_q[0:C, :] * scale).astype(jnp.bfloat16).reshape(n_head, head_dim, L)
        k = qkv_kv[C:2 * C, :].astype(jnp.bfloat16).reshape(n_head, head_dim, L)
        v = qkv_kv[2 * C:3 * C, :].astype(jnp.bfloat16).reshape(n_head, head_dim, L)
        # Head-batched scores (H, Lq, Lk) -- no explicit transposes.
        s = jax.lax.dot_general(q, k, (((1,), (1,)), ((0,), (0,))),
                                preferred_element_type=jnp.float32)
        s = s - jnp.max(s, axis=-1, keepdims=True)
        p = jnp.exp(s)
        p = p * pl.reciprocal(jnp.sum(p, axis=-1, keepdims=True), approx=True)
        # ctx (H, head_dim, Lq): contract v (H, d, Lk) with p (H, Lq, Lk).
        ctx = jax.lax.dot_general(v, p.astype(jnp.bfloat16),
                                  (((2,), (2,)), ((0,), (0,))),
                                  preferred_element_type=jnp.float32)
        return ctx.reshape(C, L)

    # Bidirectional cross attention (a attends to b, b attends to a), per
    # element; contexts packed into bf16 VMEM scratch so the output projection
    # below is one wide MXU matmul per stream.
    for n in range(Nb):                           # static tiny loop
        sl = slice(n * L, (n + 1) * L)
        ctx_a_ref[:, sl] = attend(qkv_a[:, sl], qkv_b[:, sl]).astype(ctx_a_ref.dtype)
        ctx_b_ref[:, sl] = attend(qkv_b[:, sl], qkv_a[:, sl]).astype(ctx_b_ref.dtype)

    # Output 1x1 convs + residual.  dropout_rate == 0.0 -> identity.
    out_a = jnp.dot(woa_ref[...], ctx_a_ref[...],
                    preferred_element_type=jnp.float32) + boa_ref[...] + a
    out_b = jnp.dot(wob_ref[...], ctx_b_ref[...],
                    preferred_element_type=jnp.float32) + bob_ref[...] + b

    oa_ref[...] = out_a.astype(oa_ref.dtype)
    ob_ref[...] = out_b.astype(ob_ref.dtype)


def _choose_batch_block(N, L):
    """Pick how many batch elements to pack per grid step.

    Target ~128 lanes (Nb*L), cap the static unroll, keep N % Nb == 0, and keep
    the grid >= 2 steps when possible so v7x's 2 TensorCores both get work.
    """
    nb = max(1, min(N, 128 // max(L, 1), 8))
    while N % nb != 0:
        nb -= 1
    while nb > 1 and (N // nb) < 2:
        cand = nb // 2
        while cand > 1 and N % cand != 0:
            cand -= 1
        nb = max(cand, 1)
    return nb


def cross_attention_1d(a, b, params, n_head):
    """a, b: (N, C, L) float32.  Returns (out_a, out_b), each (N, C, L)."""
    assert a.shape == b.shape
    N, C, L = a.shape
    assert C % n_head == 0
    head_dim = C // n_head
    scale = float(head_dim) ** -0.5
    eps = 1e-5

    Nb = _choose_batch_block(N, L)
    Ng = N // Nb
    W = Nb * L

    # Wrapper-side repack: (N, C, L) -> (Ng, C, Nb*L), element-major columns.
    def pack(x):
        return x.reshape(Ng, Nb, C, L).transpose(0, 2, 1, 3).reshape(Ng, C, W)

    def unpack(x):
        return x.reshape(Ng, C, Nb, L).transpose(0, 2, 1, 3).reshape(N, C, L)

    f32col = lambda v: jnp.asarray(v, jnp.float32).reshape(-1, 1)          # bias -> (K, 1)
    bf16mat = lambda w: jnp.asarray(w, jnp.float32).reshape(                # conv (O,I,1) -> bf16 (O,I)
        w.shape[0], w.shape[1]).astype(jnp.bfloat16)

    kernel = functools.partial(_cross_attn_kernel, n_head=n_head, head_dim=head_dim,
                               n_block=Nb, seq_len=L, scale=scale, eps=eps)

    def act_spec():
        # squeeze the leading block dim -> kernel sees a (C, Nb*L) slab
        return pl.BlockSpec((None, C, W), lambda i: (i, 0, 0))

    def const_spec(shape):
        # grid-invariant operand (weights / norm params)
        return pl.BlockSpec(shape, lambda i: (0,) * len(shape))

    in_specs = [
        act_spec(), act_spec(),                           # a, b
        const_spec((C, 1)), const_spec((C, 1)),           # norm_a gamma/beta
        const_spec((C, 1)), const_spec((C, 1)),           # norm_b gamma/beta
        const_spec((3 * C, C)), const_spec((3 * C, 1)),   # qkv_proj_a
        const_spec((3 * C, C)), const_spec((3 * C, 1)),   # qkv_proj_b
        const_spec((C, C)), const_spec((C, 1)),           # out_proj_a
        const_spec((C, C)), const_spec((C, 1)),           # out_proj_b
    ]

    flops = N * (16 * C * C * L + 8 * C * L * L)
    transcendentals = 2 * N * n_head * L * L
    bytes_accessed = (4 * N * C * L * 4                    # a, b in + out_a, out_b (f32)
                      + 2 * (3 * C * C + C * C) * 2        # bf16 weights
                      + (4 * C + 2 * 3 * C + 2 * C) * 4)   # f32 norm params / biases

    out_a, out_b = pl.pallas_call(
        kernel,
        out_shape=(jax.ShapeDtypeStruct((Ng, C, W), a.dtype),
                   jax.ShapeDtypeStruct((Ng, C, W), b.dtype)),
        grid_spec=pltpu.PrefetchScalarGridSpec(
            num_scalar_prefetch=0,
            grid=(Ng,),
            in_specs=in_specs,
            out_specs=(act_spec(), act_spec()),
            scratch_shapes=[pltpu.VMEM((C, W), jnp.bfloat16),
                            pltpu.VMEM((C, W), jnp.bfloat16)]),
        compiler_params=pltpu.CompilerParams(
            dimension_semantics=("parallel",)),
        cost_estimate=pl.CostEstimate(flops=flops,
                                      transcendentals=transcendentals,
                                      bytes_accessed=bytes_accessed),
    )(pack(a), pack(b),
      f32col(params['gn_a_w']), f32col(params['gn_a_b']),
      f32col(params['gn_b_w']), f32col(params['gn_b_b']),
      bf16mat(params['wqkv_a']), f32col(params['bqkv_a']),
      bf16mat(params['wqkv_b']), f32col(params['bqkv_b']),
      bf16mat(params['wout_a']), f32col(params['bout_a']),
      bf16mat(params['wout_b']), f32col(params['bout_b']))
    return unpack(out_a), unpack(out_b)


def _reference(a, b, params, n_head):
    """Pure-JAX f32 reference of the same forward math (for validation)."""
    N, C, L = a.shape
    head_dim = C // n_head
    scale = float(head_dim) ** -0.5
    eps = 1e-5

    def group_norm(x, g, bb):
        mean = jnp.mean(x, axis=(1, 2), keepdims=True)
        var = jnp.mean(jnp.square(x - mean), axis=(1, 2), keepdims=True)
        return (x - mean) / jnp.sqrt(var + eps) * g[None, :, None] + bb[None, :, None]

    def conv1x1(x, w, bias):                       # w: (O, I, 1)
        return jnp.einsum('oi,nil->nol', w[:, :, 0], x) + bias[None, :, None]

    def to_heads(x):                               # (N, C, L) -> (N, H, L, D)
        return x.reshape(N, n_head, head_dim, L).transpose(0, 1, 3, 2)

    def attend(q, k, v):
        s = jnp.einsum('nhld,nhmd->nhlm', q, k) * scale
        p = jax.nn.softmax(s, axis=-1)
        o = jnp.einsum('nhlm,nhmd->nhld', p, v)
        return o.transpose(0, 1, 3, 2).reshape(N, C, L)

    a_n = group_norm(a, params['gn_a_w'], params['gn_a_b'])
    b_n = group_norm(b, params['gn_b_w'], params['gn_b_b'])
    qkv_a = conv1x1(a_n, params['wqkv_a'], params['bqkv_a'])
    qkv_b = conv1x1(b_n, params['wqkv_b'], params['bqkv_b'])
    q_a, k_a, v_a = jnp.split(qkv_a, 3, axis=1)
    q_b, k_b, v_b = jnp.split(qkv_b, 3, axis=1)

    ctx_a = attend(to_heads(q_a), to_heads(k_b), to_heads(v_b))
    ctx_b = attend(to_heads(q_b), to_heads(k_a), to_heads(v_a))
    out_a = conv1x1(ctx_a, params['wout_a'], params['bout_a']) + a
    out_b = conv1x1(ctx_b, params['wout_b'], params['bout_b']) + b
    return out_a, out_b


if __name__ == "__main__":
    key = jax.random.PRNGKey(0)
    ks = jax.random.split(key, 14)

    N, C, L, n_head = 4, 32, 16, 2

    a = jax.random.normal(ks[0], (N, C, L), dtype=jnp.float32)
    b = jax.random.normal(ks[1], (N, C, L), dtype=jnp.float32)

    # PyTorch Conv1d default init: uniform(-1/sqrt(fan_in), 1/sqrt(fan_in)), fan_in = C*1.
    bound = 1.0 / np.sqrt(C)
    params = {
        # GroupNorm affine (PyTorch default is ones/zeros; perturbed here to
        # exercise the affine path in the check).
        'gn_a_w': 1.0 + 0.1 * jax.random.normal(ks[2], (C,), dtype=jnp.float32),
        'gn_a_b': 0.1 * jax.random.normal(ks[3], (C,), dtype=jnp.float32),
        'gn_b_w': 1.0 + 0.1 * jax.random.normal(ks[4], (C,), dtype=jnp.float32),
        'gn_b_b': 0.1 * jax.random.normal(ks[5], (C,), dtype=jnp.float32),
        'wqkv_a': jax.random.uniform(ks[6], (3 * C, C, 1), jnp.float32, -bound, bound),
        'bqkv_a': jax.random.uniform(ks[7], (3 * C,), jnp.float32, -bound, bound),
        'wqkv_b': jax.random.uniform(ks[8], (3 * C, C, 1), jnp.float32, -bound, bound),
        'bqkv_b': jax.random.uniform(ks[9], (3 * C,), jnp.float32, -bound, bound),
        'wout_a': jax.random.uniform(ks[10], (C, C, 1), jnp.float32, -bound, bound),
        'bout_a': jax.random.uniform(ks[11], (C,), jnp.float32, -bound, bound),
        'wout_b': jax.random.uniform(ks[12], (C, C, 1), jnp.float32, -bound, bound),
        'bout_b': jax.random.uniform(ks[13], (C,), jnp.float32, -bound, bound),
    }

    out_a, out_b = cross_attention_1d(a, b, params, n_head)
    out_a, out_b = jax.block_until_ready((out_a, out_b))

    ref_a, ref_b = _reference(a, b, params, n_head)
    assert out_a.shape == (N, C, L) and out_b.shape == (N, C, L)
    # Tolerance relaxed to 1e-2: kernel uses bf16 MXU operands (f32 accumulation)
    # and an approximate-EUP softmax reciprocal vs the pure-f32 reference.
    np.testing.assert_allclose(np.asarray(out_a), np.asarray(ref_a), rtol=1e-2, atol=1e-2)
    np.testing.assert_allclose(np.asarray(out_b), np.asarray(ref_b), rtol=1e-2, atol=1e-2)

    print("KERNEL_OK")
</pallas_src>

<mosaic_0001>
module attributes {stable_mosaic.version = 11 : i64} {
  func.func @_cross_attn_kernel(%arg0: i32, %arg1: memref<1x32x32xf32, #tpu.memory_space<vmem>>, %arg2: memref<1x32x32xf32, #tpu.memory_space<vmem>>, %arg3: memref<32x1xf32, #tpu.memory_space<vmem>>, %arg4: memref<32x1xf32, #tpu.memory_space<vmem>>, %arg5: memref<32x1xf32, #tpu.memory_space<vmem>>, %arg6: memref<32x1xf32, #tpu.memory_space<vmem>>, %arg7: memref<96x32xbf16, #tpu.memory_space<vmem>>, %arg8: memref<96x1xf32, #tpu.memory_space<vmem>>, %arg9: memref<96x32xbf16, #tpu.memory_space<vmem>>, %arg10: memref<96x1xf32, #tpu.memory_space<vmem>>, %arg11: memref<32x32xbf16, #tpu.memory_space<vmem>>, %arg12: memref<32x1xf32, #tpu.memory_space<vmem>>, %arg13: memref<32x32xbf16, #tpu.memory_space<vmem>>, %arg14: memref<32x1xf32, #tpu.memory_space<vmem>>, %arg15: memref<1x32x32xf32, #tpu.memory_space<vmem>>, %arg16: memref<1x32x32xf32, #tpu.memory_space<vmem>>, %arg17: memref<32x32xbf16, #tpu.memory_space<vmem>>, %arg18: memref<32x32xbf16, #tpu.memory_space<vmem>>) attributes {dimension_semantics = [#tpu.dimension_semantics<parallel>], iteration_bounds = array<i64: 2>, scalar_prefetch = 0 : i64, scratch_operands = 2 : i64, tpu.core_type = #tpu.core_type<tc>, window_params = [{transform_indices = @transform_0, window_bounds = array<i64: 1, 32, 32>}, {transform_indices = @transform_1, window_bounds = array<i64: 1, 32, 32>}, {pipeline_mode = #tpu.pipeline_mode<synchronous>, transform_indices = @transform_2, window_bounds = array<i64: 32, 1>}, {pipeline_mode = #tpu.pipeline_mode<synchronous>, transform_indices = @transform_3, window_bounds = array<i64: 32, 1>}, {pipeline_mode = #tpu.pipeline_mode<synchronous>, transform_indices = @transform_4, window_bounds = array<i64: 32, 1>}, {pipeline_mode = #tpu.pipeline_mode<synchronous>, transform_indices = @transform_5, window_bounds = array<i64: 32, 1>}, {pipeline_mode = #tpu.pipeline_mode<synchronous>, transform_indices = @transform_6, window_bounds = array<i64: 96, 32>}, {pipeline_mode = #tpu.pipeline_mode<synchronous>, transform_indices = @transform_7, window_bounds = array<i64: 96, 1>}, {pipeline_mode = #tpu.pipeline_mode<synchronous>, transform_indices = @transform_8, window_bounds = array<i64: 96, 32>}, {pipeline_mode = #tpu.pipeline_mode<synchronous>, transform_indices = @transform_9, window_bounds = array<i64: 96, 1>}, {pipeline_mode = #tpu.pipeline_mode<synchronous>, transform_indices = @transform_10, window_bounds = array<i64: 32, 32>}, {pipeline_mode = #tpu.pipeline_mode<synchronous>, transform_indices = @transform_11, window_bounds = array<i64: 32, 1>}, {pipeline_mode = #tpu.pipeline_mode<synchronous>, transform_indices = @transform_12, window_bounds = array<i64: 32, 32>}, {pipeline_mode = #tpu.pipeline_mode<synchronous>, transform_indices = @transform_13, window_bounds = array<i64: 32, 1>}, {transform_indices = @transform_14, window_bounds = array<i64: 1, 32, 32>}, {transform_indices = @transform_15, window_bounds = array<i64: 1, 32, 32>}]} {
    %c0 = arith.constant 0 : index
    %c0_0 = arith.constant 0 : index
    %c0_1 = arith.constant 0 : index
    %0 = vector.load %arg1[%c0, %c0_0, %c0_1] : memref<1x32x32xf32, #tpu.memory_space<vmem>>, vector<1x32x32xf32>
    %1 = vector.shape_cast %0 : vector<1x32x32xf32> to vector<32x32xf32>
    %c0_2 = arith.constant 0 : index
    %c0_3 = arith.constant 0 : index
    %c0_4 = arith.constant 0 : index
    %2 = vector.load %arg2[%c0_2, %c0_3, %c0_4] : memref<1x32x32xf32, #tpu.memory_space<vmem>>, vector<1x32x32xf32>
    %3 = vector.shape_cast %2 : vector<1x32x32xf32> to vector<32x32xf32>
    %c0_5 = arith.constant 0 : index
    %c0_6 = arith.constant 0 : index
    %4 = vector.load %arg3[%c0_5, %c0_6] : memref<32x1xf32, #tpu.memory_space<vmem>>, vector<32x1xf32>
    %c0_7 = arith.constant 0 : index
    %c0_8 = arith.constant 0 : index
    %5 = vector.load %arg4[%c0_7, %c0_8] : memref<32x1xf32, #tpu.memory_space<vmem>>, vector<32x1xf32>
    %6 = vector.extract_strided_slice %1 {offsets = [0, 0], sizes = [32, 16], strides = [1, 1]} : vector<32x32xf32> to vector<32x16xf32>
    %7 = vector.shape_cast %6 : vector<32x16xf32> to vector<1x32x16xf32>
    %cst = arith.constant dense<0.000000e+00> : vector<1xf32>
    %8 = vector.multi_reduction <add>, %7, %cst [1, 2] : vector<1x32x16xf32> to vector<1xf32>
    %9 = vector.shape_cast %8 : vector<1xf32> to vector<1x1x1xf32>
    %10 = vector.extract %9[0, 0, 0] : f32 from vector<1x1x1xf32>
    %cst_9 = arith.constant 5.120000e+02 : f32
    %11 = arith.divf %10, %cst_9 : f32
    %12 = arith.mulf %6, %6 : vector<32x16xf32>
    %13 = vector.shape_cast %12 : vector<32x16xf32> to vector<1x32x16xf32>
    %cst_10 = arith.constant dense<0.000000e+00> : vector<1xf32>
    %14 = vector.multi_reduction <add>, %13, %cst_10 [1, 2] : vector<1x32x16xf32> to vector<1xf32>
    %15 = vector.shape_cast %14 : vector<1xf32> to vector<1x1x1xf32>
    %16 = vector.extract %15[0, 0, 0] : f32 from vector<1x1x1xf32>
    %cst_11 = arith.constant 5.120000e+02 : f32
    %17 = arith.divf %16, %cst_11 : f32
    %18 = arith.mulf %11, %11 : f32
    %19 = arith.subf %17, %18 : f32
    %cst_12 = arith.constant 9.99999974E-6 : f32
    %20 = arith.addf %19, %cst_12 : f32
    %21 = math.rsqrt %20 : f32
    %22 = vector.broadcast %11 : f32 to vector<32x16xf32>
    %23 = arith.subf %6, %22 : vector<32x16xf32>
    %24 = vector.broadcast %21 : f32 to vector<32x16xf32>
    %25 = arith.mulf %23, %24 : vector<32x16xf32>
    %26 = vector.extract_strided_slice %1 {offsets = [0, 16], sizes = [32, 16], strides = [1, 1]} : vector<32x32xf32> to vector<32x16xf32>
    %27 = vector.shape_cast %26 : vector<32x16xf32> to vector<1x32x16xf32>
    %cst_13 = arith.constant dense<0.000000e+00> : vector<1xf32>
    %28 = vector.multi_reduction <add>, %27, %cst_13 [1, 2] : vector<1x32x16xf32> to vector<1xf32>
    %29 = vector.shape_cast %28 : vector<1xf32> to vector<1x1x1xf32>
    %30 = vector.extract %29[0, 0, 0] : f32 from vector<1x1x1xf32>
    %cst_14 = arith.constant 5.120000e+02 : f32
    %31 = arith.divf %30, %cst_14 : f32
    %32 = arith.mulf %26, %26 : vector<32x16xf32>
    %33 = vector.shape_cast %32 : vector<32x16xf32> to vector<1x32x16xf32>
    %cst_15 = arith.constant dense<0.000000e+00> : vector<1xf32>
    %34 = vector.multi_reduction <add>, %33, %cst_15 [1, 2] : vector<1x32x16xf32> to vector<1xf32>
    %35 = vector.shape_cast %34 : vector<1xf32> to vector<1x1x1xf32>
    %36 = vector.extract %35[0, 0, 0] : f32 from vector<1x1x1xf32>
    %cst_16 = arith.constant 5.120000e+02 : f32
    %37 = arith.divf %36, %cst_16 : f32
    %38 = arith.mulf %31, %31 : f32
    %39 = arith.subf %37, %38 : f32
    %cst_17 = arith.constant 9.99999974E-6 : f32
    %40 = arith.addf %39, %cst_17 : f32
    %41 = math.rsqrt %40 : f32
    %42 = vector.broadcast %31 : f32 to vector<32x16xf32>
    %43 = arith.subf %26, %42 : vector<32x16xf32>
    %44 = vector.broadcast %41 : f32 to vector<32x16xf32>
    %45 = arith.mulf %43, %44 : vector<32x16xf32>
    %46 = tpu.concatenate %25, %45 in 1 : vector<32x16xf32>, vector<32x16xf32> -> vector<32x32xf32>
    %47 = vector.broadcast %4 : vector<32x1xf32> to vector<32x32xf32>
    %48 = arith.mulf %46, %47 : vector<32x32xf32>
    %49 = vector.broadcast %5 : vector<32x1xf32> to vector<32x32xf32>
    %50 = arith.addf %48, %49 : vector<32x32xf32>
    %51 = arith.truncf %50 : vector<32x32xf32> to vector<32x32xbf16>
    %c0_18 = arith.constant 0 : index
    %c0_19 = arith.constant 0 : index
    %52 = vector.load %arg5[%c0_18, %c0_19] : memref<32x1xf32, #tpu.memory_space<vmem>>, vector<32x1xf32>
    %c0_20 = arith.constant 0 : index
    %c0_21 = arith.constant 0 : index
    %53 = vector.load %arg6[%c0_20, %c0_21] : memref<32x1xf32, #tpu.memory_space<vmem>>, vector<32x1xf32>
    %54 = vector.extract_strided_slice %3 {offsets = [0, 0], sizes = [32, 16], strides = [1, 1]} : vector<32x32xf32> to vector<32x16xf32>
    %55 = vector.shape_cast %54 : vector<32x16xf32> to vector<1x32x16xf32>
    %cst_22 = arith.constant dense<0.000000e+00> : vector<1xf32>
    %56 = vector.multi_reduction <add>, %55, %cst_22 [1, 2] : vector<1x32x16xf32> to vector<1xf32>
    %57 = vector.shape_cast %56 : vector<1xf32> to vector<1x1x1xf32>
    %58 = vector.extract %57[0, 0, 0] : f32 from vector<1x1x1xf32>
    %cst_23 = arith.constant 5.120000e+02 : f32
    %59 = arith.divf %58, %cst_23 : f32
    %60 = arith.mulf %54, %54 : vector<32x16xf32>
    %61 = vector.shape_cast %60 : vector<32x16xf32> to vector<1x32x16xf32>
    %cst_24 = arith.constant dense<0.000000e+00> : vector<1xf32>
    %62 = vector.multi_reduction <add>, %61, %cst_24 [1, 2] : vector<1x32x16xf32> to vector<1xf32>
    %63 = vector.shape_cast %62 : vector<1xf32> to vector<1x1x1xf32>
    %64 = vector.extract %63[0, 0, 0] : f32 from vector<1x1x1xf32>
    %cst_25 = arith.constant 5.120000e+02 : f32
    %65 = arith.divf %64, %cst_25 : f32
    %66 = arith.mulf %59, %59 : f32
    %67 = arith.subf %65, %66 : f32
    %cst_26 = arith.constant 9.99999974E-6 : f32
    %68 = arith.addf %67, %cst_26 : f32
    %69 = math.rsqrt %68 : f32
    %70 = vector.broadcast %59 : f32 to vector<32x16xf32>
    %71 = arith.subf %54, %70 : vector<32x16xf32>
    %72 = vector.broadcast %69 : f32 to vector<32x16xf32>
    %73 = arith.mulf %71, %72 : vector<32x16xf32>
    %74 = vector.extract_strided_slice %3 {offsets = [0, 16], sizes = [32, 16], strides = [1, 1]} : vector<32x32xf32> to vector<32x16xf32>
    %75 = vector.shape_cast %74 : vector<32x16xf32> to vector<1x32x16xf32>
    %cst_27 = arith.constant dense<0.000000e+00> : vector<1xf32>
    %76 = vector.multi_reduction <add>, %75, %cst_27 [1, 2] : vector<1x32x16xf32> to vector<1xf32>
    %77 = vector.shape_cast %76 : vector<1xf32> to vector<1x1x1xf32>
    %78 = vector.extract %77[0, 0, 0] : f32 from vector<1x1x1xf32>
    %cst_28 = arith.constant 5.120000e+02 : f32
    %79 = arith.divf %78, %cst_28 : f32
    %80 = arith.mulf %74, %74 : vector<32x16xf32>
    %81 = vector.shape_cast %80 : vector<32x16xf32> to vector<1x32x16xf32>
    %cst_29 = arith.constant dense<0.000000e+00> : vector<1xf32>
    %82 = vector.multi_reduction <add>, %81, %cst_29 [1, 2] : vector<1x32x16xf32> to vector<1xf32>
    %83 = vector.shape_cast %82 : vector<1xf32> to vector<1x1x1xf32>
    %84 = vector.extract %83[0, 0, 0] : f32 from vector<1x1x1xf32>
    %cst_30 = arith.constant 5.120000e+02 : f32
    %85 = arith.divf %84, %cst_30 : f32
    %86 = arith.mulf %79, %79 : f32
    %87 = arith.subf %85, %86 : f32
    %cst_31 = arith.constant 9.99999974E-6 : f32
    %88 = arith.addf %87, %cst_31 : f32
    %89 = math.rsqrt %88 : f32
    %90 = vector.broadcast %79 : f32 to vector<32x16xf32>
    %91 = arith.subf %74, %90 : vector<32x16xf32>
    %92 = vector.broadcast %89 : f32 to vector<32x16xf32>
    %93 = arith.mulf %91, %92 : vector<32x16xf32>
    %94 = tpu.concatenate %73, %93 in 1 : vector<32x16xf32>, vector<32x16xf32> -> vector<32x32xf32>
    %95 = vector.broadcast %52 : vector<32x1xf32> to vector<32x32xf32>
    %96 = arith.mulf %94, %95 : vector<32x32xf32>
    %97 = vector.broadcast %53 : vector<32x1xf32> to vector<32x32xf32>
    %98 = arith.addf %96, %97 : vector<32x32xf32>
    %99 = arith.truncf %98 : vector<32x32xf32> to vector<32x32xbf16>
    %c0_32 = arith.constant 0 : index
    %c0_33 = arith.constant 0 : index
    %100 = vector.load %arg7[%c0_32, %c0_33] : memref<96x32xbf16, #tpu.memory_space<vmem>>, vector<96x32xbf16>
    %cst_34 = arith.constant dense<0.000000e+00> : vector<96x32xf32>
    %101 = tpu.matmul %100, %51, %cst_34 {dimension_numbers = #tpu.dot_dimension_numbers<[1], [0], [0], [1], [0, 0, 1, 1], [], []>} : vector<96x32xbf16>, vector<32x32xbf16>, vector<96x32xf32> -> vector<96x32xf32>
    %c0_35 = arith.constant 0 : index
    %c0_36 = arith.constant 0 : index
    %102 = vector.load %arg8[%c0_35, %c0_36] : memref<96x1xf32, #tpu.memory_space<vmem>>, vector<96x1xf32>
    %103 = vector.broadcast %102 : vector<96x1xf32> to vector<96x32xf32>
    %104 = arith.addf %101, %103 : vector<96x32xf32>
    %c0_37 = arith.constant 0 : index
    %c0_38 = arith.constant 0 : index
    %105 = vector.load %arg9[%c0_37, %c0_38] : memref<96x32xbf16, #tpu.memory_space<vmem>>, vector<96x32xbf16>
    %cst_39 = arith.constant dense<0.000000e+00> : vector<96x32xf32>
    %106 = tpu.matmul %105, %99, %cst_39 {dimension_numbers = #tpu.dot_dimension_numbers<[1], [0], [0], [1], [0, 0, 1, 1], [], []>} : vector<96x32xbf16>, vector<32x32xbf16>, vector<96x32xf32> -> vector<96x32xf32>
    %c0_40 = arith.constant 0 : index
    %c0_41 = arith.constant 0 : index
    %107 = vector.load %arg10[%c0_40, %c0_41] : memref<96x1xf32, #tpu.memory_space<vmem>>, vector<96x1xf32>
    %108 = vector.broadcast %107 : vector<96x1xf32> to vector<96x32xf32>
    %109 = arith.addf %106, %108 : vector<96x32xf32>
    %110 = vector.extract_strided_slice %104 {offsets = [0, 0], sizes = [96, 16], strides = [1, 1]} : vector<96x32xf32> to vector<96x16xf32>
    %111 = vector.extract_strided_slice %109 {offsets = [0, 0], sizes = [96, 16], strides = [1, 1]} : vector<96x32xf32> to vector<96x16xf32>
    %112 = vector.extract_strided_slice %110 {offsets = [0, 0], sizes = [32, 16], strides = [1, 1]} : vector<96x16xf32> to vector<32x16xf32>
    %cst_42 = arith.constant 2.500000e-01 : f32
    %113 = vector.broadcast %cst_42 : f32 to vector<32x16xf32>
    %114 = arith.mulf %112, %113 : vector<32x16xf32>
    %115 = arith.truncf %114 : vector<32x16xf32> to vector<32x16xbf16>
    %116 = vector.shape_cast %115 : vector<32x16xbf16> to vector<2x16x16xbf16>
    %117 = vector.extract_strided_slice %111 {offsets = [32, 0], sizes = [32, 16], strides = [1, 1]} : vector<96x16xf32> to vector<32x16xf32>
    %118 = arith.truncf %117 : vector<32x16xf32> to vector<32x16xbf16>
    %119 = vector.shape_cast %118 : vector<32x16xbf16> to vector<2x16x16xbf16>
    %120 = vector.extract_strided_slice %111 {offsets = [64, 0], sizes = [32, 16], strides = [1, 1]} : vector<96x16xf32> to vector<32x16xf32>
    %121 = arith.truncf %120 : vector<32x16xf32> to vector<32x16xbf16>
    %122 = vector.shape_cast %121 : vector<32x16xbf16> to vector<2x16x16xbf16>
    %cst_43 = arith.constant dense<0.000000e+00> : vector<2x16x16xf32>
    %123 = tpu.matmul %116, %119, %cst_43 {dimension_numbers = #tpu.dot_dimension_numbers<[1], [1], [2], [2], [0, 0, 0, 2, 1, 2], [0], [0]>} : vector<2x16x16xbf16>, vector<2x16x16xbf16>, vector<2x16x16xf32> -> vector<2x16x16xf32>
    %cst_44 = arith.constant dense<0xFF800000> : vector<2x16xf32>
    %124 = vector.multi_reduction <maximumf>, %123, %cst_44 [2] : vector<2x16x16xf32> to vector<2x16xf32>
    %125 = vector.shape_cast %124 : vector<2x16xf32> to vector<2x16x1xf32>
    %126 = vector.broadcast %125 : vector<2x16x1xf32> to vector<2x16x16xf32>
    %127 = arith.subf %123, %126 : vector<2x16x16xf32>
    %128 = math.exp %127 : vector<2x16x16xf32>
    %cst_45 = arith.constant dense<0.000000e+00> : vector<2x16xf32>
    %129 = vector.multi_reduction <add>, %128, %cst_45 [2] : vector<2x16x16xf32> to vector<2x16xf32>
    %130 = vector.shape_cast %129 : vector<2x16xf32> to vector<2x16x1xf32>
    %131 = tpu.reciprocal %130 {approx = true} : vector<2x16x1xf32> -> vector<2x16x1xf32>
    %132 = vector.broadcast %131 : vector<2x16x1xf32> to vector<2x16x16xf32>
    %133 = arith.mulf %128, %132 : vector<2x16x16xf32>
    %134 = arith.truncf %133 : vector<2x16x16xf32> to vector<2x16x16xbf16>
    %cst_46 = arith.constant dense<0.000000e+00> : vector<2x16x16xf32>
    %135 = tpu.matmul %122, %134, %cst_46 {dimension_numbers = #tpu.dot_dimension_numbers<[2], [2], [1], [1], [0, 0, 0, 1, 1, 1], [0], [0]>} : vector<2x16x16xbf16>, vector<2x16x16xbf16>, vector<2x16x16xf32> -> vector<2x16x16xf32>
    %136 = vector.shape_cast %135 : vector<2x16x16xf32> to vector<32x16xf32>
    %137 = arith.truncf %136 : vector<32x16xf32> to vector<32x16xbf16>
    %c0_47 = arith.constant 0 : index
    %c0_48 = arith.constant 0 : index
    %138 = vector.load %arg17[%c0_47, %c0_48] : memref<32x32xbf16, #tpu.memory_space<vmem>>, vector<32x16xbf16>
    tpu.vector_store %arg17[%c0_47, %c0_48], %137 {strides = array<i32>} : memref<32x32xbf16, #tpu.memory_space<vmem>>, vector<32x16xbf16>,
    %139 = vector.extract_strided_slice %109 {offsets = [0, 0], sizes = [96, 16], strides = [1, 1]} : vector<96x32xf32> to vector<96x16xf32>
    %140 = vector.extract_strided_slice %104 {offsets = [0, 0], sizes = [96, 16], strides = [1, 1]} : vector<96x32xf32> to vector<96x16xf32>
    %141 = vector.extract_strided_slice %139 {offsets = [0, 0], sizes = [32, 16], strides = [1, 1]} : vector<96x16xf32> to vector<32x16xf32>
    %cst_49 = arith.constant 2.500000e-01 : f32
    %142 = vector.broadcast %cst_49 : f32 to vector<32x16xf32>
    %143 = arith.mulf %141, %142 : vector<32x16xf32>
    %144 = arith.truncf %143 : vector<32x16xf32> to vector<32x16xbf16>
    %145 = vector.shape_cast %144 : vector<32x16xbf16> to vector<2x16x16xbf16>
    %146 = vector.extract_strided_slice %140 {offsets = [32, 0], sizes = [32, 16], strides = [1, 1]} : vector<96x16xf32> to vector<32x16xf32>
    %147 = arith.truncf %146 : vector<32x16xf32> to vector<32x16xbf16>
    %148 = vector.shape_cast %147 : vector<32x16xbf16> to vector<2x16x16xbf16>
    %149 = vector.extract_strided_slice %140 {offsets = [64, 0], sizes = [32, 16], strides = [1, 1]} : vector<96x16xf32> to vector<32x16xf32>
    %150 = arith.truncf %149 : vector<32x16xf32> to vector<32x16xbf16>
    %151 = vector.shape_cast %150 : vector<32x16xbf16> to vector<2x16x16xbf16>
    %cst_50 = arith.constant dense<0.000000e+00> : vector<2x16x16xf32>
    %152 = tpu.matmul %145, %148, %cst_50 {dimension_numbers = #tpu.dot_dimension_numbers<[1], [1], [2], [2], [0, 0, 0, 2, 1, 2], [0], [0]>} : vector<2x16x16xbf16>, vector<2x16x16xbf16>, vector<2x16x16xf32> -> vector<2x16x16xf32>
    %cst_51 = arith.constant dense<0xFF800000> : vector<2x16xf32>
    %153 = vector.multi_reduction <maximumf>, %152, %cst_51 [2] : vector<2x16x16xf32> to vector<2x16xf32>
    %154 = vector.shape_cast %153 : vector<2x16xf32> to vector<2x16x1xf32>
    %155 = vector.broadcast %154 : vector<2x16x1xf32> to vector<2x16x16xf32>
    %156 = arith.subf %152, %155 : vector<2x16x16xf32>
    %157 = math.exp %156 : vector<2x16x16xf32>
    %cst_52 = arith.constant dense<0.000000e+00> : vector<2x16xf32>
    %158 = vector.multi_reduction <add>, %157, %cst_52 [2] : vector<2x16x16xf32> to vector<2x16xf32>
    %159 = vector.shape_cast %158 : vector<2x16xf32> to vector<2x16x1xf32>
    %160 = tpu.reciprocal %159 {approx = true} : vector<2x16x1xf32> -> vector<2x16x1xf32>
    %161 = vector.broadcast %160 : vector<2x16x1xf32> to vector<2x16x16xf32>
    %162 = arith.mulf %157, %161 : vector<2x16x16xf32>
    %163 = arith.truncf %162 : vector<2x16x16xf32> to vector<2x16x16xbf16>
    %cst_53 = arith.constant dense<0.000000e+00> : vector<2x16x16xf32>
    %164 = tpu.matmul %151, %163, %cst_53 {dimension_numbers = #tpu.dot_dimension_numbers<[2], [2], [1], [1], [0, 0, 0, 1, 1, 1], [0], [0]>} : vector<2x16x16xbf16>, vector<2x16x16xbf16>, vector<2x16x16xf32> -> vector<2x16x16xf32>
    %165 = vector.shape_cast %164 : vector<2x16x16xf32> to vector<32x16xf32>
    %166 = arith.truncf %165 : vector<32x16xf32> to vector<32x16xbf16>
    %c0_54 = arith.constant 0 : index
    %c0_55 = arith.constant 0 : index
    %167 = vector.load %arg18[%c0_54, %c0_55] : memref<32x32xbf16, #tpu.memory_space<vmem>>, vector<32x16xbf16>
    tpu.vector_store %arg18[%c0_54, %c0_55], %166 {strides = array<i32>} : memref<32x32xbf16, #tpu.memory_space<vmem>>, vector<32x16xbf16>,
    %168 = vector.extract_strided_slice %104 {offsets = [0, 16], sizes = [96, 16], strides = [1, 1]} : vector<96x32xf32> to vector<96x16xf32>
    %169 = vector.extract_strided_slice %109 {offsets = [0, 16], sizes = [96, 16], strides = [1, 1]} : vector<96x32xf32> to vector<96x16xf32>
    %170 = vector.extract_strided_slice %168 {offsets = [0, 0], sizes = [32, 16], strides = [1, 1]} : vector<96x16xf32> to vector<32x16xf32>
    %cst_56 = arith.constant 2.500000e-01 : f32
    %171 = vector.broadcast %cst_56 : f32 to vector<32x16xf32>
    %172 = arith.mulf %170, %171 : vector<32x16xf32>
    %173 = arith.truncf %172 : vector<32x16xf32> to vector<32x16xbf16>
    %174 = vector.shape_cast %173 : vector<32x16xbf16> to vector<2x16x16xbf16>
    %175 = vector.extract_strided_slice %169 {offsets = [32, 0], sizes = [32, 16], strides = [1, 1]} : vector<96x16xf32> to vector<32x16xf32>
    %176 = arith.truncf %175 : vector<32x16xf32> to vector<32x16xbf16>
    %177 = vector.shape_cast %176 : vector<32x16xbf16> to vector<2x16x16xbf16>
    %178 = vector.extract_strided_slice %169 {offsets = [64, 0], sizes = [32, 16], strides = [1, 1]} : vector<96x16xf32> to vector<32x16xf32>
    %179 = arith.truncf %178 : vector<32x16xf32> to vector<32x16xbf16>
    %180 = vector.shape_cast %179 : vector<32x16xbf16> to vector<2x16x16xbf16>
    %cst_57 = arith.constant dense<0.000000e+00> : vector<2x16x16xf32>
    %181 = tpu.matmul %174, %177, %cst_57 {dimension_numbers = #tpu.dot_dimension_numbers<[1], [1], [2], [2], [0, 0, 0, 2, 1, 2], [0], [0]>} : vector<2x16x16xbf16>, vector<2x16x16xbf16>, vector<2x16x16xf32> -> vector<2x16x16xf32>
    %cst_58 = arith.constant dense<0xFF800000> : vector<2x16xf32>
    %182 = vector.multi_reduction <maximumf>, %181, %cst_58 [2] : vector<2x16x16xf32> to vector<2x16xf32>
    %183 = vector.shape_cast %182 : vector<2x16xf32> to vector<2x16x1xf32>
    %184 = vector.broadcast %183 : vector<2x16x1xf32> to vector<2x16x16xf32>
    %185 = arith.subf %181, %184 : vector<2x16x16xf32>
    %186 = math.exp %185 : vector<2x16x16xf32>
    %cst_59 = arith.constant dense<0.000000e+00> : vector<2x16xf32>
    %187 = vector.multi_reduction <add>, %186, %cst_59 [2] : vector<2x16x16xf32> to vector<2x16xf32>
    %188 = vector.shape_cast %187 : vector<2x16xf32> to vector<2x16x1xf32>
    %189 = tpu.reciprocal %188 {approx = true} : vector<2x16x1xf32> -> vector<2x16x1xf32>
    %190 = vector.broadcast %189 : vector<2x16x1xf32> to vector<2x16x16xf32>
    %191 = arith.mulf %186, %190 : vector<2x16x16xf32>
    %192 = arith.truncf %191 : vector<2x16x16xf32> to vector<2x16x16xbf16>
    %cst_60 = arith.constant dense<0.000000e+00> : vector<2x16x16xf32>
    %193 = tpu.matmul %180, %192, %cst_60 {dimension_numbers = #tpu.dot_dimension_numbers<[2], [2], [1], [1], [0, 0, 0, 1, 1, 1], [0], [0]>} : vector<2x16x16xbf16>, vector<2x16x16xbf16>, vector<2x16x16xf32> -> vector<2x16x16xf32>
    %194 = vector.shape_cast %193 : vector<2x16x16xf32> to vector<32x16xf32>
    %195 = arith.truncf %194 : vector<32x16xf32> to vector<32x16xbf16>
    %c0_61 = arith.constant 0 : index
    %c16 = arith.constant 16 : index
    %196 = vector.load %arg17[%c0_61, %c16] : memref<32x32xbf16, #tpu.memory_space<vmem>>, vector<32x16xbf16>
    tpu.vector_store %arg17[%c0_61, %c16], %195 {strides = array<i32>} : memref<32x32xbf16, #tpu.memory_space<vmem>>, vector<32x16xbf16>,
    %197 = vector.extract_strided_slice %109 {offsets = [0, 16], sizes = [96, 16], strides = [1, 1]} : vector<96x32xf32> to vector<96x16xf32>
    %198 = vector.extract_strided_slice %104 {offsets = [0, 16], sizes = [96, 16], strides = [1, 1]} : vector<96x32xf32> to vector<96x16xf32>
    %199 = vector.extract_strided_slice %197 {offsets = [0, 0], sizes = [32, 16], strides = [1, 1]} : vector<96x16xf32> to vector<32x16xf32>
    %cst_62 = arith.constant 2.500000e-01 : f32
    %200 = vector.broadcast %cst_62 : f32 to vector<32x16xf32>
    %201 = arith.mulf %199, %200 : vector<32x16xf32>
    %202 = arith.truncf %201 : vector<32x16xf32> to vector<32x16xbf16>
    %203 = vector.shape_cast %202 : vector<32x16xbf16> to vector<2x16x16xbf16>
    %204 = vector.extract_strided_slice %198 {offsets = [32, 0], sizes = [32, 16], strides = [1, 1]} : vector<96x16xf32> to vector<32x16xf32>
    %205 = arith.truncf %204 : vector<32x16xf32> to vector<32x16xbf16>
    %206 = vector.shape_cast %205 : vector<32x16xbf16> to vector<2x16x16xbf16>
    %207 = vector.extract_strided_slice %198 {offsets = [64, 0], sizes = [32, 16], strides = [1, 1]} : vector<96x16xf32> to vector<32x16xf32>
    %208 = arith.truncf %207 : vector<32x16xf32> to vector<32x16xbf16>
    %209 = vector.shape_cast %208 : vector<32x16xbf16> to vector<2x16x16xbf16>
    %cst_63 = arith.constant dense<0.000000e+00> : vector<2x16x16xf32>
    %210 = tpu.matmul %203, %206, %cst_63 {dimension_numbers = #tpu.dot_dimension_numbers<[1], [1], [2], [2], [0, 0, 0, 2, 1, 2], [0], [0]>} : vector<2x16x16xbf16>, vector<2x16x16xbf16>, vector<2x16x16xf32> -> vector<2x16x16xf32>
    %cst_64 = arith.constant dense<0xFF800000> : vector<2x16xf32>
    %211 = vector.multi_reduction <maximumf>, %210, %cst_64 [2] : vector<2x16x16xf32> to vector<2x16xf32>
    %212 = vector.shape_cast %211 : vector<2x16xf32> to vector<2x16x1xf32>
    %213 = vector.broadcast %212 : vector<2x16x1xf32> to vector<2x16x16xf32>
    %214 = arith.subf %210, %213 : vector<2x16x16xf32>
    %215 = math.exp %214 : vector<2x16x16xf32>
    %cst_65 = arith.constant dense<0.000000e+00> : vector<2x16xf32>
    %216 = vector.multi_reduction <add>, %215, %cst_65 [2] : vector<2x16x16xf32> to vector<2x16xf32>
    %217 = vector.shape_cast %216 : vector<2x16xf32> to vector<2x16x1xf32>
    %218 = tpu.reciprocal %217 {approx = true} : vector<2x16x1xf32> -> vector<2x16x1xf32>
    %219 = vector.broadcast %218 : vector<2x16x1xf32> to vector<2x16x16xf32>
    %220 = arith.mulf %215, %219 : vector<2x16x16xf32>
    %221 = arith.truncf %220 : vector<2x16x16xf32> to vector<2x16x16xbf16>
    %cst_66 = arith.constant dense<0.000000e+00> : vector<2x16x16xf32>
    %222 = tpu.matmul %209, %221, %cst_66 {dimension_numbers = #tpu.dot_dimension_numbers<[2], [2], [1], [1], [0, 0, 0, 1, 1, 1], [0], [0]>} : vector<2x16x16xbf16>, vector<2x16x16xbf16>, vector<2x16x16xf32> -> vector<2x16x16xf32>
    %223 = vector.shape_cast %222 : vector<2x16x16xf32> to vector<32x16xf32>
    %224 = arith.truncf %223 : vector<32x16xf32> to vector<32x16xbf16>
    %c0_67 = arith.constant 0 : index
    %c16_68 = arith.constant 16 : index
    %225 = vector.load %arg18[%c0_67, %c16_68] : memref<32x32xbf16, #tpu.memory_space<vmem>>, vector<32x16xbf16>
    tpu.vector_store %arg18[%c0_67, %c16_68], %224 {strides = array<i32>} : memref<32x32xbf16, #tpu.memory_space<vmem>>, vector<32x16xbf16>,
    %c0_69 = arith.constant 0 : index
    %c0_70 = arith.constant 0 : index
    %226 = vector.load %arg11[%c0_69, %c0_70] : memref<32x32xbf16, #tpu.memory_space<vmem>>, vector<32x32xbf16>
    %c0_71 = arith.constant 0 : index
    %c0_72 = arith.constant 0 : index
    %227 = vector.load %arg17[%c0_71, %c0_72] : memref<32x32xbf16, #tpu.memory_space<vmem>>, vector<32x32xbf16>
    %cst_73 = arith.constant dense<0.000000e+00> : vector<32x32xf32>
    %228 = tpu.matmul %226, %227, %cst_73 {dimension_numbers = #tpu.dot_dimension_numbers<[1], [0], [0], [1], [0, 0, 1, 1], [], []>} : vector<32x32xbf16>, vector<32x32xbf16>, vector<32x32xf32> -> vector<32x32xf32>
    %c0_74 = arith.constant 0 : index
    %c0_75 = arith.constant 0 : index
    %229 = vector.load %arg12[%c0_74, %c0_75] : memref<32x1xf32, #tpu.memory_space<vmem>>, vector<32x1xf32>
    %230 = vector.broadcast %229 : vector<32x1xf32> to vector<32x32xf32>
    %231 = arith.addf %228, %230 : vector<32x32xf32>
    %232 = arith.addf %231, %1 : vector<32x32xf32>
    %c0_76 = arith.constant 0 : index
    %c0_77 = arith.constant 0 : index
    %233 = vector.load %arg13[%c0_76, %c0_77] : memref<32x32xbf16, #tpu.memory_space<vmem>>, vector<32x32xbf16>
    %c0_78 = arith.constant 0 : index
    %c0_79 = arith.constant 0 : index
    %234 = vector.load %arg18[%c0_78, %c0_79] : memref<32x32xbf16, #tpu.memory_space<vmem>>, vector<32x32xbf16>
    %cst_80 = arith.constant dense<0.000000e+00> : vector<32x32xf32>
    %235 = tpu.matmul %233, %234, %cst_80 {dimension_numbers = #tpu.dot_dimension_numbers<[1], [0], [0], [1], [0, 0, 1, 1], [], []>} : vector<32x32xbf16>, vector<32x32xbf16>, vector<32x32xf32> -> vector<32x32xf32>
    %c0_81 = arith.constant 0 : index
    %c0_82 = arith.constant 0 : index
    %236 = vector.load %arg14[%c0_81, %c0_82] : memref<32x1xf32, #tpu.memory_space<vmem>>, vector<32x1xf32>
    %237 = vector.broadcast %236 : vector<32x1xf32> to vector<32x32xf32>
    %238 = arith.addf %235, %237 : vector<32x32xf32>
    %239 = arith.addf %238, %3 : vector<32x32xf32>
    %c0_83 = arith.constant 0 : index
    %c0_84 = arith.constant 0 : index
    %c0_85 = arith.constant 0 : index
    %240 = vector.load %arg15[%c0_83, %c0_84, %c0_85] : memref<1x32x32xf32, #tpu.memory_space<vmem>>, vector<1x32x32xf32>
    %241 = vector.shape_cast %240 : vector<1x32x32xf32> to vector<32x32xf32>
    %242 = vector.shape_cast %232 : vector<32x32xf32> to vector<1x32x32xf32>
    tpu.vector_store %arg15[%c0_83, %c0_84, %c0_85], %242 {strides = array<i32>} : memref<1x32x32xf32, #tpu.memory_space<vmem>>, vector<1x32x32xf32>,
    %c0_86 = arith.constant 0 : index
    %c0_87 = arith.constant 0 : index
    %c0_88 = arith.constant 0 : index
    %243 = vector.load %arg16[%c0_86, %c0_87, %c0_88] : memref<1x32x32xf32, #tpu.memory_space<vmem>>, vector<1x32x32xf32>
    %244 = vector.shape_cast %243 : vector<1x32x32xf32> to vector<32x32xf32>
    %245 = vector.shape_cast %239 : vector<32x32xf32> to vector<1x32x32xf32>
    tpu.vector_store %arg16[%c0_86, %c0_87, %c0_88], %245 {strides = array<i32>} : memref<1x32x32xf32, #tpu.memory_space<vmem>>, vector<1x32x32xf32>,
    return
  }
  func.func @transform_0(%arg0: i32) -> (i32, i32, i32) {
    %c0_i32 = arith.constant 0 : i32
    %c0_i32_0 = arith.constant 0 : i32
    %c0_i32_1 = arith.constant 0 : i32
    return %arg0, %c0_i32, %c0_i32_0 : i32, i32, i32
  }
  func.func @transform_1(%arg0: i32) -> (i32, i32, i32) {
    %c0_i32 = arith.constant 0 : i32
    %c0_i32_0 = arith.constant 0 : i32
    %c0_i32_1 = arith.constant 0 : i32
    return %arg0, %c0_i32, %c0_i32_0 : i32, i32, i32
  }
  func.func @transform_2(%arg0: i32) -> (i32, i32) {
    %c0_i32 = arith.constant 0 : i32
    %c0_i32_0 = arith.constant 0 : i32
    %c0_i32_1 = arith.constant 0 : i32
    return %c0_i32, %c0_i32_0 : i32, i32
  }
  func.func @transform_3(%arg0: i32) -> (i32, i32) {
    %c0_i32 = arith.constant 0 : i32
    %c0_i32_0 = arith.constant 0 : i32
    %c0_i32_1 = arith.constant 0 : i32
    return %c0_i32, %c0_i32_0 : i32, i32
  }
  func.func @transform_4(%arg0: i32) -> (i32, i32) {
    %c0_i32 = arith.constant 0 : i32
    %c0_i32_0 = arith.constant 0 : i32
    %c0_i32_1 = arith.constant 0 : i32
    return %c0_i32, %c0_i32_0 : i32, i32
  }
  func.func @transform_5(%arg0: i32) -> (i32, i32) {
    %c0_i32 = arith.constant 0 : i32
    %c0_i32_0 = arith.constant 0 : i32
    %c0_i32_1 = arith.constant 0 : i32
    return %c0_i32, %c0_i32_0 : i32, i32
  }
  func.func @transform_6(%arg0: i32) -> (i32, i32) {
    %c0_i32 = arith.constant 0 : i32
    %c0_i32_0 = arith.constant 0 : i32
    %c0_i32_1 = arith.constant 0 : i32
    return %c0_i32, %c0_i32_0 : i32, i32
  }
  func.func @transform_7(%arg0: i32) -> (i32, i32) {
    %c0_i32 = arith.constant 0 : i32
    %c0_i32_0 = arith.constant 0 : i32
    %c0_i32_1 = arith.constant 0 : i32
    return %c0_i32, %c0_i32_0 : i32, i32
  }
  func.func @transform_8(%arg0: i32) -> (i32, i32) {
    %c0_i32 = arith.constant 0 : i32
    %c0_i32_0 = arith.constant 0 : i32
    %c0_i32_1 = arith.constant 0 : i32
    return %c0_i32, %c0_i32_0 : i32, i32
  }
  func.func @transform_9(%arg0: i32) -> (i32, i32) {
    %c0_i32 = arith.constant 0 : i32
    %c0_i32_0 = arith.constant 0 : i32
    %c0_i32_1 = arith.constant 0 : i32
    return %c0_i32, %c0_i32_0 : i32, i32
  }
  func.func @transform_10(%arg0: i32) -> (i32, i32) {
    %c0_i32 = arith.constant 0 : i32
    %c0_i32_0 = arith.constant 0 : i32
    %c0_i32_1 = arith.constant 0 : i32
    return %c0_i32, %c0_i32_0 : i32, i32
  }
  func.func @transform_11(%arg0: i32) -> (i32, i32) {
    %c0_i32 = arith.constant 0 : i32
    %c0_i32_0 = arith.constant 0 : i32
    %c0_i32_1 = arith.constant 0 : i32
    return %c0_i32, %c0_i32_0 : i32, i32
  }
  func.func @transform_12(%arg0: i32) -> (i32, i32) {
    %c0_i32 = arith.constant 0 : i32
    %c0_i32_0 = arith.constant 0 : i32
    %c0_i32_1 = arith.constant 0 : i32
    return %c0_i32, %c0_i32_0 : i32, i32
  }
  func.func @transform_13(%arg0: i32) -> (i32, i32) {
    %c0_i32 = arith.constant 0 : i32
    %c0_i32_0 = arith.constant 0 : i32
    %c0_i32_1 = arith.constant 0 : i32
    return %c0_i32, %c0_i32_0 : i32, i32
  }
  func.func @transform_14(%arg0: i32) -> (i32, i32, i32) {
    %c0_i32 = arith.constant 0 : i32
    %c0_i32_0 = arith.constant 0 : i32
    %c0_i32_1 = arith.constant 0 : i32
    return %arg0, %c0_i32, %c0_i32_0 : i32, i32, i32
  }
  func.func @transform_15(%arg0: i32) -> (i32, i32, i32) {
    %c0_i32 = arith.constant 0 : i32
    %c0_i32_0 = arith.constant 0 : i32
    %c0_i32_1 = arith.constant 0 : i32
    return %arg0, %c0_i32, %c0_i32_0 : i32, i32, i32
  }
}

</mosaic_0001>

<llo_original>
// kernel: tpu_custom_call.1
$region0: #{tpu_custom_call.1}
  #allocation0 [shape = 'u32[]', space=smem, size = 0x4, offset = 0x4, fixed_abs, tag = 'smem constant byte address 0x4 - core index']
  #allocation1 [shape = 'u32[144,128]{1,0:T(1,128)}', space=vmem, size = 0x12000, scoped, tag = 'internal scratch']
  #allocation2 [shape = 'bf16[32,32]{1,0:T(16,128)(2,1)}', space=vmem, size = 0x2000, scoped, tag = 'scratch operand']
  #allocation3 [shape = 'bf16[32,32]{1,0:T(16,128)(2,1)}', space=vmem, size = 0x2000, scoped, tag = 'scratch operand']
  %s0 = inlined_call_operand.vmem [shape: f32[2,32,32], index: 0, kind: input, shape index: {}]
  %s1 = inlined_call_operand.vmem [shape: f32[2,32,32], index: 1, kind: input, shape index: {}]
  %s2 = inlined_call_operand.vmem [shape: f32[32,1], index: 2, kind: input, shape index: {}]
  %s3 = inlined_call_operand.vmem [shape: f32[32,1], index: 3, kind: input, shape index: {}]
  %s4 = inlined_call_operand.vmem [shape: f32[32,1], index: 4, kind: input, shape index: {}]
  %s5 = inlined_call_operand.vmem [shape: f32[32,1], index: 5, kind: input, shape index: {}]
  %s6 = inlined_call_operand.vmem [shape: bf16[96,32], index: 6, kind: input, shape index: {}]
  %s7 = inlined_call_operand.vmem [shape: f32[96,1], index: 7, kind: input, shape index: {}]
  %s8 = inlined_call_operand.vmem [shape: bf16[96,32], index: 8, kind: input, shape index: {}]
  %s9 = inlined_call_operand.vmem [shape: f32[96,1], index: 9, kind: input, shape index: {}]
  %s10 = inlined_call_operand.vmem [shape: bf16[32,32], index: 10, kind: input, shape index: {}]
  %s11 = inlined_call_operand.vmem [shape: f32[32,1], index: 11, kind: input, shape index: {}]
  %s12 = inlined_call_operand.vmem [shape: bf16[32,32], index: 12, kind: input, shape index: {}]
  %s13 = inlined_call_operand.vmem [shape: f32[32,1], index: 13, kind: input, shape index: {}]
  %s14 = inlined_call_operand.hbm [shape: f32[2,32,32], index: 14, kind: output, shape index: {0}]
  %s15 = inlined_call_operand.hbm [shape: f32[2,32,32], index: 15, kind: output, shape index: {1}]
  %16 = xla_tuple %s14, %s15
  %s17 = sld [smem:[#allocation0]]
  $region97: #{tpu_custom_call.1} parent=0
    _
  %s19 = ssub.s32 1, %s17
  %s20 = scalar_select 0, %s19, %s17
  $region1: #{tpu_custom_call.1} parent=0
    #allocation4 [shape = 'u8[32768]{0}', space=vmem, size = 0x8000, scoped, tag = 'output window, operand 0']
    #allocation5 [shape = 's32[2]{0}', space=sflag, size = 0x8, scoped, tag = 'scoped memory for tpu_custom_call.1']
    #allocation6 [shape = 'u8[32768]{0}', space=vmem, size = 0x8000, scoped, tag = 'output window, operand 1']
    #allocation7 [shape = 's32[2]{0}', space=sflag, size = 0x8, scoped, tag = 'scoped memory for tpu_custom_call.1']
    %21 = vsyncpa [#allocation5], 0
    %s22 = scalar_lea.sflag [#allocation5], 1
    %23 = vsyncpa %s22, 0
    %24 = vsyncpa [#allocation7], 0
    %s25 = scalar_lea.sflag [#allocation7], 1
    %26 = vsyncpa %s25, 0
    loop: start=0, step=1, limit=4
    $region2: #{tpu_custom_call.1} parent=1 // loop_pre_header
      _
    $region3: #{tpu_custom_call.1} parent=1 // loop_header
      %s28 = sphi 0, %s32
      %p29 = scmp.ge.s32.totalorder %s28, 4
      %s38 = sphi 0, %s40
      %s41 = sphi 0, %s38
      %s42 = sphi 0, %s41
      %s58 = sphi 0, %s42
      %s64 = sphi 0, %s66
      %s67 = sphi 0, %s64
      %s68 = sphi 0, %s67
      %s84 = sphi 0, %s68
      %s88 = sphi 0, %s88
      %s90 = sphi 0, %s88
      %s91 = sphi 0, %s90
      %s105 = sphi 0, %s91
      %s109 = sphi 0, %s109
      %s111 = sphi 0, %s109
      %s112 = sphi 0, %s111
      %s126 = sphi 0, %s112
      %s130 = sphi 0, %s130
      %s132 = sphi 0, %s130
      %s133 = sphi 0, %s132
      %s147 = sphi 0, %s133
      %s151 = sphi 0, %s151
      %s153 = sphi 0, %s151
      %s154 = sphi 0, %s153
      %s168 = sphi 0, %s154
      %s172 = sphi 0, %s172
      %s174 = sphi 0, %s172
      %s175 = sphi 0, %s174
      %s189 = sphi 0, %s175
      %s193 = sphi 0, %s193
      %s195 = sphi 0, %s193
      %s196 = sphi 0, %s195
      %s210 = sphi 0, %s196
      %s214 = sphi 0, %s214
      %s216 = sphi 0, %s214
      %s217 = sphi 0, %s216
      %s231 = sphi 0, %s217
      %s235 = sphi 0, %s235
      %s237 = sphi 0, %s235
      %s238 = sphi 0, %s237
      %s252 = sphi 0, %s238
      %s256 = sphi 0, %s256
      %s258 = sphi 0, %s256
      %s259 = sphi 0, %s258
      %s273 = sphi 0, %s259
      %s277 = sphi 0, %s277
      %s279 = sphi 0, %s277
      %s280 = sphi 0, %s279
      %s294 = sphi 0, %s280
      %s298 = sphi 0, %s298
      %s300 = sphi 0, %s298
      %s301 = sphi 0, %s300
      %s315 = sphi 0, %s301
      %s319 = sphi 0, %s319
      %s321 = sphi 0, %s319
      %s322 = sphi 0, %s321
      %s336 = sphi 0, %s322
      %s342 = sphi 0, %s344
      %s345 = sphi 0, %s342
      %s346 = sphi 0, %s345
      %s362 = sphi 0, %s346
      %s368 = sphi 0, %s370
      %s371 = sphi 0, %s368
      %s372 = sphi 0, %s371
      %s388 = sphi 0, %s372
    $region4: #{tpu_custom_call.1} parent=1 // loop_header_branch
      %31 = sbr.rel (%p29) target = $region8
    $region5: #{tpu_custom_call.1} parent=1 // loop_body
      %s33 = ssub.s32 %s28, 1
      %s34 = ssub.s32 %s28, 2
      %s35 = sadd.s32 %s28, 1
      %s36 = ssub.s32 %s28, %s35
      %p37 = scmp.eq.s32.totalorder %s36, 0
      %s39 = sadd.s32 %s38, 1
      %s40 = scalar_select %p37, %s38, %s39
      %p43 = pneg %p37
      %p44 = scmp.eq.s32.totalorder %s28, 1
      %p45 = por %p43, %p44
      %p46 = scmp.ne.s32.totalorder %s38, %s41
      %p47 = scmp.eq.s32.totalorder %s28, 0
      %p48 = por %p46, %p47
      %p49 = scmp.ne.s32.totalorder %s38, %s41
      %p50 = scmp.eq.s32.totalorder %s33, 1
      %p51 = por %p49, %p50
      %p52 = scmp.ne.s32.totalorder %s41, %s42
      %p53 = scmp.eq.s32.totalorder %s33, 0
      %p54 = por %p52, %p53
      %p55 = scmp.ne.s32.totalorder %s41, %s42
      %p56 = scmp.eq.s32.totalorder %s34, 1
      %p57 = por %p55, %p56
      %p59 = scmp.ne.s32.totalorder %s42, %s58
      %p60 = scmp.eq.s32.totalorder %s34, 0
      %p61 = por %p59, %p60
      %s62 = ssub.s32 %s28, %s35
      %p63 = scmp.eq.s32.totalorder %s62, 0
      %s65 = sadd.s32 %s64, 1
      %s66 = scalar_select %p63, %s64, %s65
      %p69 = pneg %p63
      %p70 = scmp.eq.s32.totalorder %s28, 1
      %p71 = por %p69, %p70
      %p72 = scmp.ne.s32.totalorder %s64, %s67
      %p73 = scmp.eq.s32.totalorder %s28, 0
      %p74 = por %p72, %p73
      %p75 = scmp.ne.s32.totalorder %s64, %s67
      %p76 = scmp.eq.s32.totalorder %s33, 1
      %p77 = por %p75, %p76
      %p78 = scmp.ne.s32.totalorder %s67, %s68
      %p79 = scmp.eq.s32.totalorder %s33, 0
      %p80 = por %p78, %p79
      %p81 = scmp.ne.s32.totalorder %s67, %s68
      %p82 = scmp.eq.s32.totalorder %s34, 1
      %p83 = por %p81, %p82
      %p85 = scmp.ne.s32.totalorder %s68, %s84
      %p86 = scmp.eq.s32.totalorder %s34, 0
      %p87 = por %p85, %p86
      %s89 = sadd.s32 %s88, 1
      %p92 = scmp.eq.s32.totalorder %s28, 1
      %p93 = scmp.ne.s32.totalorder %s88, %s90
      %p94 = scmp.eq.s32.totalorder %s28, 0
      %p95 = por %p93, %p94
      %p96 = scmp.ne.s32.totalorder %s88, %s90
      %p97 = scmp.eq.s32.totalorder %s33, 1
      %p98 = por %p96, %p97
      %p99 = scmp.ne.s32.totalorder %s90, %s91
      %p100 = scmp.eq.s32.totalorder %s33, 0
      %p101 = por %p99, %p100
      %p102 = scmp.ne.s32.totalorder %s90, %s91
      %p103 = scmp.eq.s32.totalorder %s34, 1
      %p104 = por %p102, %p103
      %p106 = scmp.ne.s32.totalorder %s91, %s105
      %p107 = scmp.eq.s32.totalorder %s34, 0
      %p108 = por %p106, %p107
      %s110 = sadd.s32 %s109, 1
      %p113 = scmp.eq.s32.totalorder %s28, 1
      %p114 = scmp.ne.s32.totalorder %s109, %s111
      %p115 = scmp.eq.s32.totalorder %s28, 0
      %p116 = por %p114, %p115
      %p117 = scmp.ne.s32.totalorder %s109, %s111
      %p118 = scmp.eq.s32.totalorder %s33, 1
      %p119 = por %p117, %p118
      %p120 = scmp.ne.s32.totalorder %s111, %s112
      %p121 = scmp.eq.s32.totalorder %s33, 0
      %p122 = por %p120, %p121
      %p123 = scmp.ne.s32.totalorder %s111, %s112
      %p124 = scmp.eq.s32.totalorder %s34, 1
      %p125 = por %p123, %p124
      %p127 = scmp.ne.s32.totalorder %s112, %s126
      %p128 = scmp.eq.s32.totalorder %s34, 0
      %p129 = por %p127, %p128
      %s131 = sadd.s32 %s130, 1
      %p134 = scmp.eq.s32.totalorder %s28, 1
      %p135 = scmp.ne.s32.totalorder %s130, %s132
      %p136 = scmp.eq.s32.totalorder %s28, 0
      %p137 = por %p135, %p136
      %p138 = scmp.ne.s32.totalorder %s130, %s132
      %p139 = scmp.eq.s32.totalorder %s33, 1
      %p140 = por %p138, %p139
      %p141 = scmp.ne.s32.totalorder %s132, %s133
      %p142 = scmp.eq.s32.totalorder %s33, 0
      %p143 = por %p141, %p142
      %p144 = scmp.ne.s32.totalorder %s132, %s133
      %p145 = scmp.eq.s32.totalorder %s34, 1
      %p146 = por %p144, %p145
      %p148 = scmp.ne.s32.totalorder %s133, %s147
      %p149 = scmp.eq.s32.totalorder %s34, 0
      %p150 = por %p148, %p149
      %s152 = sadd.s32 %s151, 1
      %p155 = scmp.eq.s32.totalorder %s28, 1
      %p156 = scmp.ne.s32.totalorder %s151, %s153
      %p157 = scmp.eq.s32.totalorder %s28, 0
      %p158 = por %p156, %p157
      %p159 = scmp.ne.s32.totalorder %s151, %s153
      %p160 = scmp.eq.s32.totalorder %s33, 1
      %p161 = por %p159, %p160
      %p162 = scmp.ne.s32.totalorder %s153, %s154
      %p163 = scmp.eq.s32.totalorder %s33, 0
      %p164 = por %p162, %p163
      %p165 = scmp.ne.s32.totalorder %s153, %s154
      %p166 = scmp.eq.s32.totalorder %s34, 1
      %p167 = por %p165, %p166
      %p169 = scmp.ne.s32.totalorder %s154, %s168
      %p170 = scmp.eq.s32.totalorder %s34, 0
      %p171 = por %p169, %p170
      %s173 = sadd.s32 %s172, 1
      %p176 = scmp.eq.s32.totalorder %s28, 1
      %p177 = scmp.ne.s32.totalorder %s172, %s174
      %p178 = scmp.eq.s32.totalorder %s28, 0
      %p179 = por %p177, %p178
      %p180 = scmp.ne.s32.totalorder %s172, %s174
      %p181 = scmp.eq.s32.totalorder %s33, 1
      %p182 = por %p180, %p181
      %p183 = scmp.ne.s32.totalorder %s174, %s175
      %p184 = scmp.eq.s32.totalorder %s33, 0
      %p185 = por %p183, %p184
      %p186 = scmp.ne.s32.totalorder %s174, %s175
      %p187 = scmp.eq.s32.totalorder %s34, 1
      %p188 = por %p186, %p187
      %p190 = scmp.ne.s32.totalorder %s175, %s189
      %p191 = scmp.eq.s32.totalorder %s34, 0
      %p192 = por %p190, %p191
      %s194 = sadd.s32 %s193, 1
      %p197 = scmp.eq.s32.totalorder %s28, 1
      %p198 = scmp.ne.s32.totalorder %s193, %s195
      %p199 = scmp.eq.s32.totalorder %s28, 0
      %p200 = por %p198, %p199
      %p201 = scmp.ne.s32.totalorder %s193, %s195
      %p202 = scmp.eq.s32.totalorder %s33, 1
      %p203 = por %p201, %p202
      %p204 = scmp.ne.s32.totalorder %s195, %s196
      %p205 = scmp.eq.s32.totalorder %s33, 0
      %p206 = por %p204, %p205
      %p207 = scmp.ne.s32.totalorder %s195, %s196
      %p208 = scmp.eq.s32.totalorder %s34, 1
      %p209 = por %p207, %p208
      %p211 = scmp.ne.s32.totalorder %s196, %s210
      %p212 = scmp.eq.s32.totalorder %s34, 0
      %p213 = por %p211, %p212
      %s215 = sadd.s32 %s214, 1
      %p218 = scmp.eq.s32.totalorder %s28, 1
      %p219 = scmp.ne.s32.totalorder %s214, %s216
      %p220 = scmp.eq.s32.totalorder %s28, 0
      %p221 = por %p219, %p220
      %p222 = scmp.ne.s32.totalorder %s214, %s216
      %p223 = scmp.eq.s32.totalorder %s33, 1
      %p224 = por %p222, %p223
      %p225 = scmp.ne.s32.totalorder %s216, %s217
      %p226 = scmp.eq.s32.totalorder %s33, 0
      %p227 = por %p225, %p226
      %p228 = scmp.ne.s32.totalorder %s216, %s217
      %p229 = scmp.eq.s32.totalorder %s34, 1
      %p230 = por %p228, %p229
      %p232 = scmp.ne.s32.totalorder %s217, %s231
      %p233 = scmp.eq.s32.totalorder %s34, 0
      %p234 = por %p232, %p233
      %s236 = sadd.s32 %s235, 1
      %p239 = scmp.eq.s32.totalorder %s28, 1
      %p240 = scmp.ne.s32.totalorder %s235, %s237
      %p241 = scmp.eq.s32.totalorder %s28, 0
      %p242 = por %p240, %p241
      %p243 = scmp.ne.s32.totalorder %s235, %s237
      %p244 = scmp.eq.s32.totalorder %s33, 1
      %p245 = por %p243, %p244
      %p246 = scmp.ne.s32.totalorder %s237, %s238
      %p247 = scmp.eq.s32.totalorder %s33, 0
      %p248 = por %p246, %p247
      %p249 = scmp.ne.s32.totalorder %s237, %s238
      %p250 = scmp.eq.s32.totalorder %s34, 1
      %p251 = por %p249, %p250
      %p253 = scmp.ne.s32.totalorder %s238, %s252
      %p254 = scmp.eq.s32.totalorder %s34, 0
      %p255 = por %p253, %p254
      %s257 = sadd.s32 %s256, 1
      %p260 = scmp.eq.s32.totalorder %s28, 1
      %p261 = scmp.ne.s32.totalorder %s256, %s258
      %p262 = scmp.eq.s32.totalorder %s28, 0
      %p263 = por %p261, %p262
      %p264 = scmp.ne.s32.totalorder %s256, %s258
      %p265 = scmp.eq.s32.totalorder %s33, 1
      %p266 = por %p264, %p265
      %p267 = scmp.ne.s32.totalorder %s258, %s259
      %p268 = scmp.eq.s32.totalorder %s33, 0
      %p269 = por %p267, %p268
      %p270 = scmp.ne.s32.totalorder %s258, %s259
      %p271 = scmp.eq.s32.totalorder %s34, 1
      %p272 = por %p270, %p271
      %p274 = scmp.ne.s32.totalorder %s259, %s273
      %p275 = scmp.eq.s32.totalorder %s34, 0
      %p276 = por %p274, %p275
      %s278 = sadd.s32 %s277, 1
      %p281 = scmp.eq.s32.totalorder %s28, 1
      %p282 = scmp.ne.s32.totalorder %s277, %s279
      %p283 = scmp.eq.s32.totalorder %s28, 0
      %p284 = por %p282, %p283
      %p285 = scmp.ne.s32.totalorder %s277, %s279
      %p286 = scmp.eq.s32.totalorder %s33, 1
      %p287 = por %p285, %p286
      %p288 = scmp.ne.s32.totalorder %s279, %s280
      %p289 = scmp.eq.s32.totalorder %s33, 0
      %p290 = por %p288, %p289
      %p291 = scmp.ne.s32.totalorder %s279, %s280
      %p292 = scmp.eq.s32.totalorder %s34, 1
      %p293 = por %p291, %p292
      %p295 = scmp.ne.s32.totalorder %s280, %s294
      %p296 = scmp.eq.s32.totalorder %s34, 0
      %p297 = por %p295, %p296
      %s299 = sadd.s32 %s298, 1
      %p302 = scmp.eq.s32.totalorder %s28, 1
      %p303 = scmp.ne.s32.totalorder %s298, %s300
      %p304 = scmp.eq.s32.totalorder %s28, 0
      %p305 = por %p303, %p304
      %p306 = scmp.ne.s32.totalorder %s298, %s300
      %p307 = scmp.eq.s32.totalorder %s33, 1
      %p308 = por %p306, %p307
      %p309 = scmp.ne.s32.totalorder %s300, %s301
      %p310 = scmp.eq.s32.totalorder %s33, 0
      %p311 = por %p309, %p310
      %p312 = scmp.ne.s32.totalorder %s300, %s301
      %p313 = scmp.eq.s32.totalorder %s34, 1
      %p314 = por %p312, %p313
      %p316 = scmp.ne.s32.totalorder %s301, %s315
      %p317 = scmp.eq.s32.totalorder %s34, 0
      %p318 = por %p316, %p317
      %s320 = sadd.s32 %s319, 1
      %p323 = scmp.eq.s32.totalorder %s28, 1
      %p324 = scmp.ne.s32.totalorder %s319, %s321
      %p325 = scmp.eq.s32.totalorder %s28, 0
      %p326 = por %p324, %p325
      %p327 = scmp.ne.s32.totalorder %s319, %s321
      %p328 = scmp.eq.s32.totalorder %s33, 1
      %p329 = por %p327, %p328
      %p330 = scmp.ne.s32.totalorder %s321, %s322
      %p331 = scmp.eq.s32.totalorder %s33, 0
      %p332 = por %p330, %p331
      %p333 = scmp.ne.s32.totalorder %s321, %s322
      %p334 = scmp.eq.s32.totalorder %s34, 1
      %p335 = por %p333, %p334
      %p337 = scmp.ne.s32.totalorder %s322, %s336
      %p338 = scmp.eq.s32.totalorder %s34, 0
      %p339 = por %p337, %p338
      %s340 = ssub.s32 %s28, %s35
      %p341 = scmp.eq.s32.totalorder %s340, 0
      %s343 = sadd.s32 %s342, 1
      %s344 = scalar_select %p341, %s342, %s343
      %p347 = pneg %p341
      %p348 = scmp.eq.s32.totalorder %s28, 1
      %p349 = por %p347, %p348
      %p350 = scmp.ne.s32.totalorder %s342, %s345
      %p351 = scmp.eq.s32.totalorder %s28, 0
      %p352 = por %p350, %p351
      %p353 = scmp.ne.s32.totalorder %s342, %s345
      %p354 = scmp.eq.s32.totalorder %s33, 1
      %p355 = por %p353, %p354
      %p356 = scmp.ne.s32.totalorder %s345, %s346
      %p357 = scmp.eq.s32.totalorder %s33, 0
      %p358 = por %p356, %p357
      %p359 = scmp.ne.s32.totalorder %s345, %s346
      %p360 = scmp.eq.s32.totalorder %s34, 1
      %p361 = por %p359, %p360
      %p363 = scmp.ne.s32.totalorder %s346, %s362
      %p364 = scmp.eq.s32.totalorder %s34, 0
      %p365 = por %p363, %p364
      %s366 = ssub.s32 %s28, %s35
      %p367 = scmp.eq.s32.totalorder %s366, 0
      %s369 = sadd.s32 %s368, 1
      %s370 = scalar_select %p367, %s368, %s369
      %p373 = pneg %p367
      %p374 = scmp.eq.s32.totalorder %s28, 1
      %p375 = por %p373, %p374
      %p376 = scmp.ne.s32.totalorder %s368, %s371
      %p377 = scmp.eq.s32.totalorder %s28, 0
      %p378 = por %p376, %p377
      %p379 = scmp.ne.s32.totalorder %s368, %s371
      %p380 = scmp.eq.s32.totalorder %s33, 1
      %p381 = por %p379, %p380
      %p382 = scmp.ne.s32.totalorder %s371, %s372
      %p383 = scmp.eq.s32.totalorder %s33, 0
      %p384 = por %p382, %p383
      %p385 = scmp.ne.s32.totalorder %s371, %s372
      %p386 = scmp.eq.s32.totalorder %s34, 1
      %p387 = por %p385, %p386
      %p389 = scmp.ne.s32.totalorder %s372, %s388
      %p390 = scmp.eq.s32.totalorder %s34, 0
      %p391 = por %p389, %p390
      %p392 = scmp.le.s32.totalorder 1, %s28
      %p393 = scmp.lt.s32.totalorder %s28, 3
      %p394 = pnand %p392, %p393
      %p395 = pneg %p394
      // Predicated region
      $region9: #{tpu_custom_call.1} parent=5 // pred_check
        _
      $region10: #{tpu_custom_call.1} parent=5 // pred_check_branch
        %397 = sbr.rel (%p394) target = $region12
      $region11: #{tpu_custom_call.1} parent=5 // pred_region
        %s398 = ssub.s32 %s28, 1
        // Predicated region
        $region13: #{tpu_custom_call.1} parent=11 // pred_check
          %p399 = pneg %p101
        $region14: #{tpu_custom_call.1} parent=11 // pred_check_branch
          %401 = sbr.rel (%p399) target = $region16
        $region15: #{tpu_custom_call.1} parent=11 // pred_region
          _
        $region16: #{tpu_custom_call.1} parent=11 // pred_fallthru
          _
        // Predicated region
        $region17: #{tpu_custom_call.1} parent=11 // pred_check
          %p402 = pneg %p122
        $region18: #{tpu_custom_call.1} parent=11 // pred_check_branch
          %404 = sbr.rel (%p402) target = $region20
        $region19: #{tpu_custom_call.1} parent=11 // pred_region
          _
        $region20: #{tpu_custom_call.1} parent=11 // pred_fallthru
          _
        // Predicated region
        $region21: #{tpu_custom_call.1} parent=11 // pred_check
          %p405 = pneg %p143
        $region22: #{tpu_custom_call.1} parent=11 // pred_check_branch
          %407 = sbr.rel (%p405) target = $region24
        $region23: #{tpu_custom_call.1} parent=11 // pred_region
          _
        $region24: #{tpu_custom_call.1} parent=11 // pred_fallthru
          _
        // Predicated region
        $region25: #{tpu_custom_call.1} parent=11 // pred_check
          %p408 = pneg %p164
        $region26: #{tpu_custom_call.1} parent=11 // pred_check_branch
          %410 = sbr.rel (%p408) target = $region28
        $region27: #{tpu_custom_call.1} parent=11 // pred_region
          _
        $region28: #{tpu_custom_call.1} parent=11 // pred_fallthru
          _
        // Predicated region
        $region29: #{tpu_custom_call.1} parent=11 // pred_check
          %p411 = pneg %p185
        $region30: #{tpu_custom_call.1} parent=11 // pred_check_branch
          %413 = sbr.rel (%p411) target = $region32
        $region31: #{tpu_custom_call.1} parent=11 // pred_region
          _
        $region32: #{tpu_custom_call.1} parent=11 // pred_fallthru
          _
        // Predicated region
        $region33: #{tpu_custom_call.1} parent=11 // pred_check
          %p414 = pneg %p206
        $region34: #{tpu_custom_call.1} parent=11 // pred_check_branch
          %416 = sbr.rel (%p414) target = $region36
        $region35: #{tpu_custom_call.1} parent=11 // pred_region
          _
        $region36: #{tpu_custom_call.1} parent=11 // pred_fallthru
          _
        // Predicated region
        $region37: #{tpu_custom_call.1} parent=11 // pred_check
          %p417 = pneg %p227
        $region38: #{tpu_custom_call.1} parent=11 // pred_check_branch
          %419 = sbr.rel (%p417) target = $region40
        $region39: #{tpu_custom_call.1} parent=11 // pred_region
          _
        $region40: #{tpu_custom_call.1} parent=11 // pred_fallthru
          _
        // Predicated region
        $region41: #{tpu_custom_call.1} parent=11 // pred_check
          %p420 = pneg %p248
        $region42: #{tpu_custom_call.1} parent=11 // pred_check_branch
          %422 = sbr.rel (%p420) target = $region44
        $region43: #{tpu_custom_call.1} parent=11 // pred_region
          _
        $region44: #{tpu_custom_call.1} parent=11 // pred_fallthru
          _
        // Predicated region
        $region45: #{tpu_custom_call.1} parent=11 // pred_check
          %p423 = pneg %p269
        $region46: #{tpu_custom_call.1} parent=11 // pred_check_branch
          %425 = sbr.rel (%p423) target = $region48
        $region47: #{tpu_custom_call.1} parent=11 // pred_region
          _
        $region48: #{tpu_custom_call.1} parent=11 // pred_fallthru
          _
        // Predicated region
        $region49: #{tpu_custom_call.1} parent=11 // pred_check
          %p426 = pneg %p290
        $region50: #{tpu_custom_call.1} parent=11 // pred_check_branch
          %428 = sbr.rel (%p426) target = $region52
        $region51: #{tpu_custom_call.1} parent=11 // pred_region
          _
        $region52: #{tpu_custom_call.1} parent=11 // pred_fallthru
          _
        // Predicated region
        $region53: #{tpu_custom_call.1} parent=11 // pred_check
          %p429 = pneg %p311
        $region54: #{tpu_custom_call.1} parent=11 // pred_check_branch
          %431 = sbr.rel (%p429) target = $region56
        $region55: #{tpu_custom_call.1} parent=11 // pred_region
          _
        $region56: #{tpu_custom_call.1} parent=11 // pred_fallthru
          _
        // Predicated region
        $region57: #{tpu_custom_call.1} parent=11 // pred_check
          %p432 = pneg %p332
        $region58: #{tpu_custom_call.1} parent=11 // pred_check_branch
          %434 = sbr.rel (%p432) target = $region60
        $region59: #{tpu_custom_call.1} parent=11 // pred_region
          _
        $region60: #{tpu_custom_call.1} parent=11 // pred_fallthru
          _
      $region12: #{tpu_custom_call.1} parent=5 // pred_fallthru
        _
      %p435 = scmp.lt.s32.totalorder %s28, 2
      // Predicated region
      $region61: #{tpu_custom_call.1} parent=5 // pred_check
        %p436 = pneg %p435
      $region62: #{tpu_custom_call.1} parent=5 // pred_check_branch
        %438 = sbr.rel (%p436) target = $region64
      $region63: #{tpu_custom_call.1} parent=5 // pred_region
        // Predicated region
        $region65: #{tpu_custom_call.1} parent=63 // pred_check
          %p439 = pneg %p48
        $region66: #{tpu_custom_call.1} parent=63 // pred_check_branch
          %441 = sbr.rel (%p439) target = $region68
        $region67: #{tpu_custom_call.1} parent=63 // pred_region
          %p442 = scmp.lt.s32.totalorder %s28, 1
          %s443 = scalar_select %p442, %s28, 1
          %s444 = smul.addr %s443, 4
          %s445 = smul.addr %s444, 8
          %s446 = scalar_lea.vmem %s0, %s445
        $region68: #{tpu_custom_call.1} parent=63 // pred_fallthru
          _
        // Predicated region
        $region69: #{tpu_custom_call.1} parent=63 // pred_check
          %p447 = pneg %p74
        $region70: #{tpu_custom_call.1} parent=63 // pred_check_branch
          %449 = sbr.rel (%p447) target = $region72
        $region71: #{tpu_custom_call.1} parent=63 // pred_region
          %p450 = scmp.lt.s32.totalorder %s28, 1
          %s451 = scalar_select %p450, %s28, 1
          %s452 = smul.addr %s451, 4
          %s453 = smul.addr %s452, 8
          %s454 = scalar_lea.vmem %s1, %s453
        $region72: #{tpu_custom_call.1} parent=63 // pred_fallthru
          _
      $region64: #{tpu_custom_call.1} parent=5 // pred_fallthru
        _
      %p455 = scmp.le.s32.totalorder 1, %s28
      %p456 = scmp.lt.s32.totalorder %s28, 3
      %p457 = pnand %p455, %p456
      %p458 = pneg %p457
      // Predicated region
      $region73: #{tpu_custom_call.1} parent=5 // pred_check
        _
      $region74: #{tpu_custom_call.1} parent=5 // pred_check_branch
        %460 = sbr.rel (%p457) target = $region76
      $region75: #{tpu_custom_call.1} parent=5 // pred_region
        %s461 = ssub.s32 %s28, 1
        %p462 = scmp.lt.s32.totalorder %s33, 1
        %s463 = scalar_select %p462, %s33, 1
        %s464 = smul.addr %s463, 4
        %s465 = smul.addr %s464, 8
        %s466 = scalar_lea.vmem %s0, %s465
        %p467 = pneg %p54
        %p468 = pneg %p51
        %p469 = scmp.lt.s32.totalorder %s33, 1
        %s470 = scalar_select %p469, %s33, 1
        %s471 = smul.addr %s470, 4
        %s472 = smul.addr %s471, 8
        %s473 = scalar_lea.vmem %s1, %s472
        %p474 = pneg %p80
        %p475 = pneg %p77
        %p476 = pneg %p101
        %p477 = pneg %p98
        %p478 = pneg %p122
        %p479 = pneg %p119
        %p480 = pneg %p143
        %p481 = pneg %p140
        %p482 = pneg %p164
        %p483 = pneg %p161
        %p484 = pneg %p185
        %p485 = pneg %p182
        %p486 = pneg %p206
        %p487 = pneg %p203
        %p488 = pneg %p227
        %p489 = pneg %p224
        %p490 = pneg %p248
        %p491 = pneg %p245
        %p492 = pneg %p269
        %p493 = pneg %p266
        %p494 = pneg %p290
        %p495 = pneg %p287
        %p496 = pneg %p311
        %p497 = pneg %p308
        %p498 = pneg %p332
        %p499 = pneg %p329
        %p500 = pneg %p358
        %p501 = pneg %p355
        %s502 = sand.u32 %s345, 1
        %s503 = scalar_lea.sflag [#allocation5], %s502
        %s504 = sand.u32 %s345, 1
        %s505 = smul.addr %s504, 32
        %s506 = scalar_lea.vmem [#allocation4], %s505
        %p507 = pneg %p384
        %p508 = pneg %p381
        %s509 = sand.u32 %s371, 1
        %s510 = scalar_lea.sflag [#allocation7], %s509
        %s511 = sand.u32 %s371, 1
        %s512 = smul.addr %s511, 32
        %s513 = scalar_lea.vmem [#allocation6], %s512
        %p514 = scmp.lt.s32.totalorder %s33, 1
        %s515 = scalar_select %p514, %s33, 1
        %s516 = smul.addr %s515, 4
        %s517 = smul.addr %s516, 8
        %s518 = scalar_lea.vmem %s0, %s517
        %p519 = scmp.lt.s32.totalorder %s33, 1
        %s520 = scalar_select %p519, %s33, 1
        %s521 = smul.addr %s520, 4
        %s522 = smul.addr %s521, 8
        %s523 = scalar_lea.vmem %s1, %s522
        %v525 = vld [vmem:[%s518] sm:$0xff]
        %v526 = vld [vmem:[%s518 + $0x8] sm:$0xff]
        %v527 = vld [vmem:[%s518 + $0x10] sm:$0xff]
        %v528 = vld [vmem:[%s518 + $0x18] sm:$0xff]
        %v529 = vld [vmem:[%s523] sm:$0xff]
        %v530 = vld [vmem:[%s523 + $0x8] sm:$0xff]
        %v531 = vld [vmem:[%s523 + $0x10] sm:$0xff]
        %v532 = vld [vmem:[%s523 + $0x18] sm:$0xff]
        %v533 = vld [vmem:[%s2] sm:$0xff]
        %v534 = vld [vmem:[%s2 + $0x8] sm:$0xff]
        %v535 = vld [vmem:[%s2 + $0x10] sm:$0xff]
        %v536 = vld [vmem:[%s2 + $0x18] sm:$0xff]
        %v537 = vld [vmem:[%s3] sm:$0xff]
        %v538 = vld [vmem:[%s3 + $0x8] sm:$0xff]
        %v539 = vld [vmem:[%s3 + $0x10] sm:$0xff]
        %v540 = vld [vmem:[%s3 + $0x18] sm:$0xff]
        %vm541 = vcmask 130048
        %v542 = vsel %vm541, %v525, 0.0
        %v543 = vsel %vm541, %v526, 0.0
        %v544 = vadd.f32 %v542, %v543
        %v545 = vsel %vm541, %v527, 0.0
        %v546 = vadd.f32 %v544, %v545
        %v547 = vsel %vm541, %v528, 0.0
        %v548 = vadd.f32 %v546, %v547
        %549 = vadd.xlane.f32.xlu0 %v548
        %v550 = vpop.xlane.xlu0 %549
        %v551 = vrot.slane %v550, 4
        %v552 = vadd.f32 %v550, %v551
        %v553 = vrot.slane %v552, 2
        %v554 = vadd.f32 %v552, %v553
        %v555 = vrot.slane %v554, 1
        %v556 = vadd.f32 %v554, %v555
        %s557 = vtos %v556
        %v558 = vrcp.pop 512.0
        %s559 = vtos %v558
        %s560 = smul.f32 %s557, %s559
        %v561 = vmul.f32 %v525, %v525
        %v562 = vmul.f32 %v526, %v526
        %v563 = vmul.f32 %v527, %v527
        %v564 = vmul.f32 %v528, %v528
        %v565 = vsel %vm541, %v561, 0.0
        %v566 = vsel %vm541, %v562, 0.0
        %v567 = vadd.f32 %v565, %v566
        %v568 = vsel %vm541, %v563, 0.0
        %v569 = vadd.f32 %v567, %v568
        %v570 = vsel %vm541, %v564, 0.0
        %v571 = vadd.f32 %v569, %v570
        %572 = vadd.xlane.f32.xlu0 %v571
        %v573 = vpop.xlane.xlu0 %572
        %v574 = vrot.slane %v573, 4
        %v575 = vadd.f32 %v573, %v574
        %v576 = vrot.slane %v575, 2
        %v577 = vadd.f32 %v575, %v576
        %v578 = vrot.slane %v577, 1
        %v579 = vadd.f32 %v577, %v578
        %s580 = vtos %v579
        %v581 = vrcp.pop 512.0
        %s582 = vtos %v581
        %s583 = smul.f32 %s580, %s582
        %s584 = smul.f32 %s560, %s560
        %s585 = ssub.f32 %s583, %s584
        %s586 = sadd.f32 %s585, 1e-05
        %v587 = vstv %s586
        %v588 = vrsqrt.pop %v587
        %s589 = vtos %v588
        %v590 = vstv %s560
        %v591 = vsub.f32 %v525, %v590
        %v592 = vsub.f32 %v526, %v590
        %v593 = vsub.f32 %v527, %v590
        %v594 = vsub.f32 %v528, %v590
        %v595 = vstv %s589
        %v596 = vmul.f32 %v591, %v595
        %v597 = vmul.f32 %v592, %v595
        %v598 = vmul.f32 %v593, %v595
        %v599 = vmul.f32 %v594, %v595
        %604 = vrot.lane.b32.xlu0 %v525, 112
        %v605 = vpop.permute.xlu0 %604
        %606 = vrot.lane.b32.xlu0 %v526, 112
        %v607 = vpop.permute.xlu0 %606
        %608 = vrot.lane.b32.xlu0 %v527, 112
        %v609 = vpop.permute.xlu0 %608
        %610 = vrot.lane.b32.xlu0 %v528, 112
        %v611 = vpop.permute.xlu0 %610
        %v616 = vsel %vm541, %v605, 0.0
        %v617 = vsel %vm541, %v607, 0.0
        %v618 = vadd.f32 %v616, %v617
        %v619 = vsel %vm541, %v609, 0.0
        %v620 = vadd.f32 %v618, %v619
        %v621 = vsel %vm541, %v611, 0.0
        %v622 = vadd.f32 %v620, %v621
        %623 = vadd.xlane.f32.xlu0 %v622
        %v624 = vpop.xlane.xlu0 %623
        %v625 = vrot.slane %v624, 4
        %v626 = vadd.f32 %v624, %v625
        %v627 = vrot.slane %v626, 2
        %v628 = vadd.f32 %v626, %v627
        %v629 = vrot.slane %v628, 1
        %v630 = vadd.f32 %v628, %v629
        %s631 = vtos %v630
        %v632 = vrcp.pop 512.0
        %s633 = vtos %v632
        %s634 = smul.f32 %s631, %s633
        %639 = vrot.lane.b32.xlu0 %v561, 112
        %v640 = vpop.permute.xlu0 %639
        %641 = vrot.lane.b32.xlu0 %v562, 112
        %v642 = vpop.permute.xlu0 %641
        %643 = vrot.lane.b32.xlu0 %v563, 112
        %v644 = vpop.permute.xlu0 %643
        %645 = vrot.lane.b32.xlu0 %v564, 112
        %v646 = vpop.permute.xlu0 %645
        %v651 = vsel %vm541, %v640, 0.0
        %v652 = vsel %vm541, %v642, 0.0
        %v653 = vadd.f32 %v651, %v652
        %v654 = vsel %vm541, %v644, 0.0
        %v655 = vadd.f32 %v653, %v654
        %v656 = vsel %vm541, %v646, 0.0
        %v657 = vadd.f32 %v655, %v656
        %658 = vadd.xlane.f32.xlu0 %v657
        %v659 = vpop.xlane.xlu0 %658
        %v660 = vrot.slane %v659, 4
        %v661 = vadd.f32 %v659, %v660
        %v662 = vrot.slane %v661, 2
        %v663 = vadd.f32 %v661, %v662
        %v664 = vrot.slane %v663, 1
        %v665 = vadd.f32 %v663, %v664
        %s666 = vtos %v665
        %v667 = vrcp.pop 512.0
        %s668 = vtos %v667
        %s669 = smul.f32 %s666, %s668
        %s670 = smul.f32 %s634, %s634
        %s671 = ssub.f32 %s669, %s670
        %s672 = sadd.f32 %s671, 1e-05
        %v673 = vstv %s672
        %v674 = vrsqrt.pop %v673
        %s675 = vtos %v674
        %v676 = vstv %s634
        %v677 = vsub.f32 %v525, %v676
        %v678 = vsub.f32 %v526, %v676
        %v679 = vsub.f32 %v527, %v676
        %v680 = vsub.f32 %v528, %v676
        %v681 = vstv %s675
        %v682 = vmul.f32 %v677, %v681
        %v683 = vmul.f32 %v678, %v681
        %v684 = vmul.f32 %v679, %v681
        %v685 = vmul.f32 %v680, %v681
        %v686 = vsel %vm541, %v596, %v682
        %v687 = vsel %vm541, %v597, %v683
        %v688 = vsel %vm541, %v598, %v684
        %v689 = vsel %vm541, %v599, %v685
        %691 = vset.pattern.permute.xlu0 0
        %692 = vperm.xlu0 %691, %v533
        %v693 = vpop.permute.xlu0 %692
        %696 = vset.pattern.permute.xlu0 0
        %697 = vperm.xlu0 %696, %v534
        %v698 = vpop.permute.xlu0 %697
        %701 = vset.pattern.permute.xlu0 0
        %702 = vperm.xlu0 %701, %v535
        %v703 = vpop.permute.xlu0 %702
        %706 = vset.pattern.permute.xlu0 0
        %707 = vperm.xlu0 %706, %v536
        %v708 = vpop.permute.xlu0 %707
        %v710 = vmul.f32 %v686, %v693
        %v711 = vmul.f32 %v687, %v698
        %v712 = vmul.f32 %v688, %v703
        %v713 = vmul.f32 %v689, %v708
        %715 = vset.pattern.permute.xlu0 0
        %716 = vperm.xlu0 %715, %v537
        %v717 = vpop.permute.xlu0 %716
        %720 = vset.pattern.permute.xlu0 0
        %721 = vperm.xlu0 %720, %v538
        %v722 = vpop.permute.xlu0 %721
        %725 = vset.pattern.permute.xlu0 0
        %726 = vperm.xlu0 %725, %v539
        %v727 = vpop.permute.xlu0 %726
        %730 = vset.pattern.permute.xlu0 0
        %731 = vperm.xlu0 %730, %v540
        %v732 = vpop.permute.xlu0 %731
        %v734 = vadd.f32 %v710, %v717
        %v735 = vadd.f32 %v711, %v722
        %v736 = vadd.f32 %v712, %v727
        %v737 = vadd.f32 %v713, %v732
        %v738 = vpack.c.bf16 %v735, %v734
        %v739 = vpack.c.bf16 %v737, %v736
        %v740 = vld [vmem:[%s4] sm:$0xff]
        %v741 = vld [vmem:[%s4 + $0x8] sm:$0xff]
        %v742 = vld [vmem:[%s4 + $0x10] sm:$0xff]
        %v743 = vld [vmem:[%s4 + $0x18] sm:$0xff]
        %v744 = vld [vmem:[%s5] sm:$0xff]
        %v745 = vld [vmem:[%s5 + $0x8] sm:$0xff]
        %v746 = vld [vmem:[%s5 + $0x10] sm:$0xff]
        %v747 = vld [vmem:[%s5 + $0x18] sm:$0xff]
        %v748 = vsel %vm541, %v529, 0.0
        %v749 = vsel %vm541, %v530, 0.0
        %v750 = vadd.f32 %v748, %v749
        %v751 = vsel %vm541, %v531, 0.0
        %v752 = vadd.f32 %v750, %v751
        %v753 = vsel %vm541, %v532, 0.0
        %v754 = vadd.f32 %v752, %v753
        %755 = vadd.xlane.f32.xlu0 %v754
        %v756 = vpop.xlane.xlu0 %755
        %v757 = vrot.slane %v756, 4
        %v758 = vadd.f32 %v756, %v757
        %v759 = vrot.slane %v758, 2
        %v760 = vadd.f32 %v758, %v759
        %v761 = vrot.slane %v760, 1
        %v762 = vadd.f32 %v760, %v761
        %s763 = vtos %v762
        %v764 = vrcp.pop 512.0
        %s765 = vtos %v764
        %s766 = smul.f32 %s763, %s765
        %v767 = vmul.f32 %v529, %v529
        %v768 = vmul.f32 %v530, %v530
        %v769 = vmul.f32 %v531, %v531
        %v770 = vmul.f32 %v532, %v532
        %v771 = vsel %vm541, %v767, 0.0
        %v772 = vsel %vm541, %v768, 0.0
        %v773 = vadd.f32 %v771, %v772
        %v774 = vsel %vm541, %v769, 0.0
        %v775 = vadd.f32 %v773, %v774
        %v776 = vsel %vm541, %v770, 0.0
        %v777 = vadd.f32 %v775, %v776
        %778 = vadd.xlane.f32.xlu0 %v777
        %v779 = vpop.xlane.xlu0 %778
        %v780 = vrot.slane %v779, 4
        %v781 = vadd.f32 %v779, %v780
        %v782 = vrot.slane %v781, 2
        %v783 = vadd.f32 %v781, %v782
        %v784 = vrot.slane %v783, 1
        %v785 = vadd.f32 %v783, %v784
        %s786 = vtos %v785
        %v787 = vrcp.pop 512.0
        %s788 = vtos %v787
        %s789 = smul.f32 %s786, %s788
        %s790 = smul.f32 %s766, %s766
        %s791 = ssub.f32 %s789, %s790
        %s792 = sadd.f32 %s791, 1e-05
        %v793 = vstv %s792
        %v794 = vrsqrt.pop %v793
        %s795 = vtos %v794
        %v796 = vstv %s766
        %v797 = vsub.f32 %v529, %v796
        %v798 = vsub.f32 %v530, %v796
        %v799 = vsub.f32 %v531, %v796
        %v800 = vsub.f32 %v532, %v796
        %v801 = vstv %s795
        %v802 = vmul.f32 %v797, %v801
        %v803 = vmul.f32 %v798, %v801
        %v804 = vmul.f32 %v799, %v801
        %v805 = vmul.f32 %v800, %v801
        %810 = vrot.lane.b32.xlu0 %v529, 112
        %v811 = vpop.permute.xlu0 %810
        %812 = vrot.lane.b32.xlu0 %v530, 112
        %v813 = vpop.permute.xlu0 %812
        %814 = vrot.lane.b32.xlu0 %v531, 112
        %v815 = vpop.permute.xlu0 %814
        %816 = vrot.lane.b32.xlu0 %v532, 112
        %v817 = vpop.permute.xlu0 %816
        %v822 = vsel %vm541, %v811, 0.0
        %v823 = vsel %vm541, %v813, 0.0
        %v824 = vadd.f32 %v822, %v823
        %v825 = vsel %vm541, %v815, 0.0
        %v826 = vadd.f32 %v824, %v825
        %v827 = vsel %vm541, %v817, 0.0
        %v828 = vadd.f32 %v826, %v827
        %829 = vadd.xlane.f32.xlu0 %v828
        %v830 = vpop.xlane.xlu0 %829
        %v831 = vrot.slane %v830, 4
        %v832 = vadd.f32 %v830, %v831
        %v833 = vrot.slane %v832, 2
        %v834 = vadd.f32 %v832, %v833
        %v835 = vrot.slane %v834, 1
        %v836 = vadd.f32 %v834, %v835
        %s837 = vtos %v836
        %v838 = vrcp.pop 512.0
        %s839 = vtos %v838
        %s840 = smul.f32 %s837, %s839
        %845 = vrot.lane.b32.xlu0 %v767, 112
        %v846 = vpop.permute.xlu0 %845
        %847 = vrot.lane.b32.xlu0 %v768, 112
        %v848 = vpop.permute.xlu0 %847
        %849 = vrot.lane.b32.xlu0 %v769, 112
        %v850 = vpop.permute.xlu0 %849
        %851 = vrot.lane.b32.xlu0 %v770, 112
        %v852 = vpop.permute.xlu0 %851
        %v857 = vsel %vm541, %v846, 0.0
        %v858 = vsel %vm541, %v848, 0.0
        %v859 = vadd.f32 %v857, %v858
        %v860 = vsel %vm541, %v850, 0.0
        %v861 = vadd.f32 %v859, %v860
        %v862 = vsel %vm541, %v852, 0.0
        %v863 = vadd.f32 %v861, %v862
        %864 = vadd.xlane.f32.xlu0 %v863
        %v865 = vpop.xlane.xlu0 %864
        %v866 = vrot.slane %v865, 4
        %v867 = vadd.f32 %v865, %v866
        %v868 = vrot.slane %v867, 2
        %v869 = vadd.f32 %v867, %v868
        %v870 = vrot.slane %v869, 1
        %v871 = vadd.f32 %v869, %v870
        %s872 = vtos %v871
        %v873 = vrcp.pop 512.0
        %s874 = vtos %v873
        %s875 = smul.f32 %s872, %s874
        %s876 = smul.f32 %s840, %s840
        %s877 = ssub.f32 %s875, %s876
        %s878 = sadd.f32 %s877, 1e-05
        %v879 = vstv %s878
        %v880 = vrsqrt.pop %v879
        %s881 = vtos %v880
        %v882 = vstv %s840
        %v883 = vsub.f32 %v529, %v882
        %v884 = vsub.f32 %v530, %v882
        %v885 = vsub.f32 %v531, %v882
        %v886 = vsub.f32 %v532, %v882
        %v887 = vstv %s881
        %v888 = vmul.f32 %v883, %v887
        %v889 = vmul.f32 %v884, %v887
        %v890 = vmul.f32 %v885, %v887
        %v891 = vmul.f32 %v886, %v887
        %v892 = vsel %vm541, %v802, %v888
        %v893 = vsel %vm541, %v803, %v889
        %v894 = vsel %vm541, %v804, %v890
        %v895 = vsel %vm541, %v805, %v891
        %897 = vset.pattern.permute.xlu0 0
        %898 = vperm.xlu0 %897, %v740
        %v899 = vpop.permute.xlu0 %898
        %902 = vset.pattern.permute.xlu0 0
        %903 = vperm.xlu0 %902, %v741
        %v904 = vpop.permute.xlu0 %903
        %907 = vset.pattern.permute.xlu0 0
        %908 = vperm.xlu0 %907, %v742
        %v909 = vpop.permute.xlu0 %908
        %912 = vset.pattern.permute.xlu0 0
        %913 = vperm.xlu0 %912, %v743
        %v914 = vpop.permute.xlu0 %913
        %v916 = vmul.f32 %v892, %v899
        %v917 = vmul.f32 %v893, %v904
        %v918 = vmul.f32 %v894, %v909
        %v919 = vmul.f32 %v895, %v914
        %921 = vset.pattern.permute.xlu0 0
        %922 = vperm.xlu0 %921, %v744
        %v923 = vpop.permute.xlu0 %922
        %926 = vset.pattern.permute.xlu0 0
        %927 = vperm.xlu0 %926, %v745
        %v928 = vpop.permute.xlu0 %927
        %931 = vset.pattern.permute.xlu0 0
        %932 = vperm.xlu0 %931, %v746
        %v933 = vpop.permute.xlu0 %932
        %936 = vset.pattern.permute.xlu0 0
        %937 = vperm.xlu0 %936, %v747
        %v938 = vpop.permute.xlu0 %937
        %v940 = vadd.f32 %v916, %v923
        %v941 = vadd.f32 %v917, %v928
        %v942 = vadd.f32 %v918, %v933
        %v943 = vadd.f32 %v919, %v938
        %v944 = vpack.c.bf16 %v941, %v940
        %v945 = vpack.c.bf16 %v943, %v942
        %v946 = vld [vmem:[%s6] sm:$0xf]
        %v947 = vld [vmem:[%s6 + $0x4] sm:$0xf]
        %v948 = vld [vmem:[%s6 + $0x8] sm:$0xf]
        %v949 = vld [vmem:[%s6 + $0xc] sm:$0xf]
        %v950 = vld [vmem:[%s6 + $0x10] sm:$0xf]
        %v951 = vld [vmem:[%s6 + $0x14] sm:$0xf]
        %v952 = vld [vmem:[%s6 + $0x18] sm:$0xf]
        %v953 = vld [vmem:[%s6 + $0x1c] sm:$0xf]
        %v954 = vld [vmem:[%s6 + $0x20] sm:$0xf]
        %v955 = vld [vmem:[%s6 + $0x24] sm:$0xf]
        %v956 = vld [vmem:[%s6 + $0x28] sm:$0xf]
        %v957 = vld [vmem:[%s6 + $0x2c] sm:$0xf]
        %v958 = vld [vmem:[%s7] sm:$0xff]
        %v959 = vld [vmem:[%s7 + $0x8] sm:$0xff]
        %v960 = vld [vmem:[%s7 + $0x10] sm:$0xff]
        %v961 = vld [vmem:[%s7 + $0x18] sm:$0xff]
        %v962 = vld [vmem:[%s7 + $0x20] sm:$0xff]
        %v963 = vld [vmem:[%s7 + $0x28] sm:$0xff]
        %v964 = vld [vmem:[%s7 + $0x30] sm:$0xff]
        %v965 = vld [vmem:[%s7 + $0x38] sm:$0xff]
        %v966 = vld [vmem:[%s7 + $0x40] sm:$0xff]
        %v967 = vld [vmem:[%s7 + $0x48] sm:$0xff]
        %v968 = vld [vmem:[%s7 + $0x50] sm:$0xff]
        %v969 = vld [vmem:[%s7 + $0x58] sm:$0xff]
        %971 = vset.pattern.permute.xlu0 0
        %972 = vperm.xlu0 %971, %v958
        %v973 = vpop.permute.xlu0 %972
        %976 = vset.pattern.permute.xlu0 0
        %977 = vperm.xlu0 %976, %v959
        %v978 = vpop.permute.xlu0 %977
        %981 = vset.pattern.permute.xlu0 0
        %982 = vperm.xlu0 %981, %v960
        %v983 = vpop.permute.xlu0 %982
        %986 = vset.pattern.permute.xlu0 0
        %987 = vperm.xlu0 %986, %v961
        %v988 = vpop.permute.xlu0 %987
        %991 = vset.pattern.permute.xlu0 0
        %992 = vperm.xlu0 %991, %v962
        %v993 = vpop.permute.xlu0 %992
        %996 = vset.pattern.permute.xlu0 0
        %997 = vperm.xlu0 %996, %v963
        %v998 = vpop.permute.xlu0 %997
        %1001 = vset.pattern.permute.xlu0 0
        %1002 = vperm.xlu0 %1001, %v964
        %v1003 = vpop.permute.xlu0 %1002
        %1006 = vset.pattern.permute.xlu0 0
        %1007 = vperm.xlu0 %1006, %v965
        %v1008 = vpop.permute.xlu0 %1007
        %1011 = vset.pattern.permute.xlu0 0
        %1012 = vperm.xlu0 %1011, %v966
        %v1013 = vpop.permute.xlu0 %1012
        %1016 = vset.pattern.permute.xlu0 0
        %1017 = vperm.xlu0 %1016, %v967
        %v1018 = vpop.permute.xlu0 %1017
        %1021 = vset.pattern.permute.xlu0 0
        %1022 = vperm.xlu0 %1021, %v968
        %v1023 = vpop.permute.xlu0 %1022
        %1026 = vset.pattern.permute.xlu0 0
        %1027 = vperm.xlu0 %1026, %v969
        %v1028 = vpop.permute.xlu0 %1027
        %v1042 = vunpack.c.l.b16 %v946
        %v1043 = vunpack.c.l.b16 %v947
        %v1044 = vunpack.c.l.b16 %v948
        %v1045 = vunpack.c.l.b16 %v949
        %v1046 = vunpack.c.l.b16 %v950
        %v1047 = vunpack.c.l.b16 %v951
        %v1048 = vunpack.c.l.b16 %v952
        %v1049 = vunpack.c.l.b16 %v953
        %v1050 = vunpack.c.l.b16 %v954
        %v1051 = vunpack.c.l.b16 %v955
        %v1052 = vunpack.c.l.b16 %v956
        %v1053 = vunpack.c.l.b16 %v957
        %v1054 = vpack.c.b16 %v1043, %v1042
        %v1055 = vpack.c.b16 %v1045, %v1044
        %v1056 = vpack.c.b16 %v1047, %v1046
        %v1057 = vpack.c.b16 %v1049, %v1048
        %v1058 = vpack.c.b16 %v1051, %v1050
        %v1059 = vpack.c.b16 %v1053, %v1052
        %vm1060 = vcmask 261120
        %v1062 = vsel %vm1060, %v1054, 0
        %v1065 = vsel %vm1060, %v1055, 0
        %v1068 = vsel %vm1060, %v1056, 0
        %v1071 = vsel %vm1060, %v1057, 0
        %v1074 = vsel %vm1060, %v1058, 0
        %v1077 = vsel %vm1060, %v1059, 0
        %1079 = vmatprep.subr.bf16.mxu0 0
        %1080 = vmatpush1.bf16.msra.mxu0 %v738
        %1081 = vmatprep.subr.bf16.mxu0 0
        %1082 = vmatpush1.bf16.msra.mxu0 %v739
        %1083 = vmatprep.subr.bf16.mxu0 0
        %1084 = vmatpush1.bf16.msra.mxu0 0
        %1085 = vmatprep.subr.bf16.mxu0 0
        %1086 = vmatpush1.bf16.msra.mxu0 0
        %1087 = vmatprep.subr.bf16.mxu0 0
        %1088 = vmatpush1.bf16.msra.mxu0 0
        %1089 = vmatprep.subr.bf16.mxu0 0
        %1090 = vmatpush1.bf16.msra.mxu0 0
        %1091 = vmatprep.subr.bf16.mxu0 0
        %1092 = vmatpush1.bf16.msra.mxu0 0
        %1093 = vmatprep.subr.bf16.mxu0 0
        %1094 = vmatpush1.bf16.msra.mxu0 0
        %1095 = vmatprep.subr.bf16.mxu0 0
        %1096 = vmatpush1.bf16.msra.mxu0 0
        %1097 = vmatprep.subr.bf16.mxu0 0
        %1098 = vmatpush1.bf16.msra.mxu0 0
        %1099 = vmatprep.subr.bf16.mxu0 0
        %1100 = vmatpush1.bf16.msra.mxu0 0
        %1101 = vmatprep.subr.bf16.mxu0 0
        %1102 = vmatpush1.bf16.msra.mxu0 0
        %1103 = vmatprep.subr.bf16.mxu0 0
        %1104 = vmatpush1.bf16.msra.mxu0 0
        %1105 = vmatprep.subr.bf16.mxu0 0
        %1106 = vmatpush1.bf16.msra.mxu0 0
        %1107 = vmatprep.subr.bf16.mxu0 0
        %1108 = vmatpush1.bf16.msra.mxu0 0
        %1109 = vmatprep.subr.bf16.mxu0 0
        %1110 = vmatpush1.bf16.msra.mxu0 0
        %1111 = vmatprep.mubr.bf16.mxu0 0
        %1112 = vmatmul.mubr.bf16.gmra.mrb[0].mxu0 %v1062
        %v1113 = vpop.f32.mrb[0].mxu0
        %v1114 = vadd.f32 %v973, %v1113
        %v1115 = vpop.f32.mrb[0].mxu0
        %v1116 = vpop.f32.mrb[0].mxu0
        %v1117 = vadd.f32 %v978, %v1116
        %v1118 = vpop.f32.mrb[0].mxu0
        %1119 = vmatprep.mubr.bf16.mxu0 0
        %1120 = vmatmul.mubr.bf16.gmra.mrb[0].mxu0 %v1065
        %v1121 = vpop.f32.mrb[0].mxu0
        %v1122 = vadd.f32 %v983, %v1121
        %v1123 = vpop.f32.mrb[0].mxu0
        %v1124 = vpop.f32.mrb[0].mxu0
        %v1125 = vadd.f32 %v988, %v1124
        %v1126 = vpop.f32.mrb[0].mxu0
        %1127 = vmatprep.mubr.bf16.mxu0 0
        %1128 = vmatmul.mubr.bf16.gmra.mrb[0].mxu0 %v1068
        %v1129 = vpop.f32.mrb[0].mxu0
        %v1130 = vadd.f32 %v993, %v1129
        %v1131 = vpop.f32.mrb[0].mxu0
        %v1132 = vpop.f32.mrb[0].mxu0
        %v1133 = vadd.f32 %v998, %v1132
        %v1134 = vpop.f32.mrb[0].mxu0
        %1135 = vmatprep.mubr.bf16.mxu0 0
        %1136 = vmatmul.mubr.bf16.gmra.mrb[0].mxu0 %v1071
        %v1137 = vpop.f32.mrb[0].mxu0
        %v1138 = vadd.f32 %v1003, %v1137
        %v1139 = vpop.f32.mrb[0].mxu0
        %v1140 = vpop.f32.mrb[0].mxu0
        %v1141 = vadd.f32 %v1008, %v1140
        %v1142 = vpop.f32.mrb[0].mxu0
        %1143 = vmatprep.mubr.bf16.mxu0 0
        %1144 = vmatmul.mubr.bf16.gmra.mrb[0].mxu0 %v1074
        %v1145 = vpop.f32.mrb[0].mxu0
        %v1146 = vadd.f32 %v1013, %v1145
        %v1147 = vpop.f32.mrb[0].mxu0
        %v1148 = vpop.f32.mrb[0].mxu0
        %v1149 = vadd.f32 %v1018, %v1148
        %v1150 = vpop.f32.mrb[0].mxu0
        %1151 = vmatprep.mubr.bf16.mxu0 0
        %1152 = vmatmul.mubr.bf16.gmra.mrb[0].mxu0 %v1077
        %v1153 = vpop.f32.mrb[0].mxu0
        %v1154 = vadd.f32 %v1023, %v1153
        %v1155 = vpop.f32.mrb[0].mxu0
        %v1156 = vpop.f32.mrb[0].mxu0
        %v1157 = vadd.f32 %v1028, %v1156
        %v1158 = vpop.f32.mrb[0].mxu0
        %1159 = vdwg.mxu0
        %v1160 = vld [vmem:[%s8] sm:$0xf]
        %v1161 = vld [vmem:[%s8 + $0x4] sm:$0xf]
        %v1162 = vld [vmem:[%s8 + $0x8] sm:$0xf]
        %v1163 = vld [vmem:[%s8 + $0xc] sm:$0xf]
        %v1164 = vld [vmem:[%s8 + $0x10] sm:$0xf]
        %v1165 = vld [vmem:[%s8 + $0x14] sm:$0xf]
        %v1166 = vld [vmem:[%s8 + $0x18] sm:$0xf]
        %v1167 = vld [vmem:[%s8 + $0x1c] sm:$0xf]
        %v1168 = vld [vmem:[%s8 + $0x20] sm:$0xf]
        %v1169 = vld [vmem:[%s8 + $0x24] sm:$0xf]
        %v1170 = vld [vmem:[%s8 + $0x28] sm:$0xf]
        %v1171 = vld [vmem:[%s8 + $0x2c] sm:$0xf]
        %v1172 = vld [vmem:[%s9] sm:$0xff]
        %v1173 = vld [vmem:[%s9 + $0x8] sm:$0xff]
        %v1174 = vld [vmem:[%s9 + $0x10] sm:$0xff]
        %v1175 = vld [vmem:[%s9 + $0x18] sm:$0xff]
        %v1176 = vld [vmem:[%s9 + $0x20] sm:$0xff]
        %v1177 = vld [vmem:[%s9 + $0x28] sm:$0xff]
        %v1178 = vld [vmem:[%s9 + $0x30] sm:$0xff]
        %v1179 = vld [vmem:[%s9 + $0x38] sm:$0xff]
        %v1180 = vld [vmem:[%s9 + $0x40] sm:$0xff]
        %v1181 = vld [vmem:[%s9 + $0x48] sm:$0xff]
        %v1182 = vld [vmem:[%s9 + $0x50] sm:$0xff]
        %v1183 = vld [vmem:[%s9 + $0x58] sm:$0xff]
        %1185 = vset.pattern.permute.xlu0 0
        %1186 = vperm.xlu0 %1185, %v1172
        %v1187 = vpop.permute.xlu0 %1186
        %1190 = vset.pattern.permute.xlu0 0
        %1191 = vperm.xlu0 %1190, %v1173
        %v1192 = vpop.permute.xlu0 %1191
        %1195 = vset.pattern.permute.xlu0 0
        %1196 = vperm.xlu0 %1195, %v1174
        %v1197 = vpop.permute.xlu0 %1196
        %1200 = vset.pattern.permute.xlu0 0
        %1201 = vperm.xlu0 %1200, %v1175
        %v1202 = vpop.permute.xlu0 %1201
        %1205 = vset.pattern.permute.xlu0 0
        %1206 = vperm.xlu0 %1205, %v1176
        %v1207 = vpop.permute.xlu0 %1206
        %1210 = vset.pattern.permute.xlu0 0
        %1211 = vperm.xlu0 %1210, %v1177
        %v1212 = vpop.permute.xlu0 %1211
        %1215 = vset.pattern.permute.xlu0 0
        %1216 = vperm.xlu0 %1215, %v1178
        %v1217 = vpop.permute.xlu0 %1216
        %1220 = vset.pattern.permute.xlu0 0
        %1221 = vperm.xlu0 %1220, %v1179
        %v1222 = vpop.permute.xlu0 %1221
        %1225 = vset.pattern.permute.xlu0 0
        %1226 = vperm.xlu0 %1225, %v1180
        %v1227 = vpop.permute.xlu0 %1226
        %1230 = vset.pattern.permute.xlu0 0
        %1231 = vperm.xlu0 %1230, %v1181
        %v1232 = vpop.permute.xlu0 %1231
        %1235 = vset.pattern.permute.xlu0 0
        %1236 = vperm.xlu0 %1235, %v1182
        %v1237 = vpop.permute.xlu0 %1236
        %1240 = vset.pattern.permute.xlu0 0
        %1241 = vperm.xlu0 %1240, %v1183
        %v1242 = vpop.permute.xlu0 %1241
        %v1256 = vunpack.c.l.b16 %v1160
        %v1257 = vunpack.c.l.b16 %v1161
        %v1258 = vunpack.c.l.b16 %v1162
        %v1259 = vunpack.c.l.b16 %v1163
        %v1260 = vunpack.c.l.b16 %v1164
        %v1261 = vunpack.c.l.b16 %v1165
        %v1262 = vunpack.c.l.b16 %v1166
        %v1263 = vunpack.c.l.b16 %v1167
        %v1264 = vunpack.c.l.b16 %v1168
        %v1265 = vunpack.c.l.b16 %v1169
        %v1266 = vunpack.c.l.b16 %v1170
        %v1267 = vunpack.c.l.b16 %v1171
        %v1268 = vpack.c.b16 %v1257, %v1256
        %v1269 = vpack.c.b16 %v1259, %v1258
        %v1270 = vpack.c.b16 %v1261, %v1260
        %v1271 = vpack.c.b16 %v1263, %v1262
        %v1272 = vpack.c.b16 %v1265, %v1264
        %v1273 = vpack.c.b16 %v1267, %v1266
        %v1275 = vsel %vm1060, %v1268, 0
        %v1278 = vsel %vm1060, %v1269, 0
        %v1281 = vsel %vm1060, %v1270, 0
        %v1284 = vsel %vm1060, %v1271, 0
        %v1287 = vsel %vm1060, %v1272, 0
        %v1290 = vsel %vm1060, %v1273, 0
        %1292 = vmatprep.subr.bf16.mxu0 0
        %1293 = vmatpush1.bf16.msra.mxu0 %v944
        %1294 = vmatprep.subr.bf16.mxu0 0
        %1295 = vmatpush1.bf16.msra.mxu0 %v945
        %1296 = vmatprep.subr.bf16.mxu0 0
        %1297 = vmatpush1.bf16.msra.mxu0 0
        %1298 = vmatprep.subr.bf16.mxu0 0
        %1299 = vmatpush1.bf16.msra.mxu0 0
        %1300 = vmatprep.subr.bf16.mxu0 0
        %1301 = vmatpush1.bf16.msra.mxu0 0
        %1302 = vmatprep.subr.bf16.mxu0 0
        %1303 = vmatpush1.bf16.msra.mxu0 0
        %1304 = vmatprep.subr.bf16.mxu0 0
        %1305 = vmatpush1.bf16.msra.mxu0 0
        %1306 = vmatprep.subr.bf16.mxu0 0
        %1307 = vmatpush1.bf16.msra.mxu0 0
        %1308 = vmatprep.subr.bf16.mxu0 0
        %1309 = vmatpush1.bf16.msra.mxu0 0
        %1310 = vmatprep.subr.bf16.mxu0 0
        %1311 = vmatpush1.bf16.msra.mxu0 0
        %1312 = vmatprep.subr.bf16.mxu0 0
        %1313 = vmatpush1.bf16.msra.mxu0 0
        %1314 = vmatprep.subr.bf16.mxu0 0
        %1315 = vmatpush1.bf16.msra.mxu0 0
        %1316 = vmatprep.subr.bf16.mxu0 0
        %1317 = vmatpush1.bf16.msra.mxu0 0
        %1318 = vmatprep.subr.bf16.mxu0 0
        %1319 = vmatpush1.bf16.msra.mxu0 0
        %1320 = vmatprep.subr.bf16.mxu0 0
        %1321 = vmatpush1.bf16.msra.mxu0 0
        %1322 = vmatprep.subr.bf16.mxu0 0
        %1323 = vmatpush1.bf16.msra.mxu0 0
        %1324 = vmatprep.mubr.bf16.mxu0 0
        %1325 = vmatmul.mubr.bf16.gmra.mrb[0].mxu0 %v1275
        %v1326 = vpop.f32.mrb[0].mxu0
        %v1327 = vadd.f32 %v1187, %v1326
        %v1328 = vpop.f32.mrb[0].mxu0
        %v1329 = vpop.f32.mrb[0].mxu0
        %v1330 = vadd.f32 %v1192, %v1329
        %v1331 = vpop.f32.mrb[0].mxu0
        %1332 = vmatprep.mubr.bf16.mxu0 0
        %1333 = vmatmul.mubr.bf16.gmra.mrb[0].mxu0 %v1278
        %v1334 = vpop.f32.mrb[0].mxu0
        %v1335 = vadd.f32 %v1197, %v1334
        %v1336 = vpop.f32.mrb[0].mxu0
        %v1337 = vpop.f32.mrb[0].mxu0
        %v1338 = vadd.f32 %v1202, %v1337
        %v1339 = vpop.f32.mrb[0].mxu0
        %1340 = vmatprep.mubr.bf16.mxu0 0
        %1341 = vmatmul.mubr.bf16.gmra.mrb[0].mxu0 %v1281
        %v1342 = vpop.f32.mrb[0].mxu0
        %v1343 = vadd.f32 %v1207, %v1342
        %v1344 = vpop.f32.mrb[0].mxu0
        %v1345 = vpop.f32.mrb[0].mxu0
        %v1346 = vadd.f32 %v1212, %v1345
        %v1347 = vpop.f32.mrb[0].mxu0
        %1348 = vmatprep.mubr.bf16.mxu0 0
        %1349 = vmatmul.mubr.bf16.gmra.mrb[0].mxu0 %v1284
        %v1350 = vpop.f32.mrb[0].mxu0
        %v1351 = vadd.f32 %v1217, %v1350
        %v1352 = vpop.f32.mrb[0].mxu0
        %v1353 = vpop.f32.mrb[0].mxu0
        %v1354 = vadd.f32 %v1222, %v1353
        %v1355 = vpop.f32.mrb[0].mxu0
        %1356 = vmatprep.mubr.bf16.mxu0 0
        %1357 = vmatmul.mubr.bf16.gmra.mrb[0].mxu0 %v1287
        %v1358 = vpop.f32.mrb[0].mxu0
        %v1359 = vadd.f32 %v1227, %v1358
        %v1360 = vpop.f32.mrb[0].mxu0
        %v1361 = vpop.f32.mrb[0].mxu0
        %v1362 = vadd.f32 %v1232, %v1361
        %v1363 = vpop.f32.mrb[0].mxu0
        %1364 = vmatprep.mubr.bf16.mxu0 0
        %1365 = vmatmul.mubr.bf16.gmra.mrb[0].mxu0 %v1290
        %v1366 = vpop.f32.mrb[0].mxu0
        %v1367 = vadd.f32 %v1237, %v1366
        %v1368 = vpop.f32.mrb[0].mxu0
        %v1369 = vpop.f32.mrb[0].mxu0
        %v1370 = vadd.f32 %v1242, %v1369
        %v1371 = vpop.f32.mrb[0].mxu0
        %1372 = vdwg.mxu0
        %v1373 = vmul.f32 %v1114, 0.25
        %v1374 = vmul.f32 %v1117, 0.25
        %v1375 = vmul.f32 %v1122, 0.25
        %v1376 = vmul.f32 %v1125, 0.25
        %v1377 = vpack.c.bf16 %v1374, %v1373
        %v1378 = vpack.c.bf16 %v1376, %v1375
        %v1379 = vpack.c.bf16 %v1346, %v1343
        %v1380 = vpack.c.bf16 %v1354, %v1351
        %v1381 = vpack.c.bf16 %v1362, %v1359
        %v1382 = vpack.c.bf16 %v1370, %v1367
        %1383 = vxpose.xlu0.c.b16.start [1/8] %v1377, 128
        %1384 = vxpose.xlu0.c.b16.cont [2/8] 0, 128
        %1385 = vxpose.xlu0.c.b16.cont [3/8] 0, 128
        %1386 = vxpose.xlu0.c.b16.cont [4/8] 0, 128
        %1387 = vxpose.xlu0.c.b16.cont [5/8] 0, 128
        %1388 = vxpose.xlu0.c.b16.cont [6/8] 0, 128
        %1389 = vxpose.xlu0.c.b16.cont [7/8] 0, 128
        %1390 = vxpose.xlu0.c.b16.end [8/8] 0, 128
        %v1391 = vpop.trf.xlu0
        %v1392 = vpop.trf.xlu0
        %v1393 = vpop.trf.xlu0
        %v1394 = vpop.trf.xlu0
        %v1395 = vpop.trf.xlu0
        %v1396 = vpop.trf.xlu0
        %v1397 = vpop.trf.xlu0
        %v1398 = vpop.trf.xlu0
        %v1400 = vsel %vm541, %v1391, 0
        %1402 = vmatprep.subr.bf16.mxu0 0
        %1403 = vmatpush1.bf16.msra.mxu0 %v1379
        %1404 = vmatprep.subr.bf16.mxu0 0
        %1405 = vmatpush1.bf16.msra.mxu0 0
        %1406 = vmatprep.subr.bf16.mxu0 0
        %1407 = vmatpush1.bf16.msra.mxu0 0
        %1408 = vmatprep.subr.bf16.mxu0 0
        %1409 = vmatpush1.bf16.msra.mxu0 0
        %1410 = vmatprep.subr.bf16.mxu0 0
        %1411 = vmatpush1.bf16.msra.mxu0 0
        %1412 = vmatprep.subr.bf16.mxu0 0
        %1413 = vmatpush1.bf16.msra.mxu0 0
        %1414 = vmatprep.subr.bf16.mxu0 0
        %1415 = vmatpush1.bf16.msra.mxu0 0
        %1416 = vmatprep.subr.bf16.mxu0 0
        %1417 = vmatpush1.bf16.msra.mxu0 0
        %1418 = vmatprep.subr.bf16.mxu0 0
        %1419 = vmatpush1.bf16.msra.mxu0 0
        %1420 = vmatprep.subr.bf16.mxu0 0
        %1421 = vmatpush1.bf16.msra.mxu0 0
        %1422 = vmatprep.subr.bf16.mxu0 0
        %1423 = vmatpush1.bf16.msra.mxu0 0
        %1424 = vmatprep.subr.bf16.mxu0 0
        %1425 = vmatpush1.bf16.msra.mxu0 0
        %1426 = vmatprep.subr.bf16.mxu0 0
        %1427 = vmatpush1.bf16.msra.mxu0 0
        %1428 = vmatprep.subr.bf16.mxu0 0
        %1429 = vmatpush1.bf16.msra.mxu0 0
        %1430 = vmatprep.subr.bf16.mxu0 0
        %1431 = vmatpush1.bf16.msra.mxu0 0
        %1432 = vmatprep.subr.bf16.mxu0 0
        %1433 = vmatpush1.bf16.msra.mxu0 0
        %1434 = vmatprep.mubr.bf16.mxu0 0
        %1435 = vmatmul.mubr.bf16.gmra.mrb[0].mxu0 %v1400
        %v1436 = vpop.f32.mrb[0].mxu0
        %v1437 = vadd.f32 0.0, %v1436
        %v1438 = vpop.f32.mrb[0].mxu0
        %v1439 = vpop.f32.mrb[0].mxu0
        %v1440 = vadd.f32 0.0, %v1439
        %v1441 = vpop.f32.mrb[0].mxu0
        %1442 = vdwg.mxu0
        %1443 = vxpose.xlu0.c.b16.start [1/8] %v1378, 128
        %1444 = vxpose.xlu0.c.b16.cont [2/8] 0, 128
        %1445 = vxpose.xlu0.c.b16.cont [3/8] 0, 128
        %1446 = vxpose.xlu0.c.b16.cont [4/8] 0, 128
        %1447 = vxpose.xlu0.c.b16.cont [5/8] 0, 128
        %1448 = vxpose.xlu0.c.b16.cont [6/8] 0, 128
        %1449 = vxpose.xlu0.c.b16.cont [7/8] 0, 128
        %1450 = vxpose.xlu0.c.b16.end [8/8] 0, 128
        %v1451 = vpop.trf.xlu0
        %v1452 = vpop.trf.xlu0
        %v1453 = vpop.trf.xlu0
        %v1454 = vpop.trf.xlu0
        %v1455 = vpop.trf.xlu0
        %v1456 = vpop.trf.xlu0
        %v1457 = vpop.trf.xlu0
        %v1458 = vpop.trf.xlu0
        %v1460 = vsel %vm541, %v1451, 0
        %1462 = vmatprep.subr.bf16.mxu0 0
        %1463 = vmatpush1.bf16.msra.mxu0 %v1380
        %1464 = vmatprep.subr.bf16.mxu0 0
        %1465 = vmatpush1.bf16.msra.mxu0 0
        %1466 = vmatprep.subr.bf16.mxu0 0
        %1467 = vmatpush1.bf16.msra.mxu0 0
        %1468 = vmatprep.subr.bf16.mxu0 0
        %1469 = vmatpush1.bf16.msra.mxu0 0
        %1470 = vmatprep.subr.bf16.mxu0 0
        %1471 = vmatpush1.bf16.msra.mxu0 0
        %1472 = vmatprep.subr.bf16.mxu0 0
        %1473 = vmatpush1.bf16.msra.mxu0 0
        %1474 = vmatprep.subr.bf16.mxu0 0
        %1475 = vmatpush1.bf16.msra.mxu0 0
        %1476 = vmatprep.subr.bf16.mxu0 0
        %1477 = vmatpush1.bf16.msra.mxu0 0
        %1478 = vmatprep.subr.bf16.mxu0 0
        %1479 = vmatpush1.bf16.msra.mxu0 0
        %1480 = vmatprep.subr.bf16.mxu0 0
        %1481 = vmatpush1.bf16.msra.mxu0 0
        %1482 = vmatprep.subr.bf16.mxu0 0
        %1483 = vmatpush1.bf16.msra.mxu0 0
        %1484 = vmatprep.subr.bf16.mxu0 0
        %1485 = vmatpush1.bf16.msra.mxu0 0
        %1486 = vmatprep.subr.bf16.mxu0 0
        %1487 = vmatpush1.bf16.msra.mxu0 0
        %1488 = vmatprep.subr.bf16.mxu0 0
        %1489 = vmatpush1.bf16.msra.mxu0 0
        %1490 = vmatprep.subr.bf16.mxu0 0
        %1491 = vmatpush1.bf16.msra.mxu0 0
        %1492 = vmatprep.subr.bf16.mxu0 0
        %1493 = vmatpush1.bf16.msra.mxu0 0
        %1494 = vmatprep.mubr.bf16.mxu0 0
        %1495 = vmatmul.mubr.bf16.gmra.mrb[0].mxu0 %v1460
        %v1496 = vpop.f32.mrb[0].mxu0
        %v1497 = vadd.f32 0.0, %v1496
        %v1498 = vpop.f32.mrb[0].mxu0
        %v1499 = vpop.f32.mrb[0].mxu0
        %v1500 = vadd.f32 0.0, %v1499
        %v1501 = vpop.f32.mrb[0].mxu0
        %1502 = vdwg.mxu0
        %v1503 = vsel %vm541, %v1437, -inf
        %1504 = vmax.xlane.f32.xlu0 %v1503
        %v1505 = vpop.xlane.xlu0 %1504
        %v1506 = vsel %vm541, %v1440, -inf
        %1507 = vmax.xlane.f32.xlu0 %v1506
        %v1508 = vpop.xlane.xlu0 %1507
        %v1509 = vsel %vm541, %v1497, -inf
        %1510 = vmax.xlane.f32.xlu0 %v1509
        %v1511 = vpop.xlane.xlu0 %1510
        %v1512 = vsel %vm541, %v1500, -inf
        %1513 = vmax.xlane.f32.xlu0 %v1512
        %v1514 = vpop.xlane.xlu0 %1513
        %v1515 = vsub.f32 %v1437, %v1505
        %v1516 = vsub.f32 %v1440, %v1508
        %v1517 = vsub.f32 %v1497, %v1511
        %v1518 = vsub.f32 %v1500, %v1514
        %v1519 = vmul.f32 %v1515, 1.442695
        %v1520 = vpow.pop %v1519
        %v1521 = vmul.f32 %v1516, 1.442695
        %v1522 = vpow.pop %v1521
        %v1523 = vmul.f32 %v1517, 1.442695
        %v1524 = vpow.pop %v1523
        %v1525 = vmul.f32 %v1518, 1.442695
        %v1526 = vpow.pop %v1525
        %v1527 = vsel %vm541, %v1520, 0.0
        %1528 = vadd.xlane.f32.xlu0 %v1527
        %v1529 = vpop.xlane.xlu0 %1528
        %v1530 = vsel %vm541, %v1522, 0.0
        %1531 = vadd.xlane.f32.xlu0 %v1530
        %v1532 = vpop.xlane.xlu0 %1531
        %v1533 = vsel %vm541, %v1524, 0.0
        %1534 = vadd.xlane.f32.xlu0 %v1533
        %v1535 = vpop.xlane.xlu0 %1534
        %v1536 = vsel %vm541, %v1526, 0.0
        %1537 = vadd.xlane.f32.xlu0 %v1536
        %v1538 = vpop.xlane.xlu0 %1537
        %v1539 = vrcp.pop %v1529
        %v1540 = vrcp.pop %v1532
        %v1541 = vrcp.pop %v1535
        %v1542 = vrcp.pop %v1538
        %v1543 = vmul.f32 %v1520, %v1539
        %v1544 = vmul.f32 %v1522, %v1540
        %v1545 = vmul.f32 %v1524, %v1541
        %v1546 = vmul.f32 %v1526, %v1542
        %v1547 = vpack.c.bf16 %v1544, %v1543
        %v1548 = vpack.c.bf16 %v1546, %v1545
        %v1550 = vsel %vm541, %v1381, 0
        %v1553 = vsel %vm541, %v1547, 0
        %1555 = vmatprep.subr.bf16.mxu0 0
        %1556 = vmatpush1.bf16.xpose.msra.mxu0 %v1553
        %1557 = vmatprep.subr.bf16.mxu0 0
        %1558 = vmatpush1.bf16.xpose.msra.mxu0 0
        %1559 = vmatprep.subr.bf16.mxu0 0
        %1560 = vmatpush1.bf16.xpose.msra.mxu0 0
        %1561 = vmatprep.subr.bf16.mxu0 0
        %1562 = vmatpush1.bf16.xpose.msra.mxu0 0
        %1563 = vmatprep.subr.bf16.mxu0 0
        %1564 = vmatpush1.bf16.xpose.msra.mxu0 0
        %1565 = vmatprep.subr.bf16.mxu0 0
        %1566 = vmatpush1.bf16.xpose.msra.mxu0 0
        %1567 = vmatprep.subr.bf16.mxu0 0
        %1568 = vmatpush1.bf16.xpose.msra.mxu0 0
        %1569 = vmatprep.subr.bf16.mxu0 0
        %1570 = vmatpush1.bf16.xpose.msra.mxu0 0
        %1571 = vmatprep.subr.bf16.mxu0 0
        %1572 = vmatpush1.bf16.xpose.msra.mxu0 0
        %1573 = vmatprep.subr.bf16.mxu0 0
        %1574 = vmatpush1.bf16.xpose.msra.mxu0 0
        %1575 = vmatprep.subr.bf16.mxu0 0
        %1576 = vmatpush1.bf16.xpose.msra.mxu0 0
        %1577 = vmatprep.subr.bf16.mxu0 0
        %1578 = vmatpush1.bf16.xpose.msra.mxu0 0
        %1579 = vmatprep.subr.bf16.mxu0 0
        %1580 = vmatpush1.bf16.xpose.msra.mxu0 0
        %1581 = vmatprep.subr.bf16.mxu0 0
        %1582 = vmatpush1.bf16.xpose.msra.mxu0 0
        %1583 = vmatprep.subr.bf16.mxu0 0
        %1584 = vmatpush1.bf16.xpose.msra.mxu0 0
        %1585 = vmatprep.subr.bf16.mxu0 0
        %1586 = vmatpush1.bf16.xpose.msra.mxu0 0
        %1587 = vmatprep.mubr.bf16.mxu0 0
        %1588 = vmatmul.mubr.bf16.gmra.mrb[0].mxu0 %v1550
        %v1589 = vpop.f32.mrb[0].mxu0
        %v1590 = vadd.f32 0.0, %v1589
        %v1591 = vpop.f32.mrb[0].mxu0
        %v1592 = vpop.f32.mrb[0].mxu0
        %v1593 = vadd.f32 0.0, %v1592
        %v1594 = vpop.f32.mrb[0].mxu0
        %1595 = vdwg.mxu0
        %v1597 = vsel %vm541, %v1382, 0
        %v1600 = vsel %vm541, %v1548, 0
        %1602 = vmatprep.subr.bf16.mxu0 0
        %1603 = vmatpush1.bf16.xpose.msra.mxu0 %v1600
        %1604 = vmatprep.subr.bf16.mxu0 0
        %1605 = vmatpush1.bf16.xpose.msra.mxu0 0
        %1606 = vmatprep.subr.bf16.mxu0 0
        %1607 = vmatpush1.bf16.xpose.msra.mxu0 0
        %1608 = vmatprep.subr.bf16.mxu0 0
        %1609 = vmatpush1.bf16.xpose.msra.mxu0 0
        %1610 = vmatprep.subr.bf16.mxu0 0
        %1611 = vmatpush1.bf16.xpose.msra.mxu0 0
        %1612 = vmatprep.subr.bf16.mxu0 0
        %1613 = vmatpush1.bf16.xpose.msra.mxu0 0
        %1614 = vmatprep.subr.bf16.mxu0 0
        %1615 = vmatpush1.bf16.xpose.msra.mxu0 0
        %1616 = vmatprep.subr.bf16.mxu0 0
        %1617 = vmatpush1.bf16.xpose.msra.mxu0 0
        %1618 = vmatprep.subr.bf16.mxu0 0
        %1619 = vmatpush1.bf16.xpose.msra.mxu0 0
        %1620 = vmatprep.subr.bf16.mxu0 0
        %1621 = vmatpush1.bf16.xpose.msra.mxu0 0
        %1622 = vmatprep.subr.bf16.mxu0 0
        %1623 = vmatpush1.bf16.xpose.msra.mxu0 0
        %1624 = vmatprep.subr.bf16.mxu0 0
        %1625 = vmatpush1.bf16.xpose.msra.mxu0 0
        %1626 = vmatprep.subr.bf16.mxu0 0
        %1627 = vmatpush1.bf16.xpose.msra.mxu0 0
        %1628 = vmatprep.subr.bf16.mxu0 0
        %1629 = vmatpush1.bf16.xpose.msra.mxu0 0
        %1630 = vmatprep.subr.bf16.mxu0 0
        %1631 = vmatpush1.bf16.xpose.msra.mxu0 0
        %1632 = vmatprep.subr.bf16.mxu0 0
        %1633 = vmatpush1.bf16.xpose.msra.mxu0 0
        %1634 = vmatprep.mubr.bf16.mxu0 0
        %1635 = vmatmul.mubr.bf16.gmra.mrb[0].mxu0 %v1597
        %v1636 = vpop.f32.mrb[0].mxu0
        %v1637 = vadd.f32 0.0, %v1636
        %v1638 = vpop.f32.mrb[0].mxu0
        %v1639 = vpop.f32.mrb[0].mxu0
        %v1640 = vadd.f32 0.0, %v1639
        %v1641 = vpop.f32.mrb[0].mxu0
        %1642 = vdwg.mxu0
        %v1643 = vpack.c.bf16 %v1593, %v1590
        %v1644 = vpack.c.bf16 %v1640, %v1637
        %1645 = vst.msk [vmem:[#allocation2] sm:$0xff] %vm541, %v1643
        %1646 = vst.msk [vmem:[#allocation2 + $0x8] sm:$0xff] %vm541, %v1644
        %v1647 = vmul.f32 %v1327, 0.25
        %v1648 = vmul.f32 %v1330, 0.25
        %v1649 = vmul.f32 %v1335, 0.25
        %v1650 = vmul.f32 %v1338, 0.25
        %v1651 = vpack.c.bf16 %v1648, %v1647
        %v1652 = vpack.c.bf16 %v1650, %v1649
        %v1653 = vpack.c.bf16 %v1133, %v1130
        %v1654 = vpack.c.bf16 %v1141, %v1138
        %v1655 = vpack.c.bf16 %v1149, %v1146
        %v1656 = vpack.c.bf16 %v1157, %v1154
        %1657 = vxpose.xlu0.c.b16.start [1/8] %v1651, 128
        %1658 = vxpose.xlu0.c.b16.cont [2/8] 0, 128
        %1659 = vxpose.xlu0.c.b16.cont [3/8] 0, 128
        %1660 = vxpose.xlu0.c.b16.cont [4/8] 0, 128
        %1661 = vxpose.xlu0.c.b16.cont [5/8] 0, 128
        %1662 = vxpose.xlu0.c.b16.cont [6/8] 0, 128
        %1663 = vxpose.xlu0.c.b16.cont [7/8] 0, 128
        %1664 = vxpose.xlu0.c.b16.end [8/8] 0, 128
        %v1665 = vpop.trf.xlu0
        %v1666 = vpop.trf.xlu0
        %v1667 = vpop.trf.xlu0
        %v1668 = vpop.trf.xlu0
        %v1669 = vpop.trf.xlu0
        %v1670 = vpop.trf.xlu0
        %v1671 = vpop.trf.xlu0
        %v1672 = vpop.trf.xlu0
        %v1674 = vsel %vm541, %v1665, 0
        %1676 = vmatprep.subr.bf16.mxu0 0
        %1677 = vmatpush1.bf16.msra.mxu0 %v1653
        %1678 = vmatprep.subr.bf16.mxu0 0
        %1679 = vmatpush1.bf16.msra.mxu0 0
        %1680 = vmatprep.subr.bf16.mxu0 0
        %1681 = vmatpush1.bf16.msra.mxu0 0
        %1682 = vmatprep.subr.bf16.mxu0 0
        %1683 = vmatpush1.bf16.msra.mxu0 0
        %1684 = vmatprep.subr.bf16.mxu0 0
        %1685 = vmatpush1.bf16.msra.mxu0 0
        %1686 = vmatprep.subr.bf16.mxu0 0
        %1687 = vmatpush1.bf16.msra.mxu0 0
        %1688 = vmatprep.subr.bf16.mxu0 0
        %1689 = vmatpush1.bf16.msra.mxu0 0
        %1690 = vmatprep.subr.bf16.mxu0 0
        %1691 = vmatpush1.bf16.msra.mxu0 0
        %1692 = vmatprep.subr.bf16.mxu0 0
        %1693 = vmatpush1.bf16.msra.mxu0 0
        %1694 = vmatprep.subr.bf16.mxu0 0
        %1695 = vmatpush1.bf16.msra.mxu0 0
        %1696 = vmatprep.subr.bf16.mxu0 0
        %1697 = vmatpush1.bf16.msra.mxu0 0
        %1698 = vmatprep.subr.bf16.mxu0 0
        %1699 = vmatpush1.bf16.msra.mxu0 0
        %1700 = vmatprep.subr.bf16.mxu0 0
        %1701 = vmatpush1.bf16.msra.mxu0 0
        %1702 = vmatprep.subr.bf16.mxu0 0
        %1703 = vmatpush1.bf16.msra.mxu0 0
        %1704 = vmatprep.subr.bf16.mxu0 0
        %1705 = vmatpush1.bf16.msra.mxu0 0
        %1706 = vmatprep.subr.bf16.mxu0 0
        %1707 = vmatpush1.bf16.msra.mxu0 0
        %1708 = vmatprep.mubr.bf16.mxu0 0
        %1709 = vmatmul.mubr.bf16.gmra.mrb[0].mxu0 %v1674
        %v1710 = vpop.f32.mrb[0].mxu0
        %v1711 = vadd.f32 0.0, %v1710
        %v1712 = vpop.f32.mrb[0].mxu0
        %v1713 = vpop.f32.mrb[0].mxu0
        %v1714 = vadd.f32 0.0, %v1713
        %v1715 = vpop.f32.mrb[0].mxu0
        %1716 = vdwg.mxu0
        %1717 = vxpose.xlu0.c.b16.start [1/8] %v1652, 128
        %1718 = vxpose.xlu0.c.b16.cont [2/8] 0, 128
        %1719 = vxpose.xlu0.c.b16.cont [3/8] 0, 128
        %1720 = vxpose.xlu0.c.b16.cont [4/8] 0, 128
        %1721 = vxpose.xlu0.c.b16.cont [5/8] 0, 128
        %1722 = vxpose.xlu0.c.b16.cont [6/8] 0, 128
        %1723 = vxpose.xlu0.c.b16.cont [7/8] 0, 128
        %1724 = vxpose.xlu0.c.b16.end [8/8] 0, 128
        %v1725 = vpop.trf.xlu0
        %v1726 = vpop.trf.xlu0
        %v1727 = vpop.trf.xlu0
        %v1728 = vpop.trf.xlu0
        %v1729 = vpop.trf.xlu0
        %v1730 = vpop.trf.xlu0
        %v1731 = vpop.trf.xlu0
        %v1732 = vpop.trf.xlu0
        %v1734 = vsel %vm541, %v1725, 0
        %1736 = vmatprep.subr.bf16.mxu0 0
        %1737 = vmatpush1.bf16.msra.mxu0 %v1654
        %1738 = vmatprep.subr.bf16.mxu0 0
        %1739 = vmatpush1.bf16.msra.mxu0 0
        %1740 = vmatprep.subr.bf16.mxu0 0
        %1741 = vmatpush1.bf16.msra.mxu0 0
        %1742 = vmatprep.subr.bf16.mxu0 0
        %1743 = vmatpush1.bf16.msra.mxu0 0
        %1744 = vmatprep.subr.bf16.mxu0 0
        %1745 = vmatpush1.bf16.msra.mxu0 0
        %1746 = vmatprep.subr.bf16.mxu0 0
        %1747 = vmatpush1.bf16.msra.mxu0 0
        %1748 = vmatprep.subr.bf16.mxu0 0
        %1749 = vmatpush1.bf16.msra.mxu0 0
        %1750 = vmatprep.subr.bf16.mxu0 0
        %1751 = vmatpush1.bf16.msra.mxu0 0
        %1752 = vmatprep.subr.bf16.mxu0 0
        %1753 = vmatpush1.bf16.msra.mxu0 0
        %1754 = vmatprep.subr.bf16.mxu0 0
        %1755 = vmatpush1.bf16.msra.mxu0 0
        %1756 = vmatprep.subr.bf16.mxu0 0
        %1757 = vmatpush1.bf16.msra.mxu0 0
        %1758 = vmatprep.subr.bf16.mxu0 0
        %1759 = vmatpush1.bf16.msra.mxu0 0
        %1760 = vmatprep.subr.bf16.mxu0 0
        %1761 = vmatpush1.bf16.msra.mxu0 0
        %1762 = vmatprep.subr.bf16.mxu0 0
        %1763 = vmatpush1.bf16.msra.mxu0 0
        %1764 = vmatprep.subr.bf16.mxu0 0
        %1765 = vmatpush1.bf16.msra.mxu0 0
        %1766 = vmatprep.subr.bf16.mxu0 0
        %1767 = vmatpush1.bf16.msra.mxu0 0
        %1768 = vmatprep.mubr.bf16.mxu0 0
        %1769 = vmatmul.mubr.bf16.gmra.mrb[0].mxu0 %v1734
        %v1770 = vpop.f32.mrb[0].mxu0
        %v1771 = vadd.f32 0.0, %v1770
        %v1772 = vpop.f32.mrb[0].mxu0
        %v1773 = vpop.f32.mrb[0].mxu0
        %v1774 = vadd.f32 0.0, %v1773
        %v1775 = vpop.f32.mrb[0].mxu0
        %1776 = vdwg.mxu0
        %v1777 = vsel %vm541, %v1711, -inf
        %1778 = vmax.xlane.f32.xlu0 %v1777
        %v1779 = vpop.xlane.xlu0 %1778
        %v1780 = vsel %vm541, %v1714, -inf
        %1781 = vmax.xlane.f32.xlu0 %v1780
        %v1782 = vpop.xlane.xlu0 %1781
        %v1783 = vsel %vm541, %v1771, -inf
        %1784 = vmax.xlane.f32.xlu0 %v1783
        %v1785 = vpop.xlane.xlu0 %1784
        %v1786 = vsel %vm541, %v1774, -inf
        %1787 = vmax.xlane.f32.xlu0 %v1786
        %v1788 = vpop.xlane.xlu0 %1787
        %v1789 = vsub.f32 %v1711, %v1779
        %v1790 = vsub.f32 %v1714, %v1782
        %v1791 = vsub.f32 %v1771, %v1785
        %v1792 = vsub.f32 %v1774, %v1788
        %v1793 = vmul.f32 %v1789, 1.442695
        %v1794 = vpow.pop %v1793
        %v1795 = vmul.f32 %v1790, 1.442695
        %v1796 = vpow.pop %v1795
        %v1797 = vmul.f32 %v1791, 1.442695
        %v1798 = vpow.pop %v1797
        %v1799 = vmul.f32 %v1792, 1.442695
        %v1800 = vpow.pop %v1799
        %v1801 = vsel %vm541, %v1794, 0.0
        %1802 = vadd.xlane.f32.xlu0 %v1801
        %v1803 = vpop.xlane.xlu0 %1802
        %v1804 = vsel %vm541, %v1796, 0.0
        %1805 = vadd.xlane.f32.xlu0 %v1804
        %v1806 = vpop.xlane.xlu0 %1805
        %v1807 = vsel %vm541, %v1798, 0.0
        %1808 = vadd.xlane.f32.xlu0 %v1807
        %v1809 = vpop.xlane.xlu0 %1808
        %v1810 = vsel %vm541, %v1800, 0.0
        %1811 = vadd.xlane.f32.xlu0 %v1810
        %v1812 = vpop.xlane.xlu0 %1811
        %v1813 = vrcp.pop %v1803
        %v1814 = vrcp.pop %v1806
        %v1815 = vrcp.pop %v1809
        %v1816 = vrcp.pop %v1812
        %v1817 = vmul.f32 %v1794, %v1813
        %v1818 = vmul.f32 %v1796, %v1814
        %v1819 = vmul.f32 %v1798, %v1815
        %v1820 = vmul.f32 %v1800, %v1816
        %v1821 = vpack.c.bf16 %v1818, %v1817
        %v1822 = vpack.c.bf16 %v1820, %v1819
        %v1824 = vsel %vm541, %v1655, 0
        %v1827 = vsel %vm541, %v1821, 0
        %1829 = vmatprep.subr.bf16.mxu0 0
        %1830 = vmatpush1.bf16.xpose.msra.mxu0 %v1827
        %1831 = vmatprep.subr.bf16.mxu0 0
        %1832 = vmatpush1.bf16.xpose.msra.mxu0 0
        %1833 = vmatprep.subr.bf16.mxu0 0
        %1834 = vmatpush1.bf16.xpose.msra.mxu0 0
        %1835 = vmatprep.subr.bf16.mxu0 0
        %1836 = vmatpush1.bf16.xpose.msra.mxu0 0
        %1837 = vmatprep.subr.bf16.mxu0 0
        %1838 = vmatpush1.bf16.xpose.msra.mxu0 0
        %1839 = vmatprep.subr.bf16.mxu0 0
        %1840 = vmatpush1.bf16.xpose.msra.mxu0 0
        %1841 = vmatprep.subr.bf16.mxu0 0
        %1842 = vmatpush1.bf16.xpose.msra.mxu0 0
        %1843 = vmatprep.subr.bf16.mxu0 0
        %1844 = vmatpush1.bf16.xpose.msra.mxu0 0
        %1845 = vmatprep.subr.bf16.mxu0 0
        %1846 = vmatpush1.bf16.xpose.msra.mxu0 0
        %1847 = vmatprep.subr.bf16.mxu0 0
        %1848 = vmatpush1.bf16.xpose.msra.mxu0 0
        %1849 = vmatprep.subr.bf16.mxu0 0
        %1850 = vmatpush1.bf16.xpose.msra.mxu0 0
        %1851 = vmatprep.subr.bf16.mxu0 0
        %1852 = vmatpush1.bf16.xpose.msra.mxu0 0
        %1853 = vmatprep.subr.bf16.mxu0 0
        %1854 = vmatpush1.bf16.xpose.msra.mxu0 0
        %1855 = vmatprep.subr.bf16.mxu0 0
        %1856 = vmatpush1.bf16.xpose.msra.mxu0 0
        %1857 = vmatprep.subr.bf16.mxu0 0
        %1858 = vmatpush1.bf16.xpose.msra.mxu0 0
        %1859 = vmatprep.subr.bf16.mxu0 0
        %1860 = vmatpush1.bf16.xpose.msra.mxu0 0
        %1861 = vmatprep.mubr.bf16.mxu0 0
        %1862 = vmatmul.mubr.bf16.gmra.mrb[0].mxu0 %v1824
        %v1863 = vpop.f32.mrb[0].mxu0
        %v1864 = vadd.f32 0.0, %v1863
        %v1865 = vpop.f32.mrb[0].mxu0
        %v1866 = vpop.f32.mrb[0].mxu0
        %v1867 = vadd.f32 0.0, %v1866
        %v1868 = vpop.f32.mrb[0].mxu0
        %1869 = vdwg.mxu0
        %v1871 = vsel %vm541, %v1656, 0
        %v1874 = vsel %vm541, %v1822, 0
        %1876 = vmatprep.subr.bf16.mxu0 0
        %1877 = vmatpush1.bf16.xpose.msra.mxu0 %v1874
        %1878 = vmatprep.subr.bf16.mxu0 0
        %1879 = vmatpush1.bf16.xpose.msra.mxu0 0
        %1880 = vmatprep.subr.bf16.mxu0 0
        %1881 = vmatpush1.bf16.xpose.msra.mxu0 0
        %1882 = vmatprep.subr.bf16.mxu0 0
        %1883 = vmatpush1.bf16.xpose.msra.mxu0 0
        %1884 = vmatprep.subr.bf16.mxu0 0
        %1885 = vmatpush1.bf16.xpose.msra.mxu0 0
        %1886 = vmatprep.subr.bf16.mxu0 0
        %1887 = vmatpush1.bf16.xpose.msra.mxu0 0
        %1888 = vmatprep.subr.bf16.mxu0 0
        %1889 = vmatpush1.bf16.xpose.msra.mxu0 0
        %1890 = vmatprep.subr.bf16.mxu0 0
        %1891 = vmatpush1.bf16.xpose.msra.mxu0 0
        %1892 = vmatprep.subr.bf16.mxu0 0
        %1893 = vmatpush1.bf16.xpose.msra.mxu0 0
        %1894 = vmatprep.subr.bf16.mxu0 0
        %1895 = vmatpush1.bf16.xpose.msra.mxu0 0
        %1896 = vmatprep.subr.bf16.mxu0 0
        %1897 = vmatpush1.bf16.xpose.msra.mxu0 0
        %1898 = vmatprep.subr.bf16.mxu0 0
        %1899 = vmatpush1.bf16.xpose.msra.mxu0 0
        %1900 = vmatprep.subr.bf16.mxu0 0
        %1901 = vmatpush1.bf16.xpose.msra.mxu0 0
        %1902 = vmatprep.subr.bf16.mxu0 0
        %1903 = vmatpush1.bf16.xpose.msra.mxu0 0
        %1904 = vmatprep.subr.bf16.mxu0 0
        %1905 = vmatpush1.bf16.xpose.msra.mxu0 0
        %1906 = vmatprep.subr.bf16.mxu0 0
        %1907 = vmatpush1.bf16.xpose.msra.mxu0 0
        %1908 = vmatprep.mubr.bf16.mxu0 0
        %1909 = vmatmul.mubr.bf16.gmra.mrb[0].mxu0 %v1871
        %v1910 = vpop.f32.mrb[0].mxu0
        %v1911 = vadd.f32 0.0, %v1910
        %v1912 = vpop.f32.mrb[0].mxu0
        %v1913 = vpop.f32.mrb[0].mxu0
        %v1914 = vadd.f32 0.0, %v1913
        %v1915 = vpop.f32.mrb[0].mxu0
        %1916 = vdwg.mxu0
        %v1917 = vpack.c.bf16 %v1867, %v1864
        %v1918 = vpack.c.bf16 %v1914, %v1911
        %1919 = vst.msk [vmem:[#allocation3] sm:$0xff] %vm541, %v1917
        %1920 = vst.msk [vmem:[#allocation3 + $0x8] sm:$0xff] %vm541, %v1918
        %1922 = vrot.lane.b32.xlu0 %v1377, 112
        %v1923 = vpop.permute.xlu0 %1922
        %1925 = vxpose.xlu0.c.b16.start [1/8] %v1923, 128
        %1926 = vxpose.xlu0.c.b16.cont [2/8] 0, 128
        %1927 = vxpose.xlu0.c.b16.cont [3/8] 0, 128
        %1928 = vxpose.xlu0.c.b16.cont [4/8] 0, 128
        %1929 = vxpose.xlu0.c.b16.cont [5/8] 0, 128
        %1930 = vxpose.xlu0.c.b16.cont [6/8] 0, 128
        %1931 = vxpose.xlu0.c.b16.cont [7/8] 0, 128
        %1932 = vxpose.xlu0.c.b16.end [8/8] 0, 128
        %v1933 = vpop.trf.xlu0
        %v1934 = vpop.trf.xlu0
        %v1935 = vpop.trf.xlu0
        %v1936 = vpop.trf.xlu0
        %v1937 = vpop.trf.xlu0
        %v1938 = vpop.trf.xlu0
        %v1939 = vpop.trf.xlu0
        %v1940 = vpop.trf.xlu0
        %1942 = vrot.lane.b32.xlu0 %v1379, 112
        %v1943 = vpop.permute.xlu0 %1942
        %v1946 = vsel %vm541, %v1933, 0
        %1948 = vmatprep.subr.bf16.mxu0 0
        %1949 = vmatpush1.bf16.msra.mxu0 %v1943
        %1950 = vmatprep.subr.bf16.mxu0 0
        %1951 = vmatpush1.bf16.msra.mxu0 0
        %1952 = vmatprep.subr.bf16.mxu0 0
        %1953 = vmatpush1.bf16.msra.mxu0 0
        %1954 = vmatprep.subr.bf16.mxu0 0
        %1955 = vmatpush1.bf16.msra.mxu0 0
        %1956 = vmatprep.subr.bf16.mxu0 0
        %1957 = vmatpush1.bf16.msra.mxu0 0
        %1958 = vmatprep.subr.bf16.mxu0 0
        %1959 = vmatpush1.bf16.msra.mxu0 0
        %1960 = vmatprep.subr.bf16.mxu0 0
        %1961 = vmatpush1.bf16.msra.mxu0 0
        %1962 = vmatprep.subr.bf16.mxu0 0
        %1963 = vmatpush1.bf16.msra.mxu0 0
        %1964 = vmatprep.subr.bf16.mxu0 0
        %1965 = vmatpush1.bf16.msra.mxu0 0
        %1966 = vmatprep.subr.bf16.mxu0 0
        %1967 = vmatpush1.bf16.msra.mxu0 0
        %1968 = vmatprep.subr.bf16.mxu0 0
        %1969 = vmatpush1.bf16.msra.mxu0 0
        %1970 = vmatprep.subr.bf16.mxu0 0
        %1971 = vmatpush1.bf16.msra.mxu0 0
        %1972 = vmatprep.subr.bf16.mxu0 0
        %1973 = vmatpush1.bf16.msra.mxu0 0
        %1974 = vmatprep.subr.bf16.mxu0 0
        %1975 = vmatpush1.bf16.msra.mxu0 0
        %1976 = vmatprep.subr.bf16.mxu0 0
        %1977 = vmatpush1.bf16.msra.mxu0 0
        %1978 = vmatprep.subr.bf16.mxu0 0
        %1979 = vmatpush1.bf16.msra.mxu0 0
        %1980 = vmatprep.mubr.bf16.mxu0 0
        %1981 = vmatmul.mubr.bf16.gmra.mrb[0].mxu0 %v1946
        %v1982 = vpop.f32.mrb[0].mxu0
        %v1983 = vadd.f32 0.0, %v1982
        %v1984 = vpop.f32.mrb[0].mxu0
        %v1985 = vpop.f32.mrb[0].mxu0
        %v1986 = vadd.f32 0.0, %v1985
        %v1987 = vpop.f32.mrb[0].mxu0
        %1988 = vdwg.mxu0
        %1990 = vrot.lane.b32.xlu0 %v1378, 112
        %v1991 = vpop.permute.xlu0 %1990
        %1993 = vxpose.xlu0.c.b16.start [1/8] %v1991, 128
        %1994 = vxpose.xlu0.c.b16.cont [2/8] 0, 128
        %1995 = vxpose.xlu0.c.b16.cont [3/8] 0, 128
        %1996 = vxpose.xlu0.c.b16.cont [4/8] 0, 128
        %1997 = vxpose.xlu0.c.b16.cont [5/8] 0, 128
        %1998 = vxpose.xlu0.c.b16.cont [6/8] 0, 128
        %1999 = vxpose.xlu0.c.b16.cont [7/8] 0, 128
        %2000 = vxpose.xlu0.c.b16.end [8/8] 0, 128
        %v2001 = vpop.trf.xlu0
        %v2002 = vpop.trf.xlu0
        %v2003 = vpop.trf.xlu0
        %v2004 = vpop.trf.xlu0
        %v2005 = vpop.trf.xlu0
        %v2006 = vpop.trf.xlu0
        %v2007 = vpop.trf.xlu0
        %v2008 = vpop.trf.xlu0
        %2010 = vrot.lane.b32.xlu0 %v1380, 112
        %v2011 = vpop.permute.xlu0 %2010
        %v2014 = vsel %vm541, %v2001, 0
        %2016 = vmatprep.subr.bf16.mxu0 0
        %2017 = vmatpush1.bf16.msra.mxu0 %v2011
        %2018 = vmatprep.subr.bf16.mxu0 0
        %2019 = vmatpush1.bf16.msra.mxu0 0
        %2020 = vmatprep.subr.bf16.mxu0 0
        %2021 = vmatpush1.bf16.msra.mxu0 0
        %2022 = vmatprep.subr.bf16.mxu0 0
        %2023 = vmatpush1.bf16.msra.mxu0 0
        %2024 = vmatprep.subr.bf16.mxu0 0
        %2025 = vmatpush1.bf16.msra.mxu0 0
        %2026 = vmatprep.subr.bf16.mxu0 0
        %2027 = vmatpush1.bf16.msra.mxu0 0
        %2028 = vmatprep.subr.bf16.mxu0 0
        %2029 = vmatpush1.bf16.msra.mxu0 0
        %2030 = vmatprep.subr.bf16.mxu0 0
        %2031 = vmatpush1.bf16.msra.mxu0 0
        %2032 = vmatprep.subr.bf16.mxu0 0
        %2033 = vmatpush1.bf16.msra.mxu0 0
        %2034 = vmatprep.subr.bf16.mxu0 0
        %2035 = vmatpush1.bf16.msra.mxu0 0
        %2036 = vmatprep.subr.bf16.mxu0 0
        %2037 = vmatpush1.bf16.msra.mxu0 0
        %2038 = vmatprep.subr.bf16.mxu0 0
        %2039 = vmatpush1.bf16.msra.mxu0 0
        %2040 = vmatprep.subr.bf16.mxu0 0
        %2041 = vmatpush1.bf16.msra.mxu0 0
        %2042 = vmatprep.subr.bf16.mxu0 0
        %2043 = vmatpush1.bf16.msra.mxu0 0
        %2044 = vmatprep.subr.bf16.mxu0 0
        %2045 = vmatpush1.bf16.msra.mxu0 0
        %2046 = vmatprep.subr.bf16.mxu0 0
        %2047 = vmatpush1.bf16.msra.mxu0 0
        %2048 = vmatprep.mubr.bf16.mxu0 0
        %2049 = vmatmul.mubr.bf16.gmra.mrb[0].mxu0 %v2014
        %v2050 = vpop.f32.mrb[0].mxu0
        %v2051 = vadd.f32 0.0, %v2050
        %v2052 = vpop.f32.mrb[0].mxu0
        %v2053 = vpop.f32.mrb[0].mxu0
        %v2054 = vadd.f32 0.0, %v2053
        %v2055 = vpop.f32.mrb[0].mxu0
        %2056 = vdwg.mxu0
        %v2057 = vsel %vm541, %v1983, -inf
        %2058 = vmax.xlane.f32.xlu0 %v2057
        %v2059 = vpop.xlane.xlu0 %2058
        %v2060 = vsel %vm541, %v1986, -inf
        %2061 = vmax.xlane.f32.xlu0 %v2060
        %v2062 = vpop.xlane.xlu0 %2061
        %v2063 = vsel %vm541, %v2051, -inf
        %2064 = vmax.xlane.f32.xlu0 %v2063
        %v2065 = vpop.xlane.xlu0 %2064
        %v2066 = vsel %vm541, %v2054, -inf
        %2067 = vmax.xlane.f32.xlu0 %v2066
        %v2068 = vpop.xlane.xlu0 %2067
        %v2069 = vsub.f32 %v1983, %v2059
        %v2070 = vsub.f32 %v1986, %v2062
        %v2071 = vsub.f32 %v2051, %v2065
        %v2072 = vsub.f32 %v2054, %v2068
        %v2073 = vmul.f32 %v2069, 1.442695
        %v2074 = vpow.pop %v2073
        %v2075 = vmul.f32 %v2070, 1.442695
        %v2076 = vpow.pop %v2075
        %v2077 = vmul.f32 %v2071, 1.442695
        %v2078 = vpow.pop %v2077
        %v2079 = vmul.f32 %v2072, 1.442695
        %v2080 = vpow.pop %v2079
        %v2081 = vsel %vm541, %v2074, 0.0
        %2082 = vadd.xlane.f32.xlu0 %v2081
        %v2083 = vpop.xlane.xlu0 %2082
        %v2084 = vsel %vm541, %v2076, 0.0
        %2085 = vadd.xlane.f32.xlu0 %v2084
        %v2086 = vpop.xlane.xlu0 %2085
        %v2087 = vsel %vm541, %v2078, 0.0
        %2088 = vadd.xlane.f32.xlu0 %v2087
        %v2089 = vpop.xlane.xlu0 %2088
        %v2090 = vsel %vm541, %v2080, 0.0
        %2091 = vadd.xlane.f32.xlu0 %v2090
        %v2092 = vpop.xlane.xlu0 %2091
        %v2093 = vrcp.pop %v2083
        %v2094 = vrcp.pop %v2086
        %v2095 = vrcp.pop %v2089
        %v2096 = vrcp.pop %v2092
        %v2097 = vmul.f32 %v2074, %v2093
        %v2098 = vmul.f32 %v2076, %v2094
        %v2099 = vmul.f32 %v2078, %v2095
        %v2100 = vmul.f32 %v2080, %v2096
        %v2101 = vpack.c.bf16 %v2098, %v2097
        %v2102 = vpack.c.bf16 %v2100, %v2099
        %2104 = vrot.lane.b32.xlu0 %v1381, 112
        %v2105 = vpop.permute.xlu0 %2104
        %v2107 = vsel %vm541, %v2105, 0
        %v2110 = vsel %vm541, %v2101, 0
        %2112 = vmatprep.subr.bf16.mxu0 0
        %2113 = vmatpush1.bf16.xpose.msra.mxu0 %v2110
        %2114 = vmatprep.subr.bf16.mxu0 0
        %2115 = vmatpush1.bf16.xpose.msra.mxu0 0
        %2116 = vmatprep.subr.bf16.mxu0 0
        %2117 = vmatpush1.bf16.xpose.msra.mxu0 0
        %2118 = vmatprep.subr.bf16.mxu0 0
        %2119 = vmatpush1.bf16.xpose.msra.mxu0 0
        %2120 = vmatprep.subr.bf16.mxu0 0
        %2121 = vmatpush1.bf16.xpose.msra.mxu0 0
        %2122 = vmatprep.subr.bf16.mxu0 0
        %2123 = vmatpush1.bf16.xpose.msra.mxu0 0
        %2124 = vmatprep.subr.bf16.mxu0 0
        %2125 = vmatpush1.bf16.xpose.msra.mxu0 0
        %2126 = vmatprep.subr.bf16.mxu0 0
        %2127 = vmatpush1.bf16.xpose.msra.mxu0 0
        %2128 = vmatprep.subr.bf16.mxu0 0
        %2129 = vmatpush1.bf16.xpose.msra.mxu0 0
        %2130 = vmatprep.subr.bf16.mxu0 0
        %2131 = vmatpush1.bf16.xpose.msra.mxu0 0
        %2132 = vmatprep.subr.bf16.mxu0 0
        %2133 = vmatpush1.bf16.xpose.msra.mxu0 0
        %2134 = vmatprep.subr.bf16.mxu0 0
        %2135 = vmatpush1.bf16.xpose.msra.mxu0 0
        %2136 = vmatprep.subr.bf16.mxu0 0
        %2137 = vmatpush1.bf16.xpose.msra.mxu0 0
        %2138 = vmatprep.subr.bf16.mxu0 0
        %2139 = vmatpush1.bf16.xpose.msra.mxu0 0
        %2140 = vmatprep.subr.bf16.mxu0 0
        %2141 = vmatpush1.bf16.xpose.msra.mxu0 0
        %2142 = vmatprep.subr.bf16.mxu0 0
        %2143 = vmatpush1.bf16.xpose.msra.mxu0 0
        %2144 = vmatprep.mubr.bf16.mxu0 0
        %2145 = vmatmul.mubr.bf16.gmra.mrb[0].mxu0 %v2107
        %v2146 = vpop.f32.mrb[0].mxu0
        %v2147 = vadd.f32 0.0, %v2146
        %v2148 = vpop.f32.mrb[0].mxu0
        %v2149 = vpop.f32.mrb[0].mxu0
        %v2150 = vadd.f32 0.0, %v2149
        %v2151 = vpop.f32.mrb[0].mxu0
        %2152 = vdwg.mxu0
        %2154 = vrot.lane.b32.xlu0 %v1382, 112
        %v2155 = vpop.permute.xlu0 %2154
        %v2157 = vsel %vm541, %v2155, 0
        %v2160 = vsel %vm541, %v2102, 0
        %2162 = vmatprep.subr.bf16.mxu0 0
        %2163 = vmatpush1.bf16.xpose.msra.mxu0 %v2160
        %2164 = vmatprep.subr.bf16.mxu0 0
        %2165 = vmatpush1.bf16.xpose.msra.mxu0 0
        %2166 = vmatprep.subr.bf16.mxu0 0
        %2167 = vmatpush1.bf16.xpose.msra.mxu0 0
        %2168 = vmatprep.subr.bf16.mxu0 0
        %2169 = vmatpush1.bf16.xpose.msra.mxu0 0
        %2170 = vmatprep.subr.bf16.mxu0 0
        %2171 = vmatpush1.bf16.xpose.msra.mxu0 0
        %2172 = vmatprep.subr.bf16.mxu0 0
        %2173 = vmatpush1.bf16.xpose.msra.mxu0 0
        %2174 = vmatprep.subr.bf16.mxu0 0
        %2175 = vmatpush1.bf16.xpose.msra.mxu0 0
        %2176 = vmatprep.subr.bf16.mxu0 0
        %2177 = vmatpush1.bf16.xpose.msra.mxu0 0
        %2178 = vmatprep.subr.bf16.mxu0 0
        %2179 = vmatpush1.bf16.xpose.msra.mxu0 0
        %2180 = vmatprep.subr.bf16.mxu0 0
        %2181 = vmatpush1.bf16.xpose.msra.mxu0 0
        %2182 = vmatprep.subr.bf16.mxu0 0
        %2183 = vmatpush1.bf16.xpose.msra.mxu0 0
        %2184 = vmatprep.subr.bf16.mxu0 0
        %2185 = vmatpush1.bf16.xpose.msra.mxu0 0
        %2186 = vmatprep.subr.bf16.mxu0 0
        %2187 = vmatpush1.bf16.xpose.msra.mxu0 0
        %2188 = vmatprep.subr.bf16.mxu0 0
        %2189 = vmatpush1.bf16.xpose.msra.mxu0 0
        %2190 = vmatprep.subr.bf16.mxu0 0
        %2191 = vmatpush1.bf16.xpose.msra.mxu0 0
        %2192 = vmatprep.subr.bf16.mxu0 0
        %2193 = vmatpush1.bf16.xpose.msra.mxu0 0
        %2194 = vmatprep.mubr.bf16.mxu0 0
        %2195 = vmatmul.mubr.bf16.gmra.mrb[0].mxu0 %v2157
        %v2196 = vpop.f32.mrb[0].mxu0
        %v2197 = vadd.f32 0.0, %v2196
        %v2198 = vpop.f32.mrb[0].mxu0
        %v2199 = vpop.f32.mrb[0].mxu0
        %v2200 = vadd.f32 0.0, %v2199
        %v2201 = vpop.f32.mrb[0].mxu0
        %2202 = vdwg.mxu0
        %v2203 = vpack.c.bf16 %v2150, %v2147
        %v2204 = vpack.c.bf16 %v2200, %v2197
        %2207 = vrot.lane.b32.xlu0 %v2203, 16
        %v2208 = vpop.permute.xlu0 %2207
        %2209 = vrot.lane.b32.xlu0 %v2204, 16
        %v2210 = vpop.permute.xlu0 %2209
        %vm2213 = vcmask 261248
        %2214 = vst.msk [vmem:[#allocation2] sm:$0xff] %vm2213, %v2208
        %2215 = vst.msk [vmem:[#allocation2 + $0x8] sm:$0xff] %vm2213, %v2210
        %2217 = vrot.lane.b32.xlu0 %v1651, 112
        %v2218 = vpop.permute.xlu0 %2217
        %2220 = vxpose.xlu0.c.b16.start [1/8] %v2218, 128
        %2221 = vxpose.xlu0.c.b16.cont [2/8] 0, 128
        %2222 = vxpose.xlu0.c.b16.cont [3/8] 0, 128
        %2223 = vxpose.xlu0.c.b16.cont [4/8] 0, 128
        %2224 = vxpose.xlu0.c.b16.cont [5/8] 0, 128
        %2225 = vxpose.xlu0.c.b16.cont [6/8] 0, 128
        %2226 = vxpose.xlu0.c.b16.cont [7/8] 0, 128
        %2227 = vxpose.xlu0.c.b16.end [8/8] 0, 128
        %v2228 = vpop.trf.xlu0
        %v2229 = vpop.trf.xlu0
        %v2230 = vpop.trf.xlu0
        %v2231 = vpop.trf.xlu0
        %v2232 = vpop.trf.xlu0
        %v2233 = vpop.trf.xlu0
        %v2234 = vpop.trf.xlu0
        %v2235 = vpop.trf.xlu0
        %2237 = vrot.lane.b32.xlu0 %v1653, 112
        %v2238 = vpop.permute.xlu0 %2237
        %v2241 = vsel %vm541, %v2228, 0
        %2243 = vmatprep.subr.bf16.mxu0 0
        %2244 = vmatpush1.bf16.msra.mxu0 %v2238
        %2245 = vmatprep.subr.bf16.mxu0 0
        %2246 = vmatpush1.bf16.msra.mxu0 0
        %2247 = vmatprep.subr.bf16.mxu0 0
        %2248 = vmatpush1.bf16.msra.mxu0 0
        %2249 = vmatprep.subr.bf16.mxu0 0
        %2250 = vmatpush1.bf16.msra.mxu0 0
        %2251 = vmatprep.subr.bf16.mxu0 0
        %2252 = vmatpush1.bf16.msra.mxu0 0
        %2253 = vmatprep.subr.bf16.mxu0 0
        %2254 = vmatpush1.bf16.msra.mxu0 0
        %2255 = vmatprep.subr.bf16.mxu0 0
        %2256 = vmatpush1.bf16.msra.mxu0 0
        %2257 = vmatprep.subr.bf16.mxu0 0
        %2258 = vmatpush1.bf16.msra.mxu0 0
        %2259 = vmatprep.subr.bf16.mxu0 0
        %2260 = vmatpush1.bf16.msra.mxu0 0
        %2261 = vmatprep.subr.bf16.mxu0 0
        %2262 = vmatpush1.bf16.msra.mxu0 0
        %2263 = vmatprep.subr.bf16.mxu0 0
        %2264 = vmatpush1.bf16.msra.mxu0 0
        %2265 = vmatprep.subr.bf16.mxu0 0
        %2266 = vmatpush1.bf16.msra.mxu0 0
        %2267 = vmatprep.subr.bf16.mxu0 0
        %2268 = vmatpush1.bf16.msra.mxu0 0
        %2269 = vmatprep.subr.bf16.mxu0 0
        %2270 = vmatpush1.bf16.msra.mxu0 0
        %2271 = vmatprep.subr.bf16.mxu0 0
        %2272 = vmatpush1.bf16.msra.mxu0 0
        %2273 = vmatprep.subr.bf16.mxu0 0
        %2274 = vmatpush1.bf16.msra.mxu0 0
        %2275 = vmatprep.mubr.bf16.mxu0 0
        %2276 = vmatmul.mubr.bf16.gmra.mrb[0].mxu0 %v2241
        %v2277 = vpop.f32.mrb[0].mxu0
        %v2278 = vadd.f32 0.0, %v2277
        %v2279 = vpop.f32.mrb[0].mxu0
        %v2280 = vpop.f32.mrb[0].mxu0
        %v2281 = vadd.f32 0.0, %v2280
        %v2282 = vpop.f32.mrb[0].mxu0
        %2283 = vdwg.mxu0
        %2285 = vrot.lane.b32.xlu0 %v1652, 112
        %v2286 = vpop.permute.xlu0 %2285
        %2288 = vxpose.xlu0.c.b16.start [1/8] %v2286, 128
        %2289 = vxpose.xlu0.c.b16.cont [2/8] 0, 128
        %2290 = vxpose.xlu0.c.b16.cont [3/8] 0, 128
        %2291 = vxpose.xlu0.c.b16.cont [4/8] 0, 128
        %2292 = vxpose.xlu0.c.b16.cont [5/8] 0, 128
        %2293 = vxpose.xlu0.c.b16.cont [6/8] 0, 128
        %2294 = vxpose.xlu0.c.b16.cont [7/8] 0, 128
        %2295 = vxpose.xlu0.c.b16.end [8/8] 0, 128
        %v2296 = vpop.trf.xlu0
        %v2297 = vpop.trf.xlu0
        %v2298 = vpop.trf.xlu0
        %v2299 = vpop.trf.xlu0
        %v2300 = vpop.trf.xlu0
        %v2301 = vpop.trf.xlu0
        %v2302 = vpop.trf.xlu0
        %v2303 = vpop.trf.xlu0
        %2305 = vrot.lane.b32.xlu0 %v1654, 112
        %v2306 = vpop.permute.xlu0 %2305
        %v2309 = vsel %vm541, %v2296, 0
        %2311 = vmatprep.subr.bf16.mxu0 0
        %2312 = vmatpush1.bf16.msra.mxu0 %v2306
        %2313 = vmatprep.subr.bf16.mxu0 0
        %2314 = vmatpush1.bf16.msra.mxu0 0
        %2315 = vmatprep.subr.bf16.mxu0 0
        %2316 = vmatpush1.bf16.msra.mxu0 0
        %2317 = vmatprep.subr.bf16.mxu0 0
        %2318 = vmatpush1.bf16.msra.mxu0 0
        %2319 = vmatprep.subr.bf16.mxu0 0
        %2320 = vmatpush1.bf16.msra.mxu0 0
        %2321 = vmatprep.subr.bf16.mxu0 0
        %2322 = vmatpush1.bf16.msra.mxu0 0
        %2323 = vmatprep.subr.bf16.mxu0 0
        %2324 = vmatpush1.bf16.msra.mxu0 0
        %2325 = vmatprep.subr.bf16.mxu0 0
        %2326 = vmatpush1.bf16.msra.mxu0 0
        %2327 = vmatprep.subr.bf16.mxu0 0
        %2328 = vmatpush1.bf16.msra.mxu0 0
        %2329 = vmatprep.subr.bf16.mxu0 0
        %2330 = vmatpush1.bf16.msra.mxu0 0
        %2331 = vmatprep.subr.bf16.mxu0 0
        %2332 = vmatpush1.bf16.msra.mxu0 0
        %2333 = vmatprep.subr.bf16.mxu0 0
        %2334 = vmatpush1.bf16.msra.mxu0 0
        %2335 = vmatprep.subr.bf16.mxu0 0
        %2336 = vmatpush1.bf16.msra.mxu0 0
        %2337 = vmatprep.subr.bf16.mxu0 0
        %2338 = vmatpush1.bf16.msra.mxu0 0
        %2339 = vmatprep.subr.bf16.mxu0 0
        %2340 = vmatpush1.bf16.msra.mxu0 0
        %2341 = vmatprep.subr.bf16.mxu0 0
        %2342 = vmatpush1.bf16.msra.mxu0 0
        %2343 = vmatprep.mubr.bf16.mxu0 0
        %2344 = vmatmul.mubr.bf16.gmra.mrb[0].mxu0 %v2309
        %v2345 = vpop.f32.mrb[0].mxu0
        %v2346 = vadd.f32 0.0, %v2345
        %v2347 = vpop.f32.mrb[0].mxu0
        %v2348 = vpop.f32.mrb[0].mxu0
        %v2349 = vadd.f32 0.0, %v2348
        %v2350 = vpop.f32.mrb[0].mxu0
        %2351 = vdwg.mxu0
        %v2352 = vsel %vm541, %v2278, -inf
        %2353 = vmax.xlane.f32.xlu0 %v2352
        %v2354 = vpop.xlane.xlu0 %2353
        %v2355 = vsel %vm541, %v2281, -inf
        %2356 = vmax.xlane.f32.xlu0 %v2355
        %v2357 = vpop.xlane.xlu0 %2356
        %v2358 = vsel %vm541, %v2346, -inf
        %2359 = vmax.xlane.f32.xlu0 %v2358
        %v2360 = vpop.xlane.xlu0 %2359
        %v2361 = vsel %vm541, %v2349, -inf
        %2362 = vmax.xlane.f32.xlu0 %v2361
        %v2363 = vpop.xlane.xlu0 %2362
        %v2364 = vsub.f32 %v2278, %v2354
        %v2365 = vsub.f32 %v2281, %v2357
        %v2366 = vsub.f32 %v2346, %v2360
        %v2367 = vsub.f32 %v2349, %v2363
        %v2368 = vmul.f32 %v2364, 1.442695
        %v2369 = vpow.pop %v2368
        %v2370 = vmul.f32 %v2365, 1.442695
        %v2371 = vpow.pop %v2370
        %v2372 = vmul.f32 %v2366, 1.442695
        %v2373 = vpow.pop %v2372
        %v2374 = vmul.f32 %v2367, 1.442695
        %v2375 = vpow.pop %v2374
        %v2376 = vsel %vm541, %v2369, 0.0
        %2377 = vadd.xlane.f32.xlu0 %v2376
        %v2378 = vpop.xlane.xlu0 %2377
        %v2379 = vsel %vm541, %v2371, 0.0
        %2380 = vadd.xlane.f32.xlu0 %v2379
        %v2381 = vpop.xlane.xlu0 %2380
        %v2382 = vsel %vm541, %v2373, 0.0
        %2383 = vadd.xlane.f32.xlu0 %v2382
        %v2384 = vpop.xlane.xlu0 %2383
        %v2385 = vsel %vm541, %v2375, 0.0
        %2386 = vadd.xlane.f32.xlu0 %v2385
        %v2387 = vpop.xlane.xlu0 %2386
        %v2388 = vrcp.pop %v2378
        %v2389 = vrcp.pop %v2381
        %v2390 = vrcp.pop %v2384
        %v2391 = vrcp.pop %v2387
        %v2392 = vmul.f32 %v2369, %v2388
        %v2393 = vmul.f32 %v2371, %v2389
        %v2394 = vmul.f32 %v2373, %v2390
        %v2395 = vmul.f32 %v2375, %v2391
        %v2396 = vpack.c.bf16 %v2393, %v2392
        %v2397 = vpack.c.bf16 %v2395, %v2394
        %2399 = vrot.lane.b32.xlu0 %v1655, 112
        %v2400 = vpop.permute.xlu0 %2399
        %v2402 = vsel %vm541, %v2400, 0
        %v2405 = vsel %vm541, %v2396, 0
        %2407 = vmatprep.subr.bf16.mxu0 0
        %2408 = vmatpush1.bf16.xpose.msra.mxu0 %v2405
        %2409 = vmatprep.subr.bf16.mxu0 0
        %2410 = vmatpush1.bf16.xpose.msra.mxu0 0
        %2411 = vmatprep.subr.bf16.mxu0 0
        %2412 = vmatpush1.bf16.xpose.msra.mxu0 0
        %2413 = vmatprep.subr.bf16.mxu0 0
        %2414 = vmatpush1.bf16.xpose.msra.mxu0 0
        %2415 = vmatprep.subr.bf16.mxu0 0
        %2416 = vmatpush1.bf16.xpose.msra.mxu0 0
        %2417 = vmatprep.subr.bf16.mxu0 0
        %2418 = vmatpush1.bf16.xpose.msra.mxu0 0
        %2419 = vmatprep.subr.bf16.mxu0 0
        %2420 = vmatpush1.bf16.xpose.msra.mxu0 0
        %2421 = vmatprep.subr.bf16.mxu0 0
        %2422 = vmatpush1.bf16.xpose.msra.mxu0 0
        %2423 = vmatprep.subr.bf16.mxu0 0
        %2424 = vmatpush1.bf16.xpose.msra.mxu0 0
        %2425 = vmatprep.subr.bf16.mxu0 0
        %2426 = vmatpush1.bf16.xpose.msra.mxu0 0
        %2427 = vmatprep.subr.bf16.mxu0 0
        %2428 = vmatpush1.bf16.xpose.msra.mxu0 0
        %2429 = vmatprep.subr.bf16.mxu0 0
        %2430 = vmatpush1.bf16.xpose.msra.mxu0 0
        %2431 = vmatprep.subr.bf16.mxu0 0
        %2432 = vmatpush1.bf16.xpose.msra.mxu0 0
        %2433 = vmatprep.subr.bf16.mxu0 0
        %2434 = vmatpush1.bf16.xpose.msra.mxu0 0
        %2435 = vmatprep.subr.bf16.mxu0 0
        %2436 = vmatpush1.bf16.xpose.msra.mxu0 0
        %2437 = vmatprep.subr.bf16.mxu0 0
        %2438 = vmatpush1.bf16.xpose.msra.mxu0 0
        %2439 = vmatprep.mubr.bf16.mxu0 0
        %2440 = vmatmul.mubr.bf16.gmra.mrb[0].mxu0 %v2402
        %v2441 = vpop.f32.mrb[0].mxu0
        %v2442 = vadd.f32 0.0, %v2441
        %v2443 = vpop.f32.mrb[0].mxu0
        %v2444 = vpop.f32.mrb[0].mxu0
        %v2445 = vadd.f32 0.0, %v2444
        %v2446 = vpop.f32.mrb[0].mxu0
        %2447 = vdwg.mxu0
        %2449 = vrot.lane.b32.xlu0 %v1656, 112
        %v2450 = vpop.permute.xlu0 %2449
        %v2452 = vsel %vm541, %v2450, 0
        %v2455 = vsel %vm541, %v2397, 0
        %2457 = vmatprep.subr.bf16.mxu0 0
        %2458 = vmatpush1.bf16.xpose.msra.mxu0 %v2455
        %2459 = vmatprep.subr.bf16.mxu0 0
        %2460 = vmatpush1.bf16.xpose.msra.mxu0 0
        %2461 = vmatprep.subr.bf16.mxu0 0
        %2462 = vmatpush1.bf16.xpose.msra.mxu0 0
        %2463 = vmatprep.subr.bf16.mxu0 0
        %2464 = vmatpush1.bf16.xpose.msra.mxu0 0
        %2465 = vmatprep.subr.bf16.mxu0 0
        %2466 = vmatpush1.bf16.xpose.msra.mxu0 0
        %2467 = vmatprep.subr.bf16.mxu0 0
        %2468 = vmatpush1.bf16.xpose.msra.mxu0 0
        %2469 = vmatprep.subr.bf16.mxu0 0
        %2470 = vmatpush1.bf16.xpose.msra.mxu0 0
        %2471 = vmatprep.subr.bf16.mxu0 0
        %2472 = vmatpush1.bf16.xpose.msra.mxu0 0
        %2473 = vmatprep.subr.bf16.mxu0 0
        %2474 = vmatpush1.bf16.xpose.msra.mxu0 0
        %2475 = vmatprep.subr.bf16.mxu0 0
        %2476 = vmatpush1.bf16.xpose.msra.mxu0 0
        %2477 = vmatprep.subr.bf16.mxu0 0
        %2478 = vmatpush1.bf16.xpose.msra.mxu0 0
        %2479 = vmatprep.subr.bf16.mxu0 0
        %2480 = vmatpush1.bf16.xpose.msra.mxu0 0
        %2481 = vmatprep.subr.bf16.mxu0 0
        %2482 = vmatpush1.bf16.xpose.msra.mxu0 0
        %2483 = vmatprep.subr.bf16.mxu0 0
        %2484 = vmatpush1.bf16.xpose.msra.mxu0 0
        %2485 = vmatprep.subr.bf16.mxu0 0
        %2486 = vmatpush1.bf16.xpose.msra.mxu0 0
        %2487 = vmatprep.subr.bf16.mxu0 0
        %2488 = vmatpush1.bf16.xpose.msra.mxu0 0
        %2489 = vmatprep.mubr.bf16.mxu0 0
        %2490 = vmatmul.mubr.bf16.gmra.mrb[0].mxu0 %v2452
        %v2491 = vpop.f32.mrb[0].mxu0
        %v2492 = vadd.f32 0.0, %v2491
        %v2493 = vpop.f32.mrb[0].mxu0
        %v2494 = vpop.f32.mrb[0].mxu0
        %v2495 = vadd.f32 0.0, %v2494
        %v2496 = vpop.f32.mrb[0].mxu0
        %2497 = vdwg.mxu0
        %v2498 = vpack.c.bf16 %v2445, %v2442
        %v2499 = vpack.c.bf16 %v2495, %v2492
        %2502 = vrot.lane.b32.xlu0 %v2498, 16
        %v2503 = vpop.permute.xlu0 %2502
        %2504 = vrot.lane.b32.xlu0 %v2499, 16
        %v2505 = vpop.permute.xlu0 %2504
        %2508 = vst.msk [vmem:[#allocation3] sm:$0xff] %vm2213, %v2503
        %2509 = vst.msk [vmem:[#allocation3 + $0x8] sm:$0xff] %vm2213, %v2505
        %v2510 = vld [vmem:[%s10] sm:$0xf]
        %v2511 = vld [vmem:[%s10 + $0x4] sm:$0xf]
        %v2512 = vld [vmem:[%s10 + $0x8] sm:$0xf]
        %v2513 = vld [vmem:[%s10 + $0xc] sm:$0xf]
        %v2514 = vld [vmem:[#allocation2] sm:$0xff]
        %v2515 = vld [vmem:[#allocation2 + $0x8] sm:$0xff]
        %v2516 = vld [vmem:[%s11] sm:$0xff]
        %v2517 = vld [vmem:[%s11 + $0x8] sm:$0xff]
        %v2518 = vld [vmem:[%s11 + $0x10] sm:$0xff]
        %v2519 = vld [vmem:[%s11 + $0x18] sm:$0xff]
        %2521 = vset.pattern.permute.xlu0 0
        %2522 = vperm.xlu0 %2521, %v2516
        %v2523 = vpop.permute.xlu0 %2522
        %2526 = vset.pattern.permute.xlu0 0
        %2527 = vperm.xlu0 %2526, %v2517
        %v2528 = vpop.permute.xlu0 %2527
        %2531 = vset.pattern.permute.xlu0 0
        %2532 = vperm.xlu0 %2531, %v2518
        %v2533 = vpop.permute.xlu0 %2532
        %2536 = vset.pattern.permute.xlu0 0
        %2537 = vperm.xlu0 %2536, %v2519
        %v2538 = vpop.permute.xlu0 %2537
        %v2544 = vunpack.c.l.b16 %v2510
        %v2545 = vunpack.c.l.b16 %v2511
        %v2546 = vunpack.c.l.b16 %v2512
        %v2547 = vunpack.c.l.b16 %v2513
        %v2548 = vpack.c.b16 %v2545, %v2544
        %v2549 = vpack.c.b16 %v2547, %v2546
        %v2551 = vsel %vm1060, %v2548, 0
        %v2554 = vsel %vm1060, %v2549, 0
        %2556 = vmatprep.subr.bf16.mxu0 0
        %2557 = vmatpush1.bf16.msra.mxu0 %v2514
        %2558 = vmatprep.subr.bf16.mxu0 0
        %2559 = vmatpush1.bf16.msra.mxu0 %v2515
        %2560 = vmatprep.subr.bf16.mxu0 0
        %2561 = vmatpush1.bf16.msra.mxu0 0
        %2562 = vmatprep.subr.bf16.mxu0 0
        %2563 = vmatpush1.bf16.msra.mxu0 0
        %2564 = vmatprep.subr.bf16.mxu0 0
        %2565 = vmatpush1.bf16.msra.mxu0 0
        %2566 = vmatprep.subr.bf16.mxu0 0
        %2567 = vmatpush1.bf16.msra.mxu0 0
        %2568 = vmatprep.subr.bf16.mxu0 0
        %2569 = vmatpush1.bf16.msra.mxu0 0
        %2570 = vmatprep.subr.bf16.mxu0 0
        %2571 = vmatpush1.bf16.msra.mxu0 0
        %2572 = vmatprep.subr.bf16.mxu0 0
        %2573 = vmatpush1.bf16.msra.mxu0 0
        %2574 = vmatprep.subr.bf16.mxu0 0
        %2575 = vmatpush1.bf16.msra.mxu0 0
        %2576 = vmatprep.subr.bf16.mxu0 0
        %2577 = vmatpush1.bf16.msra.mxu0 0
        %2578 = vmatprep.subr.bf16.mxu0 0
        %2579 = vmatpush1.bf16.msra.mxu0 0
        %2580 = vmatprep.subr.bf16.mxu0 0
        %2581 = vmatpush1.bf16.msra.mxu0 0
        %2582 = vmatprep.subr.bf16.mxu0 0
        %2583 = vmatpush1.bf16.msra.mxu0 0
        %2584 = vmatprep.subr.bf16.mxu0 0
        %2585 = vmatpush1.bf16.msra.mxu0 0
        %2586 = vmatprep.subr.bf16.mxu0 0
        %2587 = vmatpush1.bf16.msra.mxu0 0
        %2588 = vmatprep.mubr.bf16.mxu0 0
        %2589 = vmatmul.mubr.bf16.gmra.mrb[0].mxu0 %v2551
        %v2590 = vpop.f32.mrb[0].mxu0
        %v2591 = vadd.f32 %v2523, %v2590
        %v2592 = vpop.f32.mrb[0].mxu0
        %v2593 = vpop.f32.mrb[0].mxu0
        %v2594 = vadd.f32 %v2528, %v2593
        %v2595 = vpop.f32.mrb[0].mxu0
        %2596 = vmatprep.mubr.bf16.mxu0 0
        %2597 = vmatmul.mubr.bf16.gmra.mrb[0].mxu0 %v2554
        %v2598 = vpop.f32.mrb[0].mxu0
        %v2599 = vadd.f32 %v2533, %v2598
        %v2600 = vpop.f32.mrb[0].mxu0
        %v2601 = vpop.f32.mrb[0].mxu0
        %v2602 = vadd.f32 %v2538, %v2601
        %v2603 = vpop.f32.mrb[0].mxu0
        %2604 = vdwg.mxu0
        %v2605 = vadd.f32 %v2591, %v525
        %v2606 = vadd.f32 %v2594, %v526
        %v2607 = vadd.f32 %v2599, %v527
        %v2608 = vadd.f32 %v2602, %v528
        %v2609 = vld [vmem:[%s12] sm:$0xf]
        %v2610 = vld [vmem:[%s12 + $0x4] sm:$0xf]
        %v2611 = vld [vmem:[%s12 + $0x8] sm:$0xf]
        %v2612 = vld [vmem:[%s12 + $0xc] sm:$0xf]
        %v2613 = vld [vmem:[#allocation3] sm:$0xff]
        %v2614 = vld [vmem:[#allocation3 + $0x8] sm:$0xff]
        %v2615 = vld [vmem:[%s13] sm:$0xff]
        %v2616 = vld [vmem:[%s13 + $0x8] sm:$0xff]
        %v2617 = vld [vmem:[%s13 + $0x10] sm:$0xff]
        %v2618 = vld [vmem:[%s13 + $0x18] sm:$0xff]
        %2620 = vset.pattern.permute.xlu0 0
        %2621 = vperm.xlu0 %2620, %v2615
        %v2622 = vpop.permute.xlu0 %2621
        %2625 = vset.pattern.permute.xlu0 0
        %2626 = vperm.xlu0 %2625, %v2616
        %v2627 = vpop.permute.xlu0 %2626
        %2630 = vset.pattern.permute.xlu0 0
        %2631 = vperm.xlu0 %2630, %v2617
        %v2632 = vpop.permute.xlu0 %2631
        %2635 = vset.pattern.permute.xlu0 0
        %2636 = vperm.xlu0 %2635, %v2618
        %v2637 = vpop.permute.xlu0 %2636
        %v2643 = vunpack.c.l.b16 %v2609
        %v2644 = vunpack.c.l.b16 %v2610
        %v2645 = vunpack.c.l.b16 %v2611
        %v2646 = vunpack.c.l.b16 %v2612
        %v2647 = vpack.c.b16 %v2644, %v2643
        %v2648 = vpack.c.b16 %v2646, %v2645
        %v2650 = vsel %vm1060, %v2647, 0
        %v2653 = vsel %vm1060, %v2648, 0
        %2655 = vmatprep.subr.bf16.mxu0 0
        %2656 = vmatpush1.bf16.msra.mxu0 %v2613
        %2657 = vmatprep.subr.bf16.mxu0 0
        %2658 = vmatpush1.bf16.msra.mxu0 %v2614
        %2659 = vmatprep.subr.bf16.mxu0 0
        %2660 = vmatpush1.bf16.msra.mxu0 0
        %2661 = vmatprep.subr.bf16.mxu0 0
        %2662 = vmatpush1.bf16.msra.mxu0 0
        %2663 = vmatprep.subr.bf16.mxu0 0
        %2664 = vmatpush1.bf16.msra.mxu0 0
        %2665 = vmatprep.subr.bf16.mxu0 0
        %2666 = vmatpush1.bf16.msra.mxu0 0
        %2667 = vmatprep.subr.bf16.mxu0 0
        %2668 = vmatpush1.bf16.msra.mxu0 0
        %2669 = vmatprep.subr.bf16.mxu0 0
        %2670 = vmatpush1.bf16.msra.mxu0 0
        %2671 = vmatprep.subr.bf16.mxu0 0
        %2672 = vmatpush1.bf16.msra.mxu0 0
        %2673 = vmatprep.subr.bf16.mxu0 0
        %2674 = vmatpush1.bf16.msra.mxu0 0
        %2675 = vmatprep.subr.bf16.mxu0 0
        %2676 = vmatpush1.bf16.msra.mxu0 0
        %2677 = vmatprep.subr.bf16.mxu0 0
        %2678 = vmatpush1.bf16.msra.mxu0 0
        %2679 = vmatprep.subr.bf16.mxu0 0
        %2680 = vmatpush1.bf16.msra.mxu0 0
        %2681 = vmatprep.subr.bf16.mxu0 0
        %2682 = vmatpush1.bf16.msra.mxu0 0
        %2683 = vmatprep.subr.bf16.mxu0 0
        %2684 = vmatpush1.bf16.msra.mxu0 0
        %2685 = vmatprep.subr.bf16.mxu0 0
        %2686 = vmatpush1.bf16.msra.mxu0 0
        %2687 = vmatprep.mubr.bf16.mxu0 0
        %2688 = vmatmul.mubr.bf16.gmra.mrb[0].mxu0 %v2650
        %v2689 = vpop.f32.mrb[0].mxu0
        %v2690 = vadd.f32 %v2622, %v2689
        %v2691 = vpop.f32.mrb[0].mxu0
        %v2692 = vpop.f32.mrb[0].mxu0
        %v2693 = vadd.f32 %v2627, %v2692
        %v2694 = vpop.f32.mrb[0].mxu0
        %2695 = vmatprep.mubr.bf16.mxu0 0
        %2696 = vmatmul.mubr.bf16.gmra.mrb[0].mxu0 %v2653
        %v2697 = vpop.f32.mrb[0].mxu0
        %v2698 = vadd.f32 %v2632, %v2697
        %v2699 = vpop.f32.mrb[0].mxu0
        %v2700 = vpop.f32.mrb[0].mxu0
        %v2701 = vadd.f32 %v2637, %v2700
        %v2702 = vpop.f32.mrb[0].mxu0
        %2703 = vdwg.mxu0
        %v2704 = vadd.f32 %v2690, %v529
        %v2705 = vadd.f32 %v2693, %v530
        %v2706 = vadd.f32 %v2698, %v531
        %v2707 = vadd.f32 %v2701, %v532
        %2708 = vst.msk [vmem:[%s506] sm:$0xff] %vm1060, %v2605
        %2709 = vst.msk [vmem:[%s506 + $0x8] sm:$0xff] %vm1060, %v2606
        %2710 = vst.msk [vmem:[%s506 + $0x10] sm:$0xff] %vm1060, %v2607
        %2711 = vst.msk [vmem:[%s506 + $0x18] sm:$0xff] %vm1060, %v2608
        %2712 = vst.msk [vmem:[%s513] sm:$0xff] %vm1060, %v2704
        %2713 = vst.msk [vmem:[%s513 + $0x8] sm:$0xff] %vm1060, %v2705
        %2714 = vst.msk [vmem:[%s513 + $0x10] sm:$0xff] %vm1060, %v2706
        %2715 = vst.msk [vmem:[%s513 + $0x18] sm:$0xff] %vm1060, %v2707
        %s2716 = sand.u32 %s345, 1
        %s2717 = scalar_lea.sflag [#allocation5], %s2716
        %s2718 = sand.u32 %s345, 1
        %s2719 = smul.addr %s2718, 32
        %s2720 = scalar_lea.vmem [#allocation4], %s2719
        %s2721 = sand.u32 %s371, 1
        %s2722 = scalar_lea.sflag [#allocation7], %s2721
        %s2723 = sand.u32 %s371, 1
        %s2724 = smul.addr %s2723, 32
        %s2725 = scalar_lea.vmem [#allocation6], %s2724
        // Predicated region
        $region77: #{tpu_custom_call.1} parent=75 // pred_check
          %p2726 = pneg %p355
        $region78: #{tpu_custom_call.1} parent=75 // pred_check_branch
          %2728 = sbr.rel (%p2726) target = $region80
        $region79: #{tpu_custom_call.1} parent=75 // pred_region
          %s2730 = ssub.s32 512, 512
          %2731 = vsyncadd %s2717, %s2730
          %s2732 = smul.addr %s33, 4
          %s2733 = smul.addr %s2732, 128
          %s2734 = scalar_lea.hbm %s14, %s2733
          %s2735 = sshll.u32 %s2720, 4
          %s2736 = int_to_ptr.vmem [resolvable:$true] %s2735
          %2741 = dma.vmem_to_hbm [thread:$0]  %s2736, 512, %s2734, %s2717, 128, 128, 8
        $region80: #{tpu_custom_call.1} parent=75 // pred_fallthru
          _
        // Predicated region
        $region81: #{tpu_custom_call.1} parent=75 // pred_check
          %p2742 = pneg %p381
        $region82: #{tpu_custom_call.1} parent=75 // pred_check_branch
          %2744 = sbr.rel (%p2742) target = $region84
        $region83: #{tpu_custom_call.1} parent=75 // pred_region
          %s2746 = ssub.s32 512, 512
          %2747 = vsyncadd %s2722, %s2746
          %s2748 = smul.addr %s33, 4
          %s2749 = smul.addr %s2748, 128
          %s2750 = scalar_lea.hbm %s15, %s2749
          %s2751 = sshll.u32 %s2725, 4
          %s2752 = int_to_ptr.vmem [resolvable:$true] %s2751
          %2757 = dma.vmem_to_hbm [thread:$0]  %s2752, 512, %s2750, %s2722, 128, 128, 8
        $region84: #{tpu_custom_call.1} parent=75 // pred_fallthru
          _
      $region76: #{tpu_custom_call.1} parent=5 // pred_fallthru
        _
      %p2758 = scmp.le.s32.totalorder 2, %s28
      // Predicated region
      $region85: #{tpu_custom_call.1} parent=5 // pred_check
        %p2759 = pneg %p2758
      $region86: #{tpu_custom_call.1} parent=5 // pred_check_branch
        %2761 = sbr.rel (%p2759) target = $region88
      $region87: #{tpu_custom_call.1} parent=5 // pred_region
        %s2762 = ssub.s32 %s28, 2
        // Predicated region
        $region89: #{tpu_custom_call.1} parent=87 // pred_check
          %p2763 = pneg %p361
        $region90: #{tpu_custom_call.1} parent=87 // pred_check_branch
          %2765 = sbr.rel (%p2763) target = $region92
        $region91: #{tpu_custom_call.1} parent=87 // pred_region
          %s2766 = sand.u32 %s346, 1
          %s2767 = scalar_lea.sflag [#allocation5], %s2766
          %s2768 = sand.u32 %s346, 1
          %s2769 = smul.addr %s2768, 32
          %s2770 = scalar_lea.vmem [#allocation4], %s2769
          %2771 = dma.done %s2767, 512
        $region92: #{tpu_custom_call.1} parent=87 // pred_fallthru
          _
        // Predicated region
        $region93: #{tpu_custom_call.1} parent=87 // pred_check
          %p2772 = pneg %p387
        $region94: #{tpu_custom_call.1} parent=87 // pred_check_branch
          %2774 = sbr.rel (%p2772) target = $region96
        $region95: #{tpu_custom_call.1} parent=87 // pred_region
          %s2775 = sand.u32 %s372, 1
          %s2776 = scalar_lea.sflag [#allocation7], %s2775
          %s2777 = sand.u32 %s372, 1
          %s2778 = smul.addr %s2777, 32
          %s2779 = scalar_lea.vmem [#allocation6], %s2778
          %2780 = dma.done %s2776, 512
        $region96: #{tpu_custom_call.1} parent=87 // pred_fallthru
          _
      $region88: #{tpu_custom_call.1} parent=5 // pred_fallthru
        _
    $region6: #{tpu_custom_call.1} parent=1 // loop_footer
      %s32 = sadd.s32 1, %s28
    $region7: #{tpu_custom_call.1} parent=1 // loop_footer_branch
      %27 = sbr.rel target = $region3
    $region8: #{tpu_custom_call.1} parent=1 // loop_exit
      _
    %2781 = vsyncpa [#allocation5], 1
    %s2782 = scalar_lea.sflag [#allocation5], 1
    %2783 = vsyncpa %s2782, 1
    %2784 = vsyncpa [#allocation7], 1
    %s2785 = scalar_lea.sflag [#allocation7], 1
    %2786 = vsyncpa %s2785, 1

</llo_original>
